<compile_context>
chip_gen: v7x
topology: tpu7x:2x2x1
jax: 0.10.0
libtpu: 0.0.40
codegen_flags: <defaults>
</compile_context>

<pallas_src>
import functools

import jax
import jax.numpy as jnp
from jax.experimental import pallas as pl
from jax.experimental.pallas import tpu as pltpu


def _round_up(x, m):
    return (x + m - 1) // m * m


def _pick_k_tile(kp, cap=1024):
    """Largest multiple of 128 that divides kp and is <= cap (no K pad waste)."""
    best = 128
    for cand in range(128, min(kp, cap) + 1, 128):
        if kp % cand == 0:
            best = cand
    return best


# ----------------------------------------------------------------------------
# Pallas kernel: tiled matmul + bias (+ ReLU) epilogue with f32 VMEM accumulator
# ----------------------------------------------------------------------------
def _matmul_bias_kernel(p_ref, w_ref, b_ref, o_ref, acc_ref, *, relu):
    @pl.when(pl.program_id(2) == 0)
    def _():
        acc_ref[...] = jnp.zeros_like(acc_ref)

    acc_ref[...] += jnp.dot(p_ref[...], w_ref[...],
                            preferred_element_type=jnp.float32)

    @pl.when(pl.program_id(2) == pl.num_programs(2) - 1)
    def _():
        y = acc_ref[...] + b_ref[...]          # f32 epilogue
        if relu:
            y = jnp.maximum(y, 0.0)
        o_ref[...] = y.astype(o_ref.dtype)


def _matmul_bias_pallas(patches, wmat, bias, *, relu,
                        compute_dtype=jnp.bfloat16, tm=512, tn=256):
    """out[m, n] = relu?(patches @ wmat + bias).  Pads to lane-dense tiles."""
    M, Kc = patches.shape
    _, Cout = wmat.shape

    tm = min(tm, _round_up(M, 8))
    tn = min(tn, _round_up(Cout, 128))
    Mp = _round_up(M, tm)
    Np = _round_up(Cout, tn)
    Kp = _round_up(Kc, 128)
    tk = _pick_k_tile(Kp)

    p = jnp.pad(patches.astype(compute_dtype), ((0, Mp - M), (0, Kp - Kc)))
    w = jnp.pad(wmat.astype(compute_dtype), ((0, Kp - Kc), (0, Np - Cout)))
    b = jnp.pad(bias.astype(jnp.float32), (0, Np - Cout)).reshape(1, Np)

    grid = (Mp // tm, Np // tn, Kp // tk)
    kernel = functools.partial(_matmul_bias_kernel, relu=relu)

    out = pl.pallas_call(
        kernel,
        out_shape=jax.ShapeDtypeStruct((Mp, Np), jnp.float32),
        grid_spec=pltpu.PrefetchScalarGridSpec(
            num_scalar_prefetch=0,
            grid=grid,
            in_specs=[
                pl.BlockSpec((tm, tk), lambda i, j, k: (i, k)),
                pl.BlockSpec((tk, tn), lambda i, j, k: (k, j)),
                pl.BlockSpec((1, tn), lambda i, j, k: (0, j)),
            ],
            out_specs=pl.BlockSpec((tm, tn), lambda i, j, k: (i, j)),
            scratch_shapes=[pltpu.VMEM((tm, tn), jnp.float32)],
        ),
        compiler_params=pltpu.CompilerParams(
            dimension_semantics=("parallel", "parallel", "arbitrary")),
    )(p, w, b)
    return out[:M, :Cout]


# ----------------------------------------------------------------------------
# Conv2d (stride 1, 'same' padding), NHWC, via im2col + Pallas matmul kernel
# ----------------------------------------------------------------------------
def conv2d_pallas(x, w, b, *, relu=False, compute_dtype=jnp.bfloat16):
    """x: (N, H, W, Cin) NHWC.  w: (Cout, Cin, K, K) (PyTorch layout).  b: (Cout,)."""
    N, H, W, Cin = x.shape
    Cout, Cin_w, K, K2 = w.shape
    assert Cin == Cin_w and K == K2
    pad = K // 2

    # Cast to the MXU compute dtype up front so the materialized im2col
    # patches cost half the HBM traffic (accumulation stays f32 in-kernel).
    xc = x.astype(compute_dtype)
    xp = jnp.pad(xc, ((0, 0), (pad, pad), (pad, pad), (0, 0))) if pad else xc
    if K == 1:
        patches = xp
    else:
        # im2col in XLA: tap-major channel concat -> (N, H, W, K*K*Cin)
        patches = jnp.concatenate(
            [xp[:, kh:kh + H, kw:kw + W, :] for kh in range(K) for kw in range(K)],
            axis=-1)
    patches = patches.reshape(N * H * W, K * K * Cin)

    # (Cout, Cin, K, K) -> (K, K, Cin, Cout) -> (K*K*Cin, Cout); matches tap order
    wmat = jnp.transpose(w, (2, 3, 1, 0)).reshape(K * K * Cin, Cout)

    out = _matmul_bias_pallas(patches, wmat, b, relu=relu,
                              compute_dtype=compute_dtype)
    return out.reshape(N, H, W, Cout)


# ----------------------------------------------------------------------------
# Pure-JAX reference conv (NHWC) for correctness checking only
# ----------------------------------------------------------------------------
def conv2d_ref(x, w, b, *, relu=False):
    pad = w.shape[-1] // 2
    w_hwio = jnp.transpose(w, (2, 3, 1, 0))
    y = jax.lax.conv_general_dilated(
        x, w_hwio, window_strides=(1, 1), padding=[(pad, pad), (pad, pad)],
        dimension_numbers=("NHWC", "HWIO", "NHWC"),
        precision=jax.lax.Precision.HIGHEST)
    y = y + b[None, None, None, :]
    if relu:
        y = jnp.maximum(y, 0.0)
    return y


# ----------------------------------------------------------------------------
# Model glue (param init, pixel shuffle, full forward) — NHWC internally
# ----------------------------------------------------------------------------
def _init_conv(key, cin, cout, k):
    wkey, bkey = jax.random.split(key)
    scale = 1.0 / jnp.sqrt(float(cin * k * k))
    w = jax.random.uniform(wkey, (cout, cin, k, k), jnp.float32, -scale, scale)
    b = jax.random.uniform(bkey, (cout,), jnp.float32, -scale, scale)
    return {"w": w, "b": b}


def init_rdn_params(key, in_channels, out_channels, mid_channels,
                    num_blocks, num_layers, channel_growth, upscale_factor):
    keys = iter(jax.random.split(key, 512))
    p = {}
    p["sfe1"] = _init_conv(next(keys), in_channels, mid_channels, 3)
    p["sfe2"] = _init_conv(next(keys), mid_channels, mid_channels, 3)
    rdbs = []
    for i in range(num_blocks):
        cin = mid_channels if i == 0 else channel_growth
        dense = [_init_conv(next(keys), cin + channel_growth * j,
                            channel_growth, 3) for j in range(num_layers)]
        lff = _init_conv(next(keys), cin + channel_growth * num_layers,
                         channel_growth, 1)
        rdbs.append({"dense": dense, "lff": lff})
    p["rdbs"] = rdbs
    p["gff0"] = _init_conv(next(keys), channel_growth * num_blocks, mid_channels, 1)
    p["gff1"] = _init_conv(next(keys), mid_channels, mid_channels, 3)
    ups = []
    if upscale_factor in (2, 4):
        for _ in range(upscale_factor // 2):
            ups.append(_init_conv(next(keys), mid_channels, mid_channels * 4, 3))
    else:  # upscale_factor == 3
        ups.append(_init_conv(next(keys), mid_channels,
                              mid_channels * upscale_factor ** 2, 3))
    p["upscale"] = ups
    p["output"] = _init_conv(next(keys), mid_channels, out_channels, 3)
    return p


def pixel_shuffle_nhwc(x, r):
    """torch.nn.PixelShuffle semantics, on NHWC tensors."""
    N, H, W, Crr = x.shape
    C = Crr // (r * r)
    x = x.reshape(N, H, W, C, r, r)
    x = x.transpose(0, 1, 4, 2, 5, 3)          # (N, H, r, W, r, C)
    return x.reshape(N, H * r, W * r, C)


def rdn_forward_nhwc(x, p, *, num_blocks, num_layers, upscale_factor, conv_fn):
    sfe1 = conv_fn(x, p["sfe1"]["w"], p["sfe1"]["b"])
    sfe2 = conv_fn(sfe1, p["sfe2"]["w"], p["sfe2"]["b"])
    x = sfe2
    local_features = []
    for i in range(num_blocks):
        rp = p["rdbs"][i]
        inp = x
        for j in range(num_layers):
            d = rp["dense"][j]
            y = conv_fn(x, d["w"], d["b"], relu=True)
            x = jnp.concatenate([x, y], axis=-1)       # DenseLayer: cat([x, relu(conv(x))])
        x = inp + conv_fn(x, rp["lff"]["w"], rp["lff"]["b"])   # RDB residual
        local_features.append(x)
    x = conv_fn(jnp.concatenate(local_features, axis=-1),
                p["gff0"]["w"], p["gff0"]["b"])
    x = conv_fn(x, p["gff1"]["w"], p["gff1"]["b"]) + sfe1
    r = 2 if upscale_factor in (2, 4) else upscale_factor
    for up in p["upscale"]:
        x = conv_fn(x, up["w"], up["b"])
        x = pixel_shuffle_nhwc(x, r)
    x = conv_fn(x, p["output"]["w"], p["output"]["b"])
    return x


def rdn_forward(x_nchw, p, *, num_blocks, num_layers, upscale_factor, conv_fn):
    # Single NCHW->NHWC transpose in, single NHWC->NCHW out (layout kept
    # channels-last across the whole network).
    x = jnp.transpose(x_nchw, (0, 2, 3, 1)).astype(jnp.float32)
    y = rdn_forward_nhwc(x, p, num_blocks=num_blocks, num_layers=num_layers,
                         upscale_factor=upscale_factor, conv_fn=conv_fn)
    return jnp.transpose(y, (0, 3, 1, 2))


# ----------------------------------------------------------------------------
if __name__ == "__main__":
    # Small but structurally faithful config (mid_channels must equal
    # channel_growth for the first RDB residual add, as in the default RDN).
    in_channels = 3
    out_channels = 3
    mid_channels = 16
    channel_growth = 16
    num_blocks = 2
    num_layers = 2
    upscale_factor = 2
    N, H, W = 2, 8, 8

    key = jax.random.PRNGKey(0)
    pkey, xkey = jax.random.split(key)
    params = init_rdn_params(pkey, in_channels, out_channels, mid_channels,
                             num_blocks, num_layers, channel_growth,
                             upscale_factor)
    x = jax.random.normal(xkey, (N, in_channels, H, W), jnp.float32)

    fwd_pallas = jax.jit(functools.partial(
        rdn_forward, num_blocks=num_blocks, num_layers=num_layers,
        upscale_factor=upscale_factor, conv_fn=conv2d_pallas))
    fwd_ref = jax.jit(functools.partial(
        rdn_forward, num_blocks=num_blocks, num_layers=num_layers,
        upscale_factor=upscale_factor, conv_fn=conv2d_ref))

    out = jax.block_until_ready(fwd_pallas(x, params))
    ref = jax.block_until_ready(fwd_ref(x, params))

    assert out.shape == (N, out_channels, H * upscale_factor, W * upscale_factor)
    max_err = float(jnp.max(jnp.abs(out - ref)))
    max_ref = float(jnp.max(jnp.abs(ref)))
    # bf16 matmul operands with f32 accumulation vs f32-HIGHEST reference.
    tol = max(1e-2, 3e-2 * max_ref)
    assert max_err < tol, f"mismatch vs reference: max_err={max_err} tol={tol}"

    print("KERNEL_OK")
</pallas_src>

<mosaic_0001>
module attributes {stable_mosaic.version = 11 : i64} {
  func.func @_matmul_bias_kernel(%arg0: i32, %arg1: i32, %arg2: i32, %arg3: memref<128x128xbf16, #tpu.memory_space<vmem>>, %arg4: memref<128x128xbf16, #tpu.memory_space<vmem>>, %arg5: memref<1x128xf32, #tpu.memory_space<vmem>>, %arg6: memref<128x128xf32, #tpu.memory_space<vmem>>, %arg7: memref<128x128xf32, #tpu.memory_space<vmem>>) attributes {dimension_semantics = [#tpu.dimension_semantics<parallel>, #tpu.dimension_semantics<parallel>, #tpu.dimension_semantics<arbitrary>], iteration_bounds = array<i64: 1, 1, 1>, scalar_prefetch = 0 : i64, scratch_operands = 1 : i64, tpu.core_type = #tpu.core_type<tc>, window_params = [{transform_indices = @transform_0, window_bounds = array<i64: 128, 128>}, {transform_indices = @transform_1, window_bounds = array<i64: 128, 128>}, {transform_indices = @transform_2, window_bounds = array<i64: 1, 128>}, {transform_indices = @transform_3, window_bounds = array<i64: 128, 128>}]} {
    %c0_i32 = arith.constant 0 : i32
    %0 = arith.cmpi eq, %arg2, %c0_i32 : i32
    %1 = arith.extui %0 : i1 to i32
    %c0_i32_0 = arith.constant 0 : i32
    %2 = arith.cmpi ne, %1, %c0_i32_0 : i32
    scf.if %2 {
      %cst_10 = arith.constant 0.000000e+00 : f32
      %12 = vector.broadcast %cst_10 : f32 to vector<128x128xf32>
      %c0_11 = arith.constant 0 : index
      %c0_12 = arith.constant 0 : index
      %13 = vector.load %arg7[%c0_11, %c0_12] : memref<128x128xf32, #tpu.memory_space<vmem>>, vector<128x128xf32>
      tpu.vector_store %arg7[%c0_11, %c0_12], %12 {strides = array<i32>} : memref<128x128xf32, #tpu.memory_space<vmem>>, vector<128x128xf32>,
    } else {
    }
    %c0 = arith.constant 0 : index
    %c0_1 = arith.constant 0 : index
    %3 = vector.load %arg7[%c0, %c0_1] : memref<128x128xf32, #tpu.memory_space<vmem>>, vector<128x128xf32>
    %c0_2 = arith.constant 0 : index
    %c0_3 = arith.constant 0 : index
    %4 = vector.load %arg3[%c0_2, %c0_3] : memref<128x128xbf16, #tpu.memory_space<vmem>>, vector<128x128xbf16>
    %c0_4 = arith.constant 0 : index
    %c0_5 = arith.constant 0 : index
    %5 = vector.load %arg4[%c0_4, %c0_5] : memref<128x128xbf16, #tpu.memory_space<vmem>>, vector<128x128xbf16>
    %cst = arith.constant dense<0.000000e+00> : vector<128x128xf32>
    %6 = tpu.matmul %4, %5, %cst {dimension_numbers = #tpu.dot_dimension_numbers<[1], [0], [0], [1], [0, 0, 1, 1], [], []>} : vector<128x128xbf16>, vector<128x128xbf16>, vector<128x128xf32> -> vector<128x128xf32>
    %7 = arith.addf %3, %6 : vector<128x128xf32>
    %c0_6 = arith.constant 0 : index
    %c0_7 = arith.constant 0 : index
    %8 = vector.load %arg7[%c0_6, %c0_7] : memref<128x128xf32, #tpu.memory_space<vmem>>, vector<128x128xf32>
    tpu.vector_store %arg7[%c0_6, %c0_7], %7 {strides = array<i32>} : memref<128x128xf32, #tpu.memory_space<vmem>>, vector<128x128xf32>,
    %c0_i32_8 = arith.constant 0 : i32
    %9 = arith.cmpi eq, %arg2, %c0_i32_8 : i32
    %10 = arith.extui %9 : i1 to i32
    %c0_i32_9 = arith.constant 0 : i32
    %11 = arith.cmpi ne, %10, %c0_i32_9 : i32
    scf.if %11 {
      %c0_10 = arith.constant 0 : index
      %c0_11 = arith.constant 0 : index
      %12 = vector.load %arg7[%c0_10, %c0_11] : memref<128x128xf32, #tpu.memory_space<vmem>>, vector<128x128xf32>
      %c0_12 = arith.constant 0 : index
      %c0_13 = arith.constant 0 : index
      %13 = vector.load %arg5[%c0_12, %c0_13] : memref<1x128xf32, #tpu.memory_space<vmem>>, vector<1x128xf32>
      %14 = vector.broadcast %13 : vector<1x128xf32> to vector<128x128xf32>
      %15 = arith.addf %12, %14 : vector<128x128xf32>
      %c0_14 = arith.constant 0 : index
      %c0_15 = arith.constant 0 : index
      %16 = vector.load %arg6[%c0_14, %c0_15] : memref<128x128xf32, #tpu.memory_space<vmem>>, vector<128x128xf32>
      tpu.vector_store %arg6[%c0_14, %c0_15], %15 {strides = array<i32>} : memref<128x128xf32, #tpu.memory_space<vmem>>, vector<128x128xf32>,
    } else {
    }
    return
  }
  func.func @transform_0(%arg0: i32, %arg1: i32, %arg2: i32) -> (i32, i32) {
    %c0_i32 = arith.constant 0 : i32
    return %arg0, %arg2 : i32, i32
  }
  func.func @transform_1(%arg0: i32, %arg1: i32, %arg2: i32) -> (i32, i32) {
    %c0_i32 = arith.constant 0 : i32
    return %arg2, %arg1 : i32, i32
  }
  func.func @transform_2(%arg0: i32, %arg1: i32, %arg2: i32) -> (i32, i32) {
    %c0_i32 = arith.constant 0 : i32
    %c0_i32_0 = arith.constant 0 : i32
    return %c0_i32, %arg1 : i32, i32
  }
  func.func @transform_3(%arg0: i32, %arg1: i32, %arg2: i32) -> (i32, i32) {
    %c0_i32 = arith.constant 0 : i32
    return %arg0, %arg1 : i32, i32
  }
}

module attributes {stable_mosaic.version = 11 : i64} {
  func.func @_matmul_bias_kernel(%arg0: i32, %arg1: i32, %arg2: i32, %arg3: memref<128x256xbf16, #tpu.memory_space<vmem>>, %arg4: memref<256x128xbf16, #tpu.memory_space<vmem>>, %arg5: memref<1x128xf32, #tpu.memory_space<vmem>>, %arg6: memref<128x128xf32, #tpu.memory_space<vmem>>, %arg7: memref<128x128xf32, #tpu.memory_space<vmem>>) attributes {dimension_semantics = [#tpu.dimension_semantics<parallel>, #tpu.dimension_semantics<parallel>, #tpu.dimension_semantics<arbitrary>], iteration_bounds = array<i64: 1, 1, 1>, scalar_prefetch = 0 : i64, scratch_operands = 1 : i64, tpu.core_type = #tpu.core_type<tc>, window_params = [{transform_indices = @transform_0, window_bounds = array<i64: 128, 256>}, {transform_indices = @transform_1, window_bounds = array<i64: 256, 128>}, {transform_indices = @transform_2, window_bounds = array<i64: 1, 128>}, {transform_indices = @transform_3, window_bounds = array<i64: 128, 128>}]} {
    %c0_i32 = arith.constant 0 : i32
    %0 = arith.cmpi eq, %arg2, %c0_i32 : i32
    %1 = arith.extui %0 : i1 to i32
    %c0_i32_0 = arith.constant 0 : i32
    %2 = arith.cmpi ne, %1, %c0_i32_0 : i32
    scf.if %2 {
      %cst_10 = arith.constant 0.000000e+00 : f32
      %12 = vector.broadcast %cst_10 : f32 to vector<128x128xf32>
      %c0_11 = arith.constant 0 : index
      %c0_12 = arith.constant 0 : index
      %13 = vector.load %arg7[%c0_11, %c0_12] : memref<128x128xf32, #tpu.memory_space<vmem>>, vector<128x128xf32>
      tpu.vector_store %arg7[%c0_11, %c0_12], %12 {strides = array<i32>} : memref<128x128xf32, #tpu.memory_space<vmem>>, vector<128x128xf32>,
    } else {
    }
    %c0 = arith.constant 0 : index
    %c0_1 = arith.constant 0 : index
    %3 = vector.load %arg7[%c0, %c0_1] : memref<128x128xf32, #tpu.memory_space<vmem>>, vector<128x128xf32>
    %c0_2 = arith.constant 0 : index
    %c0_3 = arith.constant 0 : index
    %4 = vector.load %arg3[%c0_2, %c0_3] : memref<128x256xbf16, #tpu.memory_space<vmem>>, vector<128x256xbf16>
    %c0_4 = arith.constant 0 : index
    %c0_5 = arith.constant 0 : index
    %5 = vector.load %arg4[%c0_4, %c0_5] : memref<256x128xbf16, #tpu.memory_space<vmem>>, vector<256x128xbf16>
    %cst = arith.constant dense<0.000000e+00> : vector<128x128xf32>
    %6 = tpu.matmul %4, %5, %cst {dimension_numbers = #tpu.dot_dimension_numbers<[1], [0], [0], [1], [0, 0, 1, 1], [], []>} : vector<128x256xbf16>, vector<256x128xbf16>, vector<128x128xf32> -> vector<128x128xf32>
    %7 = arith.addf %3, %6 : vector<128x128xf32>
    %c0_6 = arith.constant 0 : index
    %c0_7 = arith.constant 0 : index
    %8 = vector.load %arg7[%c0_6, %c0_7] : memref<128x128xf32, #tpu.memory_space<vmem>>, vector<128x128xf32>
    tpu.vector_store %arg7[%c0_6, %c0_7], %7 {strides = array<i32>} : memref<128x128xf32, #tpu.memory_space<vmem>>, vector<128x128xf32>,
    %c0_i32_8 = arith.constant 0 : i32
    %9 = arith.cmpi eq, %arg2, %c0_i32_8 : i32
    %10 = arith.extui %9 : i1 to i32
    %c0_i32_9 = arith.constant 0 : i32
    %11 = arith.cmpi ne, %10, %c0_i32_9 : i32
    scf.if %11 {
      %c0_10 = arith.constant 0 : index
      %c0_11 = arith.constant 0 : index
      %12 = vector.load %arg7[%c0_10, %c0_11] : memref<128x128xf32, #tpu.memory_space<vmem>>, vector<128x128xf32>
      %c0_12 = arith.constant 0 : index
      %c0_13 = arith.constant 0 : index
      %13 = vector.load %arg5[%c0_12, %c0_13] : memref<1x128xf32, #tpu.memory_space<vmem>>, vector<1x128xf32>
      %14 = vector.broadcast %13 : vector<1x128xf32> to vector<128x128xf32>
      %15 = arith.addf %12, %14 : vector<128x128xf32>
      %cst_14 = arith.constant 0.000000e+00 : f32
      %16 = vector.broadcast %cst_14 : f32 to vector<128x128xf32>
      %17 = arith.maximumf %15, %16 : vector<128x128xf32>
      %c0_15 = arith.constant 0 : index
      %c0_16 = arith.constant 0 : index
      %18 = vector.load %arg6[%c0_15, %c0_16] : memref<128x128xf32, #tpu.memory_space<vmem>>, vector<128x128xf32>
      tpu.vector_store %arg6[%c0_15, %c0_16], %17 {strides = array<i32>} : memref<128x128xf32, #tpu.memory_space<vmem>>, vector<128x128xf32>,
    } else {
    }
    return
  }
  func.func @transform_0(%arg0: i32, %arg1: i32, %arg2: i32) -> (i32, i32) {
    %c0_i32 = arith.constant 0 : i32
    return %arg0, %arg2 : i32, i32
  }
  func.func @transform_1(%arg0: i32, %arg1: i32, %arg2: i32) -> (i32, i32) {
    %c0_i32 = arith.constant 0 : i32
    return %arg2, %arg1 : i32, i32
  }
  func.func @transform_2(%arg0: i32, %arg1: i32, %arg2: i32) -> (i32, i32) {
    %c0_i32 = arith.constant 0 : i32
    %c0_i32_0 = arith.constant 0 : i32
    return %c0_i32, %arg1 : i32, i32
  }
  func.func @transform_3(%arg0: i32, %arg1: i32, %arg2: i32) -> (i32, i32) {
    %c0_i32 = arith.constant 0 : i32
    return %arg0, %arg1 : i32, i32
  }
}

module attributes {stable_mosaic.version = 11 : i64} {
  func.func @_matmul_bias_kernel(%arg0: i32, %arg1: i32, %arg2: i32, %arg3: memref<128x256xbf16, #tpu.memory_space<vmem>>, %arg4: memref<256x128xbf16, #tpu.memory_space<vmem>>, %arg5: memref<1x128xf32, #tpu.memory_space<vmem>>, %arg6: memref<128x128xf32, #tpu.memory_space<vmem>>, %arg7: memref<128x128xf32, #tpu.memory_space<vmem>>) attributes {dimension_semantics = [#tpu.dimension_semantics<parallel>, #tpu.dimension_semantics<parallel>, #tpu.dimension_semantics<arbitrary>], iteration_bounds = array<i64: 1, 1, 1>, scalar_prefetch = 0 : i64, scratch_operands = 1 : i64, tpu.core_type = #tpu.core_type<tc>, window_params = [{transform_indices = @transform_0, window_bounds = array<i64: 128, 256>}, {transform_indices = @transform_1, window_bounds = array<i64: 256, 128>}, {transform_indices = @transform_2, window_bounds = array<i64: 1, 128>}, {transform_indices = @transform_3, window_bounds = array<i64: 128, 128>}]} {
    %c0_i32 = arith.constant 0 : i32
    %0 = arith.cmpi eq, %arg2, %c0_i32 : i32
    %1 = arith.extui %0 : i1 to i32
    %c0_i32_0 = arith.constant 0 : i32
    %2 = arith.cmpi ne, %1, %c0_i32_0 : i32
    scf.if %2 {
      %cst_10 = arith.constant 0.000000e+00 : f32
      %12 = vector.broadcast %cst_10 : f32 to vector<128x128xf32>
      %c0_11 = arith.constant 0 : index
      %c0_12 = arith.constant 0 : index
      %13 = vector.load %arg7[%c0_11, %c0_12] : memref<128x128xf32, #tpu.memory_space<vmem>>, vector<128x128xf32>
      tpu.vector_store %arg7[%c0_11, %c0_12], %12 {strides = array<i32>} : memref<128x128xf32, #tpu.memory_space<vmem>>, vector<128x128xf32>,
    } else {
    }
    %c0 = arith.constant 0 : index
    %c0_1 = arith.constant 0 : index
    %3 = vector.load %arg7[%c0, %c0_1] : memref<128x128xf32, #tpu.memory_space<vmem>>, vector<128x128xf32>
    %c0_2 = arith.constant 0 : index
    %c0_3 = arith.constant 0 : index
    %4 = vector.load %arg3[%c0_2, %c0_3] : memref<128x256xbf16, #tpu.memory_space<vmem>>, vector<128x256xbf16>
    %c0_4 = arith.constant 0 : index
    %c0_5 = arith.constant 0 : index
    %5 = vector.load %arg4[%c0_4, %c0_5] : memref<256x128xbf16, #tpu.memory_space<vmem>>, vector<256x128xbf16>
    %cst = arith.constant dense<0.000000e+00> : vector<128x128xf32>
    %6 = tpu.matmul %4, %5, %cst {dimension_numbers = #tpu.dot_dimension_numbers<[1], [0], [0], [1], [0, 0, 1, 1], [], []>} : vector<128x256xbf16>, vector<256x128xbf16>, vector<128x128xf32> -> vector<128x128xf32>
    %7 = arith.addf %3, %6 : vector<128x128xf32>
    %c0_6 = arith.constant 0 : index
    %c0_7 = arith.constant 0 : index
    %8 = vector.load %arg7[%c0_6, %c0_7] : memref<128x128xf32, #tpu.memory_space<vmem>>, vector<128x128xf32>
    tpu.vector_store %arg7[%c0_6, %c0_7], %7 {strides = array<i32>} : memref<128x128xf32, #tpu.memory_space<vmem>>, vector<128x128xf32>,
    %c0_i32_8 = arith.constant 0 : i32
    %9 = arith.cmpi eq, %arg2, %c0_i32_8 : i32
    %10 = arith.extui %9 : i1 to i32
    %c0_i32_9 = arith.constant 0 : i32
    %11 = arith.cmpi ne, %10, %c0_i32_9 : i32
    scf.if %11 {
      %c0_10 = arith.constant 0 : index
      %c0_11 = arith.constant 0 : index
      %12 = vector.load %arg7[%c0_10, %c0_11] : memref<128x128xf32, #tpu.memory_space<vmem>>, vector<128x128xf32>
      %c0_12 = arith.constant 0 : index
      %c0_13 = arith.constant 0 : index
      %13 = vector.load %arg5[%c0_12, %c0_13] : memref<1x128xf32, #tpu.memory_space<vmem>>, vector<1x128xf32>
      %14 = vector.broadcast %13 : vector<1x128xf32> to vector<128x128xf32>
      %15 = arith.addf %12, %14 : vector<128x128xf32>
      %c0_14 = arith.constant 0 : index
      %c0_15 = arith.constant 0 : index
      %16 = vector.load %arg6[%c0_14, %c0_15] : memref<128x128xf32, #tpu.memory_space<vmem>>, vector<128x128xf32>
      tpu.vector_store %arg6[%c0_14, %c0_15], %15 {strides = array<i32>} : memref<128x128xf32, #tpu.memory_space<vmem>>, vector<128x128xf32>,
    } else {
    }
    return
  }
  func.func @transform_0(%arg0: i32, %arg1: i32, %arg2: i32) -> (i32, i32) {
    %c0_i32 = arith.constant 0 : i32
    return %arg0, %arg2 : i32, i32
  }
  func.func @transform_1(%arg0: i32, %arg1: i32, %arg2: i32) -> (i32, i32) {
    %c0_i32 = arith.constant 0 : i32
    return %arg2, %arg1 : i32, i32
  }
  func.func @transform_2(%arg0: i32, %arg1: i32, %arg2: i32) -> (i32, i32) {
    %c0_i32 = arith.constant 0 : i32
    %c0_i32_0 = arith.constant 0 : i32
    return %c0_i32, %arg1 : i32, i32
  }
  func.func @transform_3(%arg0: i32, %arg1: i32, %arg2: i32) -> (i32, i32) {
    %c0_i32 = arith.constant 0 : i32
    return %arg0, %arg1 : i32, i32
  }
}

module attributes {stable_mosaic.version = 11 : i64} {
  func.func @_matmul_bias_kernel(%arg0: i32, %arg1: i32, %arg2: i32, %arg3: memref<128x384xbf16, #tpu.memory_space<vmem>>, %arg4: memref<384x128xbf16, #tpu.memory_space<vmem>>, %arg5: memref<1x128xf32, #tpu.memory_space<vmem>>, %arg6: memref<128x128xf32, #tpu.memory_space<vmem>>, %arg7: memref<128x128xf32, #tpu.memory_space<vmem>>) attributes {dimension_semantics = [#tpu.dimension_semantics<parallel>, #tpu.dimension_semantics<parallel>, #tpu.dimension_semantics<arbitrary>], iteration_bounds = array<i64: 1, 1, 1>, scalar_prefetch = 0 : i64, scratch_operands = 1 : i64, tpu.core_type = #tpu.core_type<tc>, window_params = [{transform_indices = @transform_0, window_bounds = array<i64: 128, 384>}, {transform_indices = @transform_1, window_bounds = array<i64: 384, 128>}, {transform_indices = @transform_2, window_bounds = array<i64: 1, 128>}, {transform_indices = @transform_3, window_bounds = array<i64: 128, 128>}]} {
    %c0_i32 = arith.constant 0 : i32
    %0 = arith.cmpi eq, %arg2, %c0_i32 : i32
    %1 = arith.extui %0 : i1 to i32
    %c0_i32_0 = arith.constant 0 : i32
    %2 = arith.cmpi ne, %1, %c0_i32_0 : i32
    scf.if %2 {
      %cst_10 = arith.constant 0.000000e+00 : f32
      %12 = vector.broadcast %cst_10 : f32 to vector<128x128xf32>
      %c0_11 = arith.constant 0 : index
      %c0_12 = arith.constant 0 : index
      %13 = vector.load %arg7[%c0_11, %c0_12] : memref<128x128xf32, #tpu.memory_space<vmem>>, vector<128x128xf32>
      tpu.vector_store %arg7[%c0_11, %c0_12], %12 {strides = array<i32>} : memref<128x128xf32, #tpu.memory_space<vmem>>, vector<128x128xf32>,
    } else {
    }
    %c0 = arith.constant 0 : index
    %c0_1 = arith.constant 0 : index
    %3 = vector.load %arg7[%c0, %c0_1] : memref<128x128xf32, #tpu.memory_space<vmem>>, vector<128x128xf32>
    %c0_2 = arith.constant 0 : index
    %c0_3 = arith.constant 0 : index
    %4 = vector.load %arg3[%c0_2, %c0_3] : memref<128x384xbf16, #tpu.memory_space<vmem>>, vector<128x384xbf16>
    %c0_4 = arith.constant 0 : index
    %c0_5 = arith.constant 0 : index
    %5 = vector.load %arg4[%c0_4, %c0_5] : memref<384x128xbf16, #tpu.memory_space<vmem>>, vector<384x128xbf16>
    %cst = arith.constant dense<0.000000e+00> : vector<128x128xf32>
    %6 = tpu.matmul %4, %5, %cst {dimension_numbers = #tpu.dot_dimension_numbers<[1], [0], [0], [1], [0, 0, 1, 1], [], []>} : vector<128x384xbf16>, vector<384x128xbf16>, vector<128x128xf32> -> vector<128x128xf32>
    %7 = arith.addf %3, %6 : vector<128x128xf32>
    %c0_6 = arith.constant 0 : index
    %c0_7 = arith.constant 0 : index
    %8 = vector.load %arg7[%c0_6, %c0_7] : memref<128x128xf32, #tpu.memory_space<vmem>>, vector<128x128xf32>
    tpu.vector_store %arg7[%c0_6, %c0_7], %7 {strides = array<i32>} : memref<128x128xf32, #tpu.memory_space<vmem>>, vector<128x128xf32>,
    %c0_i32_8 = arith.constant 0 : i32
    %9 = arith.cmpi eq, %arg2, %c0_i32_8 : i32
    %10 = arith.extui %9 : i1 to i32
    %c0_i32_9 = arith.constant 0 : i32
    %11 = arith.cmpi ne, %10, %c0_i32_9 : i32
    scf.if %11 {
      %c0_10 = arith.constant 0 : index
      %c0_11 = arith.constant 0 : index
      %12 = vector.load %arg7[%c0_10, %c0_11] : memref<128x128xf32, #tpu.memory_space<vmem>>, vector<128x128xf32>
      %c0_12 = arith.constant 0 : index
      %c0_13 = arith.constant 0 : index
      %13 = vector.load %arg5[%c0_12, %c0_13] : memref<1x128xf32, #tpu.memory_space<vmem>>, vector<1x128xf32>
      %14 = vector.broadcast %13 : vector<1x128xf32> to vector<128x128xf32>
      %15 = arith.addf %12, %14 : vector<128x128xf32>
      %cst_14 = arith.constant 0.000000e+00 : f32
      %16 = vector.broadcast %cst_14 : f32 to vector<128x128xf32>
      %17 = arith.maximumf %15, %16 : vector<128x128xf32>
      %c0_15 = arith.constant 0 : index
      %c0_16 = arith.constant 0 : index
      %18 = vector.load %arg6[%c0_15, %c0_16] : memref<128x128xf32, #tpu.memory_space<vmem>>, vector<128x128xf32>
      tpu.vector_store %arg6[%c0_15, %c0_16], %17 {strides = array<i32>} : memref<128x128xf32, #tpu.memory_space<vmem>>, vector<128x128xf32>,
    } else {
    }
    return
  }
  func.func @transform_0(%arg0: i32, %arg1: i32, %arg2: i32) -> (i32, i32) {
    %c0_i32 = arith.constant 0 : i32
    return %arg0, %arg2 : i32, i32
  }
  func.func @transform_1(%arg0: i32, %arg1: i32, %arg2: i32) -> (i32, i32) {
    %c0_i32 = arith.constant 0 : i32
    return %arg2, %arg1 : i32, i32
  }
  func.func @transform_2(%arg0: i32, %arg1: i32, %arg2: i32) -> (i32, i32) {
    %c0_i32 = arith.constant 0 : i32
    %c0_i32_0 = arith.constant 0 : i32
    return %c0_i32, %arg1 : i32, i32
  }
  func.func @transform_3(%arg0: i32, %arg1: i32, %arg2: i32) -> (i32, i32) {
    %c0_i32 = arith.constant 0 : i32
    return %arg0, %arg1 : i32, i32
  }
}

module attributes {stable_mosaic.version = 11 : i64} {
  func.func @_matmul_bias_kernel(%arg0: i32, %arg1: i32, %arg2: i32, %arg3: memref<512x256xbf16, #tpu.memory_space<vmem>>, %arg4: memref<256x128xbf16, #tpu.memory_space<vmem>>, %arg5: memref<1x128xf32, #tpu.memory_space<vmem>>, %arg6: memref<512x128xf32, #tpu.memory_space<vmem>>, %arg7: memref<512x128xf32, #tpu.memory_space<vmem>>) attributes {dimension_semantics = [#tpu.dimension_semantics<parallel>, #tpu.dimension_semantics<parallel>, #tpu.dimension_semantics<arbitrary>], iteration_bounds = array<i64: 1, 1, 1>, scalar_prefetch = 0 : i64, scratch_operands = 1 : i64, tpu.core_type = #tpu.core_type<tc>, window_params = [{transform_indices = @transform_0, window_bounds = array<i64: 512, 256>}, {transform_indices = @transform_1, window_bounds = array<i64: 256, 128>}, {transform_indices = @transform_2, window_bounds = array<i64: 1, 128>}, {transform_indices = @transform_3, window_bounds = array<i64: 512, 128>}]} {
    %c0_i32 = arith.constant 0 : i32
    %0 = arith.cmpi eq, %arg2, %c0_i32 : i32
    %1 = arith.extui %0 : i1 to i32
    %c0_i32_0 = arith.constant 0 : i32
    %2 = arith.cmpi ne, %1, %c0_i32_0 : i32
    scf.if %2 {
      %cst_10 = arith.constant 0.000000e+00 : f32
      %12 = vector.broadcast %cst_10 : f32 to vector<512x128xf32>
      %c0_11 = arith.constant 0 : index
      %c0_12 = arith.constant 0 : index
      %13 = vector.load %arg7[%c0_11, %c0_12] : memref<512x128xf32, #tpu.memory_space<vmem>>, vector<512x128xf32>
      tpu.vector_store %arg7[%c0_11, %c0_12], %12 {strides = array<i32>} : memref<512x128xf32, #tpu.memory_space<vmem>>, vector<512x128xf32>,
    } else {
    }
    %c0 = arith.constant 0 : index
    %c0_1 = arith.constant 0 : index
    %3 = vector.load %arg7[%c0, %c0_1] : memref<512x128xf32, #tpu.memory_space<vmem>>, vector<512x128xf32>
    %c0_2 = arith.constant 0 : index
    %c0_3 = arith.constant 0 : index
    %4 = vector.load %arg3[%c0_2, %c0_3] : memref<512x256xbf16, #tpu.memory_space<vmem>>, vector<512x256xbf16>
    %c0_4 = arith.constant 0 : index
    %c0_5 = arith.constant 0 : index
    %5 = vector.load %arg4[%c0_4, %c0_5] : memref<256x128xbf16, #tpu.memory_space<vmem>>, vector<256x128xbf16>
    %cst = arith.constant dense<0.000000e+00> : vector<512x128xf32>
    %6 = tpu.matmul %4, %5, %cst {dimension_numbers = #tpu.dot_dimension_numbers<[1], [0], [0], [1], [0, 0, 1, 1], [], []>} : vector<512x256xbf16>, vector<256x128xbf16>, vector<512x128xf32> -> vector<512x128xf32>
    %7 = arith.addf %3, %6 : vector<512x128xf32>
    %c0_6 = arith.constant 0 : index
    %c0_7 = arith.constant 0 : index
    %8 = vector.load %arg7[%c0_6, %c0_7] : memref<512x128xf32, #tpu.memory_space<vmem>>, vector<512x128xf32>
    tpu.vector_store %arg7[%c0_6, %c0_7], %7 {strides = array<i32>} : memref<512x128xf32, #tpu.memory_space<vmem>>, vector<512x128xf32>,
    %c0_i32_8 = arith.constant 0 : i32
    %9 = arith.cmpi eq, %arg2, %c0_i32_8 : i32
    %10 = arith.extui %9 : i1 to i32
    %c0_i32_9 = arith.constant 0 : i32
    %11 = arith.cmpi ne, %10, %c0_i32_9 : i32
    scf.if %11 {
      %c0_10 = arith.constant 0 : index
      %c0_11 = arith.constant 0 : index
      %12 = vector.load %arg7[%c0_10, %c0_11] : memref<512x128xf32, #tpu.memory_space<vmem>>, vector<512x128xf32>
      %c0_12 = arith.constant 0 : index
      %c0_13 = arith.constant 0 : index
      %13 = vector.load %arg5[%c0_12, %c0_13] : memref<1x128xf32, #tpu.memory_space<vmem>>, vector<1x128xf32>
      %14 = vector.broadcast %13 : vector<1x128xf32> to vector<512x128xf32>
      %15 = arith.addf %12, %14 : vector<512x128xf32>
      %c0_14 = arith.constant 0 : index
      %c0_15 = arith.constant 0 : index
      %16 = vector.load %arg6[%c0_14, %c0_15] : memref<512x128xf32, #tpu.memory_space<vmem>>, vector<512x128xf32>
      tpu.vector_store %arg6[%c0_14, %c0_15], %15 {strides = array<i32>} : memref<512x128xf32, #tpu.memory_space<vmem>>, vector<512x128xf32>,
    } else {
    }
    return
  }
  func.func @transform_0(%arg0: i32, %arg1: i32, %arg2: i32) -> (i32, i32) {
    %c0_i32 = arith.constant 0 : i32
    return %arg0, %arg2 : i32, i32
  }
  func.func @transform_1(%arg0: i32, %arg1: i32, %arg2: i32) -> (i32, i32) {
    %c0_i32 = arith.constant 0 : i32
    return %arg2, %arg1 : i32, i32
  }
  func.func @transform_2(%arg0: i32, %arg1: i32, %arg2: i32) -> (i32, i32) {
    %c0_i32 = arith.constant 0 : i32
    %c0_i32_0 = arith.constant 0 : i32
    return %c0_i32, %arg1 : i32, i32
  }
  func.func @transform_3(%arg0: i32, %arg1: i32, %arg2: i32) -> (i32, i32) {
    %c0_i32 = arith.constant 0 : i32
    return %arg0, %arg1 : i32, i32
  }
}

</mosaic_0001>

<llo_original>
// kernel: rdn_forward.12
$region0: #{rdn_forward.12}
  #allocation0 [shape = 'u32[]', space=smem, size = 0x4, offset = 0x4, fixed_abs, tag = 'smem constant byte address 0x4 - core index']
  #allocation1 [shape = 'u32[144,128]{1,0:T(1,128)}', space=vmem, size = 0x12000, scoped, tag = 'internal scratch']
  #allocation2 [shape = 'f32[128,128]{1,0:T(8,128)}', space=vmem, size = 0x10000, scoped, tag = 'scratch operand']
  %s0 = inlined_call_operand.vmem [shape: bf16[128,128], index: 0, kind: input, shape index: {}]
  %s1 = inlined_call_operand.vmem [shape: bf16[128,128], index: 1, kind: input, shape index: {}]
  %s2 = inlined_call_operand.vmem [shape: f32[1,128], index: 2, kind: input, shape index: {}]
  %s3 = inlined_call_operand.vmem [shape: f32[128,128], index: 3, kind: output, shape index: {}]
  %s4 = sld [smem:[#allocation0]]
  $region30: #{rdn_forward.12} parent=0
    _
  %s6 = ssub.s32 1, %s4
  %s7 = scalar_select 0, %s6, %s4
  // Predicated region
  $region2: #{rdn_forward.12} parent=0 // pred_check
    _
  $region3: #{rdn_forward.12} parent=0 // pred_check_branch
    %9 = sbr.rel (0) target = $region5
  $region4: #{rdn_forward.12} parent=0 // pred_region
    _
  $region5: #{rdn_forward.12} parent=0 // pred_fallthru
    _
  // Predicated region
  $region6: #{rdn_forward.12} parent=0 // pred_check
    _
  $region7: #{rdn_forward.12} parent=0 // pred_check_branch
    %11 = sbr.rel (0) target = $region9
  $region8: #{rdn_forward.12} parent=0 // pred_region
    _
  $region9: #{rdn_forward.12} parent=0 // pred_fallthru
    _
  // Predicated region
  $region10: #{rdn_forward.12} parent=0 // pred_check
    _
  $region11: #{rdn_forward.12} parent=0 // pred_check_branch
    %13 = sbr.rel (0) target = $region13
  $region12: #{rdn_forward.12} parent=0 // pred_region
    _
  $region13: #{rdn_forward.12} parent=0 // pred_fallthru
    _
  %p15 = scmp.eq.s32.totalorder 0, 0
  // Predicated region
  $region14: #{rdn_forward.12} parent=0 // pred_check
    %p16 = pneg %p15
  $region15: #{rdn_forward.12} parent=0 // pred_check_branch
    %18 = sbr.rel (%p16) target = $region17
  $region16: #{rdn_forward.12} parent=0 // pred_region
    %19 = vst [vmem:[#allocation2] sm:$0xff] 0.0
    %20 = vst [vmem:[#allocation2 + $0x8] sm:$0xff] 0.0
    %21 = vst [vmem:[#allocation2 + $0x10] sm:$0xff] 0.0
    %22 = vst [vmem:[#allocation2 + $0x18] sm:$0xff] 0.0
    %23 = vst [vmem:[#allocation2 + $0x20] sm:$0xff] 0.0
    %24 = vst [vmem:[#allocation2 + $0x28] sm:$0xff] 0.0
    %25 = vst [vmem:[#allocation2 + $0x30] sm:$0xff] 0.0
    %26 = vst [vmem:[#allocation2 + $0x38] sm:$0xff] 0.0
    %27 = vst [vmem:[#allocation2 + $0x40] sm:$0xff] 0.0
    %28 = vst [vmem:[#allocation2 + $0x48] sm:$0xff] 0.0
    %29 = vst [vmem:[#allocation2 + $0x50] sm:$0xff] 0.0
    %30 = vst [vmem:[#allocation2 + $0x58] sm:$0xff] 0.0
    %31 = vst [vmem:[#allocation2 + $0x60] sm:$0xff] 0.0
    %32 = vst [vmem:[#allocation2 + $0x68] sm:$0xff] 0.0
    %33 = vst [vmem:[#allocation2 + $0x70] sm:$0xff] 0.0
    %34 = vst [vmem:[#allocation2 + $0x78] sm:$0xff] 0.0
  $region17: #{rdn_forward.12} parent=0 // pred_fallthru
    _
  %v35 = vld [vmem:[#allocation2] sm:$0xff]
  %v36 = vld [vmem:[#allocation2 + $0x8] sm:$0xff]
  %v37 = vld [vmem:[#allocation2 + $0x10] sm:$0xff]
  %v38 = vld [vmem:[#allocation2 + $0x18] sm:$0xff]
  %v39 = vld [vmem:[#allocation2 + $0x20] sm:$0xff]
  %v40 = vld [vmem:[#allocation2 + $0x28] sm:$0xff]
  %v41 = vld [vmem:[#allocation2 + $0x30] sm:$0xff]
  %v42 = vld [vmem:[#allocation2 + $0x38] sm:$0xff]
  %v43 = vld [vmem:[#allocation2 + $0x40] sm:$0xff]
  %v44 = vld [vmem:[#allocation2 + $0x48] sm:$0xff]
  %v45 = vld [vmem:[#allocation2 + $0x50] sm:$0xff]
  %v46 = vld [vmem:[#allocation2 + $0x58] sm:$0xff]
  %v47 = vld [vmem:[#allocation2 + $0x60] sm:$0xff]
  %v48 = vld [vmem:[#allocation2 + $0x68] sm:$0xff]
  %v49 = vld [vmem:[#allocation2 + $0x70] sm:$0xff]
  %v50 = vld [vmem:[#allocation2 + $0x78] sm:$0xff]
  %v51 = vld [vmem:[%s0] sm:$0xf]
  %v52 = vld [vmem:[%s0 + $0x4] sm:$0xf]
  %v53 = vld [vmem:[%s0 + $0x8] sm:$0xf]
  %v54 = vld [vmem:[%s0 + $0xc] sm:$0xf]
  %v55 = vld [vmem:[%s0 + $0x10] sm:$0xf]
  %v56 = vld [vmem:[%s0 + $0x14] sm:$0xf]
  %v57 = vld [vmem:[%s0 + $0x18] sm:$0xf]
  %v58 = vld [vmem:[%s0 + $0x1c] sm:$0xf]
  %v59 = vld [vmem:[%s0 + $0x20] sm:$0xf]
  %v60 = vld [vmem:[%s0 + $0x24] sm:$0xf]
  %v61 = vld [vmem:[%s0 + $0x28] sm:$0xf]
  %v62 = vld [vmem:[%s0 + $0x2c] sm:$0xf]
  %v63 = vld [vmem:[%s0 + $0x30] sm:$0xf]
  %v64 = vld [vmem:[%s0 + $0x34] sm:$0xf]
  %v65 = vld [vmem:[%s0 + $0x38] sm:$0xf]
  %v66 = vld [vmem:[%s0 + $0x3c] sm:$0xf]
  %v67 = vld [vmem:[%s1] sm:$0xf]
  %v68 = vld [vmem:[%s1 + $0x4] sm:$0xf]
  %v69 = vld [vmem:[%s1 + $0x8] sm:$0xf]
  %v70 = vld [vmem:[%s1 + $0xc] sm:$0xf]
  %v71 = vld [vmem:[%s1 + $0x10] sm:$0xf]
  %v72 = vld [vmem:[%s1 + $0x14] sm:$0xf]
  %v73 = vld [vmem:[%s1 + $0x18] sm:$0xf]
  %v74 = vld [vmem:[%s1 + $0x1c] sm:$0xf]
  %v75 = vld [vmem:[%s1 + $0x20] sm:$0xf]
  %v76 = vld [vmem:[%s1 + $0x24] sm:$0xf]
  %v77 = vld [vmem:[%s1 + $0x28] sm:$0xf]
  %v78 = vld [vmem:[%s1 + $0x2c] sm:$0xf]
  %v79 = vld [vmem:[%s1 + $0x30] sm:$0xf]
  %v80 = vld [vmem:[%s1 + $0x34] sm:$0xf]
  %v81 = vld [vmem:[%s1 + $0x38] sm:$0xf]
  %v82 = vld [vmem:[%s1 + $0x3c] sm:$0xf]
  %v99 = vunpack.c.l.b16 %v51
  %v100 = vunpack.c.l.b16 %v52
  %v101 = vunpack.c.l.b16 %v53
  %v102 = vunpack.c.l.b16 %v54
  %v103 = vunpack.c.l.b16 %v55
  %v104 = vunpack.c.l.b16 %v56
  %v105 = vunpack.c.l.b16 %v57
  %v106 = vunpack.c.l.b16 %v58
  %v107 = vunpack.c.l.b16 %v59
  %v108 = vunpack.c.l.b16 %v60
  %v109 = vunpack.c.l.b16 %v61
  %v110 = vunpack.c.l.b16 %v62
  %v111 = vunpack.c.l.b16 %v63
  %v112 = vunpack.c.l.b16 %v64
  %v113 = vunpack.c.l.b16 %v65
  %v114 = vunpack.c.l.b16 %v66
  %v115 = vpack.c.b16 %v100, %v99
  %v116 = vpack.c.b16 %v102, %v101
  %v117 = vpack.c.b16 %v104, %v103
  %v118 = vpack.c.b16 %v106, %v105
  %v119 = vpack.c.b16 %v108, %v107
  %v120 = vpack.c.b16 %v110, %v109
  %v121 = vpack.c.b16 %v112, %v111
  %v122 = vpack.c.b16 %v114, %v113
  %v147 = vunpack.c.l.b16 %v67
  %v148 = vunpack.c.l.b16 %v68
  %v149 = vunpack.c.l.b16 %v69
  %v150 = vunpack.c.l.b16 %v70
  %v151 = vunpack.c.l.b16 %v71
  %v152 = vunpack.c.l.b16 %v72
  %v153 = vunpack.c.l.b16 %v73
  %v154 = vunpack.c.l.b16 %v74
  %v155 = vunpack.c.l.b16 %v75
  %v156 = vunpack.c.l.b16 %v76
  %v157 = vunpack.c.l.b16 %v77
  %v158 = vunpack.c.l.b16 %v78
  %v159 = vunpack.c.l.b16 %v79
  %v160 = vunpack.c.l.b16 %v80
  %v161 = vunpack.c.l.b16 %v81
  %v162 = vunpack.c.l.b16 %v82
  %v163 = vpack.c.b16 %v148, %v147
  %v164 = vpack.c.b16 %v150, %v149
  %v165 = vpack.c.b16 %v152, %v151
  %v166 = vpack.c.b16 %v154, %v153
  %v167 = vpack.c.b16 %v156, %v155
  %v168 = vpack.c.b16 %v158, %v157
  %v169 = vpack.c.b16 %v160, %v159
  %v170 = vpack.c.b16 %v162, %v161
  %179 = vmatprep.subr.bf16.mxu0 0
  %180 = vmatpush1.bf16.msra.mxu0 %v163
  %181 = vmatprep.subr.bf16.mxu0 0
  %182 = vmatpush1.bf16.msra.mxu0 %v164
  %183 = vmatprep.subr.bf16.mxu0 0
  %184 = vmatpush1.bf16.msra.mxu0 %v165
  %185 = vmatprep.subr.bf16.mxu0 0
  %186 = vmatpush1.bf16.msra.mxu0 %v166
  %187 = vmatprep.subr.bf16.mxu0 0
  %188 = vmatpush1.bf16.msra.mxu0 %v167
  %189 = vmatprep.subr.bf16.mxu0 0
  %190 = vmatpush1.bf16.msra.mxu0 %v168
  %191 = vmatprep.subr.bf16.mxu0 0
  %192 = vmatpush1.bf16.msra.mxu0 %v169
  %193 = vmatprep.subr.bf16.mxu0 0
  %194 = vmatpush1.bf16.msra.mxu0 %v170
  %195 = vmatprep.subr.bf16.mxu0 0
  %196 = vmatpush1.bf16.msra.mxu0 0
  %197 = vmatprep.subr.bf16.mxu0 0
  %198 = vmatpush1.bf16.msra.mxu0 0
  %199 = vmatprep.subr.bf16.mxu0 0
  %200 = vmatpush1.bf16.msra.mxu0 0
  %201 = vmatprep.subr.bf16.mxu0 0
  %202 = vmatpush1.bf16.msra.mxu0 0
  %203 = vmatprep.subr.bf16.mxu0 0
  %204 = vmatpush1.bf16.msra.mxu0 0
  %205 = vmatprep.subr.bf16.mxu0 0
  %206 = vmatpush1.bf16.msra.mxu0 0
  %207 = vmatprep.subr.bf16.mxu0 0
  %208 = vmatpush1.bf16.msra.mxu0 0
  %209 = vmatprep.subr.bf16.mxu0 0
  %210 = vmatpush1.bf16.msra.mxu0 0
  %211 = vmatprep.mubr.bf16.mxu0 0
  %212 = vmatmul.mubr.bf16.gmra.mrb[0].mxu0 %v115
  %v213 = vpop.f32.mrb[0].mxu0
  %v214 = vadd.f32 0.0, %v213
  %v215 = vpop.f32.mrb[0].mxu0
  %v216 = vpop.f32.mrb[0].mxu0
  %v217 = vadd.f32 0.0, %v216
  %v218 = vpop.f32.mrb[0].mxu0
  %219 = vmatprep.mubr.bf16.mxu0 0
  %220 = vmatmul.mubr.bf16.gmra.mrb[0].mxu0 %v116
  %v221 = vpop.f32.mrb[0].mxu0
  %v222 = vadd.f32 0.0, %v221
  %v223 = vpop.f32.mrb[0].mxu0
  %v224 = vpop.f32.mrb[0].mxu0
  %v225 = vadd.f32 0.0, %v224
  %v226 = vpop.f32.mrb[0].mxu0
  %227 = vmatprep.mubr.bf16.mxu0 0
  %228 = vmatmul.mubr.bf16.gmra.mrb[0].mxu0 %v117
  %v229 = vpop.f32.mrb[0].mxu0
  %v230 = vadd.f32 0.0, %v229
  %v231 = vpop.f32.mrb[0].mxu0
  %v232 = vpop.f32.mrb[0].mxu0
  %v233 = vadd.f32 0.0, %v232
  %v234 = vpop.f32.mrb[0].mxu0
  %235 = vmatprep.mubr.bf16.mxu0 0
  %236 = vmatmul.mubr.bf16.gmra.mrb[0].mxu0 %v118
  %v237 = vpop.f32.mrb[0].mxu0
  %v238 = vadd.f32 0.0, %v237
  %v239 = vpop.f32.mrb[0].mxu0
  %v240 = vpop.f32.mrb[0].mxu0
  %v241 = vadd.f32 0.0, %v240
  %v242 = vpop.f32.mrb[0].mxu0
  %243 = vmatprep.mubr.bf16.mxu0 0
  %244 = vmatmul.mubr.bf16.gmra.mrb[0].mxu0 %v119
  %v245 = vpop.f32.mrb[0].mxu0
  %v246 = vadd.f32 0.0, %v245
  %v247 = vpop.f32.mrb[0].mxu0
  %v248 = vpop.f32.mrb[0].mxu0
  %v249 = vadd.f32 0.0, %v248
  %v250 = vpop.f32.mrb[0].mxu0
  %251 = vmatprep.mubr.bf16.mxu0 0
  %252 = vmatmul.mubr.bf16.gmra.mrb[0].mxu0 %v120
  %v253 = vpop.f32.mrb[0].mxu0
  %v254 = vadd.f32 0.0, %v253
  %v255 = vpop.f32.mrb[0].mxu0
  %v256 = vpop.f32.mrb[0].mxu0
  %v257 = vadd.f32 0.0, %v256
  %v258 = vpop.f32.mrb[0].mxu0
  %259 = vmatprep.mubr.bf16.mxu0 0
  %260 = vmatmul.mubr.bf16.gmra.mrb[0].mxu0 %v121
  %v261 = vpop.f32.mrb[0].mxu0
  %v262 = vadd.f32 0.0, %v261
  %v263 = vpop.f32.mrb[0].mxu0
  %v264 = vpop.f32.mrb[0].mxu0
  %v265 = vadd.f32 0.0, %v264
  %v266 = vpop.f32.mrb[0].mxu0
  %267 = vmatprep.mubr.bf16.mxu0 0
  %268 = vmatmul.mubr.bf16.gmra.mrb[0].mxu0 %v122
  %v269 = vpop.f32.mrb[0].mxu0
  %v270 = vadd.f32 0.0, %v269
  %v271 = vpop.f32.mrb[0].mxu0
  %v272 = vpop.f32.mrb[0].mxu0
  %v273 = vadd.f32 0.0, %v272
  %v274 = vpop.f32.mrb[0].mxu0
  %275 = vdwg.mxu0
  %v276 = vadd.f32 %v35, %v214
  %v277 = vadd.f32 %v36, %v217
  %v278 = vadd.f32 %v37, %v222
  %v279 = vadd.f32 %v38, %v225
  %v280 = vadd.f32 %v39, %v230
  %v281 = vadd.f32 %v40, %v233
  %v282 = vadd.f32 %v41, %v238
  %v283 = vadd.f32 %v42, %v241
  %v284 = vadd.f32 %v43, %v246
  %v285 = vadd.f32 %v44, %v249
  %v286 = vadd.f32 %v45, %v254
  %v287 = vadd.f32 %v46, %v257
  %v288 = vadd.f32 %v47, %v262
  %v289 = vadd.f32 %v48, %v265
  %v290 = vadd.f32 %v49, %v270
  %v291 = vadd.f32 %v50, %v273
  %292 = vst [vmem:[#allocation2] sm:$0xff] %v276
  %293 = vst [vmem:[#allocation2 + $0x8] sm:$0xff] %v277
  %294 = vst [vmem:[#allocation2 + $0x10] sm:$0xff] %v278
  %295 = vst [vmem:[#allocation2 + $0x18] sm:$0xff] %v279
  %296 = vst [vmem:[#allocation2 + $0x20] sm:$0xff] %v280
  %297 = vst [vmem:[#allocation2 + $0x28] sm:$0xff] %v281
  %298 = vst [vmem:[#allocation2 + $0x30] sm:$0xff] %v282
  %299 = vst [vmem:[#allocation2 + $0x38] sm:$0xff] %v283
  %300 = vst [vmem:[#allocation2 + $0x40] sm:$0xff] %v284
  %301 = vst [vmem:[#allocation2 + $0x48] sm:$0xff] %v285
  %302 = vst [vmem:[#allocation2 + $0x50] sm:$0xff] %v286
  %303 = vst [vmem:[#allocation2 + $0x58] sm:$0xff] %v287
  %304 = vst [vmem:[#allocation2 + $0x60] sm:$0xff] %v288
  %305 = vst [vmem:[#allocation2 + $0x68] sm:$0xff] %v289
  %306 = vst [vmem:[#allocation2 + $0x70] sm:$0xff] %v290
  %307 = vst [vmem:[#allocation2 + $0x78] sm:$0xff] %v291
  // Predicated region
  $region18: #{rdn_forward.12} parent=0 // pred_check
    %p308 = pneg %p15
  $region19: #{rdn_forward.12} parent=0 // pred_check_branch
    %310 = sbr.rel (%p308) target = $region21
  $region20: #{rdn_forward.12} parent=0 // pred_region
    %v311 = vld [vmem:[#allocation2] sm:$0xff]
    %v312 = vld [vmem:[#allocation2 + $0x8] sm:$0xff]
    %v313 = vld [vmem:[#allocation2 + $0x10] sm:$0xff]
    %v314 = vld [vmem:[#allocation2 + $0x18] sm:$0xff]
    %v315 = vld [vmem:[#allocation2 + $0x20] sm:$0xff]
    %v316 = vld [vmem:[#allocation2 + $0x28] sm:$0xff]
    %v317 = vld [vmem:[#allocation2 + $0x30] sm:$0xff]
    %v318 = vld [vmem:[#allocation2 + $0x38] sm:$0xff]
    %v319 = vld [vmem:[#allocation2 + $0x40] sm:$0xff]
    %v320 = vld [vmem:[#allocation2 + $0x48] sm:$0xff]
    %v321 = vld [vmem:[#allocation2 + $0x50] sm:$0xff]
    %v322 = vld [vmem:[#allocation2 + $0x58] sm:$0xff]
    %v323 = vld [vmem:[#allocation2 + $0x60] sm:$0xff]
    %v324 = vld [vmem:[#allocation2 + $0x68] sm:$0xff]
    %v325 = vld [vmem:[#allocation2 + $0x70] sm:$0xff]
    %v326 = vld [vmem:[#allocation2 + $0x78] sm:$0xff]
    %v327 = vld [vmem:[%s2] sm:$0x1]
    %v329 = vlaneseq
    %v330 = vshrl.u32 %v329, 7
    %v331 = vsub.s32 0, %v330
    %v332 = vrot.slane %v327, %v331
    %v334 = vadd.f32 %v311, %v332
    %v335 = vadd.f32 %v312, %v332
    %v336 = vadd.f32 %v313, %v332
    %v337 = vadd.f32 %v314, %v332
    %v338 = vadd.f32 %v315, %v332
    %v339 = vadd.f32 %v316, %v332
    %v340 = vadd.f32 %v317, %v332
    %v341 = vadd.f32 %v318, %v332
    %v342 = vadd.f32 %v319, %v332
    %v343 = vadd.f32 %v320, %v332
    %v344 = vadd.f32 %v321, %v332
    %v345 = vadd.f32 %v322, %v332
    %v346 = vadd.f32 %v323, %v332
    %v347 = vadd.f32 %v324, %v332
    %v348 = vadd.f32 %v325, %v332
    %v349 = vadd.f32 %v326, %v332
    %350 = vst [vmem:[%s3] sm:$0xff] %v334
    %351 = vst [vmem:[%s3 + $0x8] sm:$0xff] %v335
    %352 = vst [vmem:[%s3 + $0x10] sm:$0xff] %v336
    %353 = vst [vmem:[%s3 + $0x18] sm:$0xff] %v337
    %354 = vst [vmem:[%s3 + $0x20] sm:$0xff] %v338
    %355 = vst [vmem:[%s3 + $0x28] sm:$0xff] %v339
    %356 = vst [vmem:[%s3 + $0x30] sm:$0xff] %v340
    %357 = vst [vmem:[%s3 + $0x38] sm:$0xff] %v341
    %358 = vst [vmem:[%s3 + $0x40] sm:$0xff] %v342
    %359 = vst [vmem:[%s3 + $0x48] sm:$0xff] %v343
    %360 = vst [vmem:[%s3 + $0x50] sm:$0xff] %v344
    %361 = vst [vmem:[%s3 + $0x58] sm:$0xff] %v345
    %362 = vst [vmem:[%s3 + $0x60] sm:$0xff] %v346
    %363 = vst [vmem:[%s3 + $0x68] sm:$0xff] %v347
    %364 = vst [vmem:[%s3 + $0x70] sm:$0xff] %v348
    %365 = vst [vmem:[%s3 + $0x78] sm:$0xff] %v349
  $region21: #{rdn_forward.12} parent=0 // pred_fallthru
    _
  // Predicated region
  $region22: #{rdn_forward.12} parent=0 // pred_check
    _
  $region23: #{rdn_forward.12} parent=0 // pred_check_branch
    %367 = sbr.rel (0) target = $region25
  $region24: #{rdn_forward.12} parent=0 // pred_region
    _
  $region25: #{rdn_forward.12} parent=0 // pred_fallthru
    _
  // Predicated region
  $region26: #{rdn_forward.12} parent=0 // pred_check
    _
  $region27: #{rdn_forward.12} parent=0 // pred_check_branch
    %369 = sbr.rel (0) target = $region29
  $region28: #{rdn_forward.12} parent=0 // pred_region
    _
  $region29: #{rdn_forward.12} parent=0 // pred_fallthru
    _

// kernel: rdn_forward.14
$region0: #{rdn_forward.14}
  #allocation0 [shape = 'u32[]', space=smem, size = 0x4, offset = 0x4, fixed_abs, tag = 'smem constant byte address 0x4 - core index']
  #allocation1 [shape = 'u32[144,128]{1,0:T(1,128)}', space=vmem, size = 0x12000, scoped, tag = 'internal scratch']
  #allocation2 [shape = 'f32[128,128]{1,0:T(8,128)}', space=vmem, size = 0x10000, scoped, tag = 'scratch operand']
  %s0 = inlined_call_operand.vmem [shape: bf16[128,256], index: 0, kind: input, shape index: {}]
  %s1 = inlined_call_operand.vmem [shape: bf16[256,128], index: 1, kind: input, shape index: {}]
  %s2 = inlined_call_operand.vmem [shape: f32[1,128], index: 2, kind: input, shape index: {}]
  %s3 = inlined_call_operand.vmem [shape: f32[128,128], index: 3, kind: output, shape index: {}]
  %s4 = sld [smem:[#allocation0]]
  $region30: #{rdn_forward.14} parent=0
    _
  %s6 = ssub.s32 1, %s4
  %s7 = scalar_select 0, %s6, %s4
  // Predicated region
  $region2: #{rdn_forward.14} parent=0 // pred_check
    _
  $region3: #{rdn_forward.14} parent=0 // pred_check_branch
    %9 = sbr.rel (0) target = $region5
  $region4: #{rdn_forward.14} parent=0 // pred_region
    _
  $region5: #{rdn_forward.14} parent=0 // pred_fallthru
    _
  // Predicated region
  $region6: #{rdn_forward.14} parent=0 // pred_check
    _
  $region7: #{rdn_forward.14} parent=0 // pred_check_branch
    %11 = sbr.rel (0) target = $region9
  $region8: #{rdn_forward.14} parent=0 // pred_region
    _
  $region9: #{rdn_forward.14} parent=0 // pred_fallthru
    _
  // Predicated region
  $region10: #{rdn_forward.14} parent=0 // pred_check
    _
  $region11: #{rdn_forward.14} parent=0 // pred_check_branch
    %13 = sbr.rel (0) target = $region13
  $region12: #{rdn_forward.14} parent=0 // pred_region
    _
  $region13: #{rdn_forward.14} parent=0 // pred_fallthru
    _
  %p15 = scmp.eq.s32.totalorder 0, 0
  // Predicated region
  $region14: #{rdn_forward.14} parent=0 // pred_check
    %p16 = pneg %p15
  $region15: #{rdn_forward.14} parent=0 // pred_check_branch
    %18 = sbr.rel (%p16) target = $region17
  $region16: #{rdn_forward.14} parent=0 // pred_region
    %19 = vst [vmem:[#allocation2] sm:$0xff] 0.0
    %20 = vst [vmem:[#allocation2 + $0x8] sm:$0xff] 0.0
    %21 = vst [vmem:[#allocation2 + $0x10] sm:$0xff] 0.0
    %22 = vst [vmem:[#allocation2 + $0x18] sm:$0xff] 0.0
    %23 = vst [vmem:[#allocation2 + $0x20] sm:$0xff] 0.0
    %24 = vst [vmem:[#allocation2 + $0x28] sm:$0xff] 0.0
    %25 = vst [vmem:[#allocation2 + $0x30] sm:$0xff] 0.0
    %26 = vst [vmem:[#allocation2 + $0x38] sm:$0xff] 0.0
    %27 = vst [vmem:[#allocation2 + $0x40] sm:$0xff] 0.0
    %28 = vst [vmem:[#allocation2 + $0x48] sm:$0xff] 0.0
    %29 = vst [vmem:[#allocation2 + $0x50] sm:$0xff] 0.0
    %30 = vst [vmem:[#allocation2 + $0x58] sm:$0xff] 0.0
    %31 = vst [vmem:[#allocation2 + $0x60] sm:$0xff] 0.0
    %32 = vst [vmem:[#allocation2 + $0x68] sm:$0xff] 0.0
    %33 = vst [vmem:[#allocation2 + $0x70] sm:$0xff] 0.0
    %34 = vst [vmem:[#allocation2 + $0x78] sm:$0xff] 0.0
  $region17: #{rdn_forward.14} parent=0 // pred_fallthru
    _
  %v35 = vld [vmem:[#allocation2] sm:$0xff]
  %v36 = vld [vmem:[#allocation2 + $0x8] sm:$0xff]
  %v37 = vld [vmem:[#allocation2 + $0x10] sm:$0xff]
  %v38 = vld [vmem:[#allocation2 + $0x18] sm:$0xff]
  %v39 = vld [vmem:[#allocation2 + $0x20] sm:$0xff]
  %v40 = vld [vmem:[#allocation2 + $0x28] sm:$0xff]
  %v41 = vld [vmem:[#allocation2 + $0x30] sm:$0xff]
  %v42 = vld [vmem:[#allocation2 + $0x38] sm:$0xff]
  %v43 = vld [vmem:[#allocation2 + $0x40] sm:$0xff]
  %v44 = vld [vmem:[#allocation2 + $0x48] sm:$0xff]
  %v45 = vld [vmem:[#allocation2 + $0x50] sm:$0xff]
  %v46 = vld [vmem:[#allocation2 + $0x58] sm:$0xff]
  %v47 = vld [vmem:[#allocation2 + $0x60] sm:$0xff]
  %v48 = vld [vmem:[#allocation2 + $0x68] sm:$0xff]
  %v49 = vld [vmem:[#allocation2 + $0x70] sm:$0xff]
  %v50 = vld [vmem:[#allocation2 + $0x78] sm:$0xff]
  %v51 = vld [vmem:[%s0] sm:$0xff]
  %v52 = vld [vmem:[%s0 + $0x8] sm:$0xff]
  %v53 = vld [vmem:[%s0 + $0x10] sm:$0xff]
  %v54 = vld [vmem:[%s0 + $0x18] sm:$0xff]
  %v55 = vld [vmem:[%s0 + $0x20] sm:$0xff]
  %v56 = vld [vmem:[%s0 + $0x28] sm:$0xff]
  %v57 = vld [vmem:[%s0 + $0x30] sm:$0xff]
  %v58 = vld [vmem:[%s0 + $0x38] sm:$0xff]
  %v59 = vld [vmem:[%s0 + $0x40] sm:$0xff]
  %v60 = vld [vmem:[%s0 + $0x48] sm:$0xff]
  %v61 = vld [vmem:[%s0 + $0x50] sm:$0xff]
  %v62 = vld [vmem:[%s0 + $0x58] sm:$0xff]
  %v63 = vld [vmem:[%s0 + $0x60] sm:$0xff]
  %v64 = vld [vmem:[%s0 + $0x68] sm:$0xff]
  %v65 = vld [vmem:[%s0 + $0x70] sm:$0xff]
  %v66 = vld [vmem:[%s0 + $0x78] sm:$0xff]
  %v67 = vld [vmem:[%s1] sm:$0xf]
  %v68 = vld [vmem:[%s1 + $0x4] sm:$0xf]
  %v69 = vld [vmem:[%s1 + $0x8] sm:$0xf]
  %v70 = vld [vmem:[%s1 + $0xc] sm:$0xf]
  %v71 = vld [vmem:[%s1 + $0x10] sm:$0xf]
  %v72 = vld [vmem:[%s1 + $0x14] sm:$0xf]
  %v73 = vld [vmem:[%s1 + $0x18] sm:$0xf]
  %v74 = vld [vmem:[%s1 + $0x1c] sm:$0xf]
  %v75 = vld [vmem:[%s1 + $0x20] sm:$0xf]
  %v76 = vld [vmem:[%s1 + $0x24] sm:$0xf]
  %v77 = vld [vmem:[%s1 + $0x28] sm:$0xf]
  %v78 = vld [vmem:[%s1 + $0x2c] sm:$0xf]
  %v79 = vld [vmem:[%s1 + $0x30] sm:$0xf]
  %v80 = vld [vmem:[%s1 + $0x34] sm:$0xf]
  %v81 = vld [vmem:[%s1 + $0x38] sm:$0xf]
  %v82 = vld [vmem:[%s1 + $0x3c] sm:$0xf]
  %v83 = vld [vmem:[%s1 + $0x40] sm:$0xf]
  %v84 = vld [vmem:[%s1 + $0x44] sm:$0xf]
  %v85 = vld [vmem:[%s1 + $0x48] sm:$0xf]
  %v86 = vld [vmem:[%s1 + $0x4c] sm:$0xf]
  %v87 = vld [vmem:[%s1 + $0x50] sm:$0xf]
  %v88 = vld [vmem:[%s1 + $0x54] sm:$0xf]
  %v89 = vld [vmem:[%s1 + $0x58] sm:$0xf]
  %v90 = vld [vmem:[%s1 + $0x5c] sm:$0xf]
  %v91 = vld [vmem:[%s1 + $0x60] sm:$0xf]
  %v92 = vld [vmem:[%s1 + $0x64] sm:$0xf]
  %v93 = vld [vmem:[%s1 + $0x68] sm:$0xf]
  %v94 = vld [vmem:[%s1 + $0x6c] sm:$0xf]
  %v95 = vld [vmem:[%s1 + $0x70] sm:$0xf]
  %v96 = vld [vmem:[%s1 + $0x74] sm:$0xf]
  %v97 = vld [vmem:[%s1 + $0x78] sm:$0xf]
  %v98 = vld [vmem:[%s1 + $0x7c] sm:$0xf]
  %v115 = vunpack.c.l.b16 %v51
  %v116 = vunpack.c.h.b16 %v51
  %v117 = vunpack.c.l.b16 %v52
  %v118 = vunpack.c.h.b16 %v52
  %v119 = vunpack.c.l.b16 %v53
  %v120 = vunpack.c.h.b16 %v53
  %v121 = vunpack.c.l.b16 %v54
  %v122 = vunpack.c.h.b16 %v54
  %v123 = vunpack.c.l.b16 %v55
  %v124 = vunpack.c.h.b16 %v55
  %v125 = vunpack.c.l.b16 %v56
  %v126 = vunpack.c.h.b16 %v56
  %v127 = vunpack.c.l.b16 %v57
  %v128 = vunpack.c.h.b16 %v57
  %v129 = vunpack.c.l.b16 %v58
  %v130 = vunpack.c.h.b16 %v58
  %v131 = vunpack.c.l.b16 %v59
  %v132 = vunpack.c.h.b16 %v59
  %v133 = vunpack.c.l.b16 %v60
  %v134 = vunpack.c.h.b16 %v60
  %v135 = vunpack.c.l.b16 %v61
  %v136 = vunpack.c.h.b16 %v61
  %v137 = vunpack.c.l.b16 %v62
  %v138 = vunpack.c.h.b16 %v62
  %v139 = vunpack.c.l.b16 %v63
  %v140 = vunpack.c.h.b16 %v63
  %v141 = vunpack.c.l.b16 %v64
  %v142 = vunpack.c.h.b16 %v64
  %v143 = vunpack.c.l.b16 %v65
  %v144 = vunpack.c.h.b16 %v65
  %v145 = vunpack.c.l.b16 %v66
  %v146 = vunpack.c.h.b16 %v66
  %v147 = vpack.c.b16 %v117, %v115
  %v148 = vpack.c.b16 %v118, %v116
  %v149 = vpack.c.b16 %v121, %v119
  %v150 = vpack.c.b16 %v122, %v120
  %v151 = vpack.c.b16 %v125, %v123
  %v152 = vpack.c.b16 %v126, %v124
  %v153 = vpack.c.b16 %v129, %v127
  %v154 = vpack.c.b16 %v130, %v128
  %v155 = vpack.c.b16 %v133, %v131
  %v156 = vpack.c.b16 %v134, %v132
  %v157 = vpack.c.b16 %v137, %v135
  %v158 = vpack.c.b16 %v138, %v136
  %v159 = vpack.c.b16 %v141, %v139
  %v160 = vpack.c.b16 %v142, %v140
  %v161 = vpack.c.b16 %v145, %v143
  %v162 = vpack.c.b16 %v146, %v144
  %v211 = vunpack.c.l.b16 %v67
  %v212 = vunpack.c.l.b16 %v68
  %v213 = vunpack.c.l.b16 %v69
  %v214 = vunpack.c.l.b16 %v70
  %v215 = vunpack.c.l.b16 %v71
  %v216 = vunpack.c.l.b16 %v72
  %v217 = vunpack.c.l.b16 %v73
  %v218 = vunpack.c.l.b16 %v74
  %v219 = vunpack.c.l.b16 %v75
  %v220 = vunpack.c.l.b16 %v76
  %v221 = vunpack.c.l.b16 %v77
  %v222 = vunpack.c.l.b16 %v78
  %v223 = vunpack.c.l.b16 %v79
  %v224 = vunpack.c.l.b16 %v80
  %v225 = vunpack.c.l.b16 %v81
  %v226 = vunpack.c.l.b16 %v82
  %v227 = vunpack.c.l.b16 %v83
  %v228 = vunpack.c.l.b16 %v84
  %v229 = vunpack.c.l.b16 %v85
  %v230 = vunpack.c.l.b16 %v86
  %v231 = vunpack.c.l.b16 %v87
  %v232 = vunpack.c.l.b16 %v88
  %v233 = vunpack.c.l.b16 %v89
  %v234 = vunpack.c.l.b16 %v90
  %v235 = vunpack.c.l.b16 %v91
  %v236 = vunpack.c.l.b16 %v92
  %v237 = vunpack.c.l.b16 %v93
  %v238 = vunpack.c.l.b16 %v94
  %v239 = vunpack.c.l.b16 %v95
  %v240 = vunpack.c.l.b16 %v96
  %v241 = vunpack.c.l.b16 %v97
  %v242 = vunpack.c.l.b16 %v98
  %v243 = vpack.c.b16 %v212, %v211
  %v244 = vpack.c.b16 %v214, %v213
  %v245 = vpack.c.b16 %v216, %v215
  %v246 = vpack.c.b16 %v218, %v217
  %v247 = vpack.c.b16 %v220, %v219
  %v248 = vpack.c.b16 %v222, %v221
  %v249 = vpack.c.b16 %v224, %v223
  %v250 = vpack.c.b16 %v226, %v225
  %v251 = vpack.c.b16 %v228, %v227
  %v252 = vpack.c.b16 %v230, %v229
  %v253 = vpack.c.b16 %v232, %v231
  %v254 = vpack.c.b16 %v234, %v233
  %v255 = vpack.c.b16 %v236, %v235
  %v256 = vpack.c.b16 %v238, %v237
  %v257 = vpack.c.b16 %v240, %v239
  %v258 = vpack.c.b16 %v242, %v241
  %275 = vmatprep.subr.bf16.mxu0 0
  %276 = vmatpush1.bf16.msra.mxu0 %v243
  %277 = vmatprep.subr.bf16.mxu0 0
  %278 = vmatpush1.bf16.msra.mxu0 %v244
  %279 = vmatprep.subr.bf16.mxu0 0
  %280 = vmatpush1.bf16.msra.mxu0 %v245
  %281 = vmatprep.subr.bf16.mxu0 0
  %282 = vmatpush1.bf16.msra.mxu0 %v246
  %283 = vmatprep.subr.bf16.mxu0 0
  %284 = vmatpush1.bf16.msra.mxu0 %v247
  %285 = vmatprep.subr.bf16.mxu0 0
  %286 = vmatpush1.bf16.msra.mxu0 %v248
  %287 = vmatprep.subr.bf16.mxu0 0
  %288 = vmatpush1.bf16.msra.mxu0 %v249
  %289 = vmatprep.subr.bf16.mxu0 0
  %290 = vmatpush1.bf16.msra.mxu0 %v250
  %291 = vmatprep.subr.bf16.mxu0 0
  %292 = vmatpush1.bf16.msra.mxu0 %v251
  %293 = vmatprep.subr.bf16.mxu0 0
  %294 = vmatpush1.bf16.msra.mxu0 %v252
  %295 = vmatprep.subr.bf16.mxu0 0
  %296 = vmatpush1.bf16.msra.mxu0 %v253
  %297 = vmatprep.subr.bf16.mxu0 0
  %298 = vmatpush1.bf16.msra.mxu0 %v254
  %299 = vmatprep.subr.bf16.mxu0 0
  %300 = vmatpush1.bf16.msra.mxu0 %v255
  %301 = vmatprep.subr.bf16.mxu0 0
  %302 = vmatpush1.bf16.msra.mxu0 %v256
  %303 = vmatprep.subr.bf16.mxu0 0
  %304 = vmatpush1.bf16.msra.mxu0 %v257
  %305 = vmatprep.subr.bf16.mxu0 0
  %306 = vmatpush1.bf16.msra.mxu0 %v258
  %307 = vmatprep.mubr.bf16.mxu0 %v148
  %308 = vmatmul.mubr.bf16.gmra.mrb[0].mxu0 %v147
  %v309 = vpop.f32.mrb[0].mxu0
  %v310 = vadd.f32 0.0, %v309
  %v311 = vpop.f32.mrb[0].mxu0
  %v312 = vpop.f32.mrb[0].mxu0
  %v313 = vadd.f32 0.0, %v312
  %v314 = vpop.f32.mrb[0].mxu0
  %315 = vmatprep.mubr.bf16.mxu0 %v150
  %316 = vmatmul.mubr.bf16.gmra.mrb[0].mxu0 %v149
  %v317 = vpop.f32.mrb[0].mxu0
  %v318 = vadd.f32 0.0, %v317
  %v319 = vpop.f32.mrb[0].mxu0
  %v320 = vpop.f32.mrb[0].mxu0
  %v321 = vadd.f32 0.0, %v320
  %v322 = vpop.f32.mrb[0].mxu0
  %323 = vmatprep.mubr.bf16.mxu0 %v152
  %324 = vmatmul.mubr.bf16.gmra.mrb[0].mxu0 %v151
  %v325 = vpop.f32.mrb[0].mxu0
  %v326 = vadd.f32 0.0, %v325
  %v327 = vpop.f32.mrb[0].mxu0
  %v328 = vpop.f32.mrb[0].mxu0
  %v329 = vadd.f32 0.0, %v328
  %v330 = vpop.f32.mrb[0].mxu0
  %331 = vmatprep.mubr.bf16.mxu0 %v154
  %332 = vmatmul.mubr.bf16.gmra.mrb[0].mxu0 %v153
  %v333 = vpop.f32.mrb[0].mxu0
  %v334 = vadd.f32 0.0, %v333
  %v335 = vpop.f32.mrb[0].mxu0
  %v336 = vpop.f32.mrb[0].mxu0
  %v337 = vadd.f32 0.0, %v336
  %v338 = vpop.f32.mrb[0].mxu0
  %339 = vmatprep.mubr.bf16.mxu0 %v156
  %340 = vmatmul.mubr.bf16.gmra.mrb[0].mxu0 %v155
  %v341 = vpop.f32.mrb[0].mxu0
  %v342 = vadd.f32 0.0, %v341
  %v343 = vpop.f32.mrb[0].mxu0
  %v344 = vpop.f32.mrb[0].mxu0
  %v345 = vadd.f32 0.0, %v344
  %v346 = vpop.f32.mrb[0].mxu0
  %347 = vmatprep.mubr.bf16.mxu0 %v158
  %348 = vmatmul.mubr.bf16.gmra.mrb[0].mxu0 %v157
  %v349 = vpop.f32.mrb[0].mxu0
  %v350 = vadd.f32 0.0, %v349
  %v351 = vpop.f32.mrb[0].mxu0
  %v352 = vpop.f32.mrb[0].mxu0
  %v353 = vadd.f32 0.0, %v352
  %v354 = vpop.f32.mrb[0].mxu0
  %355 = vmatprep.mubr.bf16.mxu0 %v160
  %356 = vmatmul.mubr.bf16.gmra.mrb[0].mxu0 %v159
  %v357 = vpop.f32.mrb[0].mxu0
  %v358 = vadd.f32 0.0, %v357
  %v359 = vpop.f32.mrb[0].mxu0
  %v360 = vpop.f32.mrb[0].mxu0
  %v361 = vadd.f32 0.0, %v360
  %v362 = vpop.f32.mrb[0].mxu0
  %363 = vmatprep.mubr.bf16.mxu0 %v162
  %364 = vmatmul.mubr.bf16.gmra.mrb[0].mxu0 %v161
  %v365 = vpop.f32.mrb[0].mxu0
  %v366 = vadd.f32 0.0, %v365
  %v367 = vpop.f32.mrb[0].mxu0
  %v368 = vpop.f32.mrb[0].mxu0
  %v369 = vadd.f32 0.0, %v368
  %v370 = vpop.f32.mrb[0].mxu0
  %371 = vdwg.mxu0
  %v372 = vadd.f32 %v35, %v310
  %v373 = vadd.f32 %v36, %v313
  %v374 = vadd.f32 %v37, %v318
  %v375 = vadd.f32 %v38, %v321
  %v376 = vadd.f32 %v39, %v326
  %v377 = vadd.f32 %v40, %v329
  %v378 = vadd.f32 %v41, %v334
  %v379 = vadd.f32 %v42, %v337
  %v380 = vadd.f32 %v43, %v342
  %v381 = vadd.f32 %v44, %v345
  %v382 = vadd.f32 %v45, %v350
  %v383 = vadd.f32 %v46, %v353
  %v384 = vadd.f32 %v47, %v358
  %v385 = vadd.f32 %v48, %v361
  %v386 = vadd.f32 %v49, %v366
  %v387 = vadd.f32 %v50, %v369
  %388 = vst [vmem:[#allocation2] sm:$0xff] %v372
  %389 = vst [vmem:[#allocation2 + $0x8] sm:$0xff] %v373
  %390 = vst [vmem:[#allocation2 + $0x10] sm:$0xff] %v374
  %391 = vst [vmem:[#allocation2 + $0x18] sm:$0xff] %v375
  %392 = vst [vmem:[#allocation2 + $0x20] sm:$0xff] %v376
  %393 = vst [vmem:[#allocation2 + $0x28] sm:$0xff] %v377
  %394 = vst [vmem:[#allocation2 + $0x30] sm:$0xff] %v378
  %395 = vst [vmem:[#allocation2 + $0x38] sm:$0xff] %v379
  %396 = vst [vmem:[#allocation2 + $0x40] sm:$0xff] %v380
  %397 = vst [vmem:[#allocation2 + $0x48] sm:$0xff] %v381
  %398 = vst [vmem:[#allocation2 + $0x50] sm:$0xff] %v382
  %399 = vst [vmem:[#allocation2 + $0x58] sm:$0xff] %v383
  %400 = vst [vmem:[#allocation2 + $0x60] sm:$0xff] %v384
  %401 = vst [vmem:[#allocation2 + $0x68] sm:$0xff] %v385
  %402 = vst [vmem:[#allocation2 + $0x70] sm:$0xff] %v386
  %403 = vst [vmem:[#allocation2 + $0x78] sm:$0xff] %v387
  // Predicated region
  $region18: #{rdn_forward.14} parent=0 // pred_check
    %p404 = pneg %p15
  $region19: #{rdn_forward.14} parent=0 // pred_check_branch
    %406 = sbr.rel (%p404) target = $region21
  $region20: #{rdn_forward.14} parent=0 // pred_region
    %v407 = vld [vmem:[#allocation2] sm:$0xff]
    %v408 = vld [vmem:[#allocation2 + $0x8] sm:$0xff]
    %v409 = vld [vmem:[#allocation2 + $0x10] sm:$0xff]
    %v410 = vld [vmem:[#allocation2 + $0x18] sm:$0xff]
    %v411 = vld [vmem:[#allocation2 + $0x20] sm:$0xff]
    %v412 = vld [vmem:[#allocation2 + $0x28] sm:$0xff]
    %v413 = vld [vmem:[#allocation2 + $0x30] sm:$0xff]
    %v414 = vld [vmem:[#allocation2 + $0x38] sm:$0xff]
    %v415 = vld [vmem:[#allocation2 + $0x40] sm:$0xff]
    %v416 = vld [vmem:[#allocation2 + $0x48] sm:$0xff]
    %v417 = vld [vmem:[#allocation2 + $0x50] sm:$0xff]
    %v418 = vld [vmem:[#allocation2 + $0x58] sm:$0xff]
    %v419 = vld [vmem:[#allocation2 + $0x60] sm:$0xff]
    %v420 = vld [vmem:[#allocation2 + $0x68] sm:$0xff]
    %v421 = vld [vmem:[#allocation2 + $0x70] sm:$0xff]
    %v422 = vld [vmem:[#allocation2 + $0x78] sm:$0xff]
    %v423 = vld [vmem:[%s2] sm:$0x1]
    %v425 = vlaneseq
    %v426 = vshrl.u32 %v425, 7
    %v427 = vsub.s32 0, %v426
    %v428 = vrot.slane %v423, %v427
    %v430 = vadd.f32 %v407, %v428
    %v431 = vadd.f32 %v408, %v428
    %v432 = vadd.f32 %v409, %v428
    %v433 = vadd.f32 %v410, %v428
    %v434 = vadd.f32 %v411, %v428
    %v435 = vadd.f32 %v412, %v428
    %v436 = vadd.f32 %v413, %v428
    %v437 = vadd.f32 %v414, %v428
    %v438 = vadd.f32 %v415, %v428
    %v439 = vadd.f32 %v416, %v428
    %v440 = vadd.f32 %v417, %v428
    %v441 = vadd.f32 %v418, %v428
    %v442 = vadd.f32 %v419, %v428
    %v443 = vadd.f32 %v420, %v428
    %v444 = vadd.f32 %v421, %v428
    %v445 = vadd.f32 %v422, %v428
    %v446 = vmax.f32 %v430, 0.0
    %v447 = vmax.f32 %v431, 0.0
    %v448 = vmax.f32 %v432, 0.0
    %v449 = vmax.f32 %v433, 0.0
    %v450 = vmax.f32 %v434, 0.0
    %v451 = vmax.f32 %v435, 0.0
    %v452 = vmax.f32 %v436, 0.0
    %v453 = vmax.f32 %v437, 0.0
    %v454 = vmax.f32 %v438, 0.0
    %v455 = vmax.f32 %v439, 0.0
    %v456 = vmax.f32 %v440, 0.0
    %v457 = vmax.f32 %v441, 0.0
    %v458 = vmax.f32 %v442, 0.0
    %v459 = vmax.f32 %v443, 0.0
    %v460 = vmax.f32 %v444, 0.0
    %v461 = vmax.f32 %v445, 0.0
    %462 = vst [vmem:[%s3] sm:$0xff] %v446
    %463 = vst [vmem:[%s3 + $0x8] sm:$0xff] %v447
    %464 = vst [vmem:[%s3 + $0x10] sm:$0xff] %v448
    %465 = vst [vmem:[%s3 + $0x18] sm:$0xff] %v449
    %466 = vst [vmem:[%s3 + $0x20] sm:$0xff] %v450
    %467 = vst [vmem:[%s3 + $0x28] sm:$0xff] %v451
    %468 = vst [vmem:[%s3 + $0x30] sm:$0xff] %v452
    %469 = vst [vmem:[%s3 + $0x38] sm:$0xff] %v453
    %470 = vst [vmem:[%s3 + $0x40] sm:$0xff] %v454
    %471 = vst [vmem:[%s3 + $0x48] sm:$0xff] %v455
    %472 = vst [vmem:[%s3 + $0x50] sm:$0xff] %v456
    %473 = vst [vmem:[%s3 + $0x58] sm:$0xff] %v457
    %474 = vst [vmem:[%s3 + $0x60] sm:$0xff] %v458
    %475 = vst [vmem:[%s3 + $0x68] sm:$0xff] %v459
    %476 = vst [vmem:[%s3 + $0x70] sm:$0xff] %v460
    %477 = vst [vmem:[%s3 + $0x78] sm:$0xff] %v461
  $region21: #{rdn_forward.14} parent=0 // pred_fallthru
    _
  // Predicated region
  $region22: #{rdn_forward.14} parent=0 // pred_check
    _
  $region23: #{rdn_forward.14} parent=0 // pred_check_branch
    %479 = sbr.rel (0) target = $region25
  $region24: #{rdn_forward.14} parent=0 // pred_region
    _
  $region25: #{rdn_forward.14} parent=0 // pred_fallthru
    _
  // Predicated region
  $region26: #{rdn_forward.14} parent=0 // pred_check
    _
  $region27: #{rdn_forward.14} parent=0 // pred_check_branch
    %481 = sbr.rel (0) target = $region29
  $region28: #{rdn_forward.14} parent=0 // pred_region
    _
  $region29: #{rdn_forward.14} parent=0 // pred_fallthru
    _

// kernel: rdn_forward.13
$region0: #{rdn_forward.13}
  #allocation0 [shape = 'u32[]', space=smem, size = 0x4, offset = 0x4, fixed_abs, tag = 'smem constant byte address 0x4 - core index']
  #allocation1 [shape = 'u32[144,128]{1,0:T(1,128)}', space=vmem, size = 0x12000, scoped, tag = 'internal scratch']
  #allocation2 [shape = 'f32[128,128]{1,0:T(8,128)}', space=vmem, size = 0x10000, scoped, tag = 'scratch operand']
  %s0 = inlined_call_operand.vmem [shape: bf16[128,256], index: 0, kind: input, shape index: {}]
  %s1 = inlined_call_operand.vmem [shape: bf16[256,128], index: 1, kind: input, shape index: {}]
  %s2 = inlined_call_operand.vmem [shape: f32[1,128], index: 2, kind: input, shape index: {}]
  %s3 = inlined_call_operand.vmem [shape: f32[128,128], index: 3, kind: output, shape index: {}]
  %s4 = sld [smem:[#allocation0]]
  $region30: #{rdn_forward.13} parent=0
    _
  %s6 = ssub.s32 1, %s4
  %s7 = scalar_select 0, %s6, %s4
  // Predicated region
  $region2: #{rdn_forward.13} parent=0 // pred_check
    _
  $region3: #{rdn_forward.13} parent=0 // pred_check_branch
    %9 = sbr.rel (0) target = $region5
  $region4: #{rdn_forward.13} parent=0 // pred_region
    _
  $region5: #{rdn_forward.13} parent=0 // pred_fallthru
    _
  // Predicated region
  $region6: #{rdn_forward.13} parent=0 // pred_check
    _
  $region7: #{rdn_forward.13} parent=0 // pred_check_branch
    %11 = sbr.rel (0) target = $region9
  $region8: #{rdn_forward.13} parent=0 // pred_region
    _
  $region9: #{rdn_forward.13} parent=0 // pred_fallthru
    _
  // Predicated region
  $region10: #{rdn_forward.13} parent=0 // pred_check
    _
  $region11: #{rdn_forward.13} parent=0 // pred_check_branch
    %13 = sbr.rel (0) target = $region13
  $region12: #{rdn_forward.13} parent=0 // pred_region
    _
  $region13: #{rdn_forward.13} parent=0 // pred_fallthru
    _
  %p15 = scmp.eq.s32.totalorder 0, 0
  // Predicated region
  $region14: #{rdn_forward.13} parent=0 // pred_check
    %p16 = pneg %p15
  $region15: #{rdn_forward.13} parent=0 // pred_check_branch
    %18 = sbr.rel (%p16) target = $region17
  $region16: #{rdn_forward.13} parent=0 // pred_region
    %19 = vst [vmem:[#allocation2] sm:$0xff] 0.0
    %20 = vst [vmem:[#allocation2 + $0x8] sm:$0xff] 0.0
    %21 = vst [vmem:[#allocation2 + $0x10] sm:$0xff] 0.0
    %22 = vst [vmem:[#allocation2 + $0x18] sm:$0xff] 0.0
    %23 = vst [vmem:[#allocation2 + $0x20] sm:$0xff] 0.0
    %24 = vst [vmem:[#allocation2 + $0x28] sm:$0xff] 0.0
    %25 = vst [vmem:[#allocation2 + $0x30] sm:$0xff] 0.0
    %26 = vst [vmem:[#allocation2 + $0x38] sm:$0xff] 0.0
    %27 = vst [vmem:[#allocation2 + $0x40] sm:$0xff] 0.0
    %28 = vst [vmem:[#allocation2 + $0x48] sm:$0xff] 0.0
    %29 = vst [vmem:[#allocation2 + $0x50] sm:$0xff] 0.0
    %30 = vst [vmem:[#allocation2 + $0x58] sm:$0xff] 0.0
    %31 = vst [vmem:[#allocation2 + $0x60] sm:$0xff] 0.0
    %32 = vst [vmem:[#allocation2 + $0x68] sm:$0xff] 0.0
    %33 = vst [vmem:[#allocation2 + $0x70] sm:$0xff] 0.0
    %34 = vst [vmem:[#allocation2 + $0x78] sm:$0xff] 0.0
  $region17: #{rdn_forward.13} parent=0 // pred_fallthru
    _
  %v35 = vld [vmem:[#allocation2] sm:$0xff]
  %v36 = vld [vmem:[#allocation2 + $0x8] sm:$0xff]
  %v37 = vld [vmem:[#allocation2 + $0x10] sm:$0xff]
  %v38 = vld [vmem:[#allocation2 + $0x18] sm:$0xff]
  %v39 = vld [vmem:[#allocation2 + $0x20] sm:$0xff]
  %v40 = vld [vmem:[#allocation2 + $0x28] sm:$0xff]
  %v41 = vld [vmem:[#allocation2 + $0x30] sm:$0xff]
  %v42 = vld [vmem:[#allocation2 + $0x38] sm:$0xff]
  %v43 = vld [vmem:[#allocation2 + $0x40] sm:$0xff]
  %v44 = vld [vmem:[#allocation2 + $0x48] sm:$0xff]
  %v45 = vld [vmem:[#allocation2 + $0x50] sm:$0xff]
  %v46 = vld [vmem:[#allocation2 + $0x58] sm:$0xff]
  %v47 = vld [vmem:[#allocation2 + $0x60] sm:$0xff]
  %v48 = vld [vmem:[#allocation2 + $0x68] sm:$0xff]
  %v49 = vld [vmem:[#allocation2 + $0x70] sm:$0xff]
  %v50 = vld [vmem:[#allocation2 + $0x78] sm:$0xff]
  %v51 = vld [vmem:[%s0] sm:$0xff]
  %v52 = vld [vmem:[%s0 + $0x8] sm:$0xff]
  %v53 = vld [vmem:[%s0 + $0x10] sm:$0xff]
  %v54 = vld [vmem:[%s0 + $0x18] sm:$0xff]
  %v55 = vld [vmem:[%s0 + $0x20] sm:$0xff]
  %v56 = vld [vmem:[%s0 + $0x28] sm:$0xff]
  %v57 = vld [vmem:[%s0 + $0x30] sm:$0xff]
  %v58 = vld [vmem:[%s0 + $0x38] sm:$0xff]
  %v59 = vld [vmem:[%s0 + $0x40] sm:$0xff]
  %v60 = vld [vmem:[%s0 + $0x48] sm:$0xff]
  %v61 = vld [vmem:[%s0 + $0x50] sm:$0xff]
  %v62 = vld [vmem:[%s0 + $0x58] sm:$0xff]
  %v63 = vld [vmem:[%s0 + $0x60] sm:$0xff]
  %v64 = vld [vmem:[%s0 + $0x68] sm:$0xff]
  %v65 = vld [vmem:[%s0 + $0x70] sm:$0xff]
  %v66 = vld [vmem:[%s0 + $0x78] sm:$0xff]
  %v67 = vld [vmem:[%s1] sm:$0xf]
  %v68 = vld [vmem:[%s1 + $0x4] sm:$0xf]
  %v69 = vld [vmem:[%s1 + $0x8] sm:$0xf]
  %v70 = vld [vmem:[%s1 + $0xc] sm:$0xf]
  %v71 = vld [vmem:[%s1 + $0x10] sm:$0xf]
  %v72 = vld [vmem:[%s1 + $0x14] sm:$0xf]
  %v73 = vld [vmem:[%s1 + $0x18] sm:$0xf]
  %v74 = vld [vmem:[%s1 + $0x1c] sm:$0xf]
  %v75 = vld [vmem:[%s1 + $0x20] sm:$0xf]
  %v76 = vld [vmem:[%s1 + $0x24] sm:$0xf]
  %v77 = vld [vmem:[%s1 + $0x28] sm:$0xf]
  %v78 = vld [vmem:[%s1 + $0x2c] sm:$0xf]
  %v79 = vld [vmem:[%s1 + $0x30] sm:$0xf]
  %v80 = vld [vmem:[%s1 + $0x34] sm:$0xf]
  %v81 = vld [vmem:[%s1 + $0x38] sm:$0xf]
  %v82 = vld [vmem:[%s1 + $0x3c] sm:$0xf]
  %v83 = vld [vmem:[%s1 + $0x40] sm:$0xf]
  %v84 = vld [vmem:[%s1 + $0x44] sm:$0xf]
  %v85 = vld [vmem:[%s1 + $0x48] sm:$0xf]
  %v86 = vld [vmem:[%s1 + $0x4c] sm:$0xf]
  %v87 = vld [vmem:[%s1 + $0x50] sm:$0xf]
  %v88 = vld [vmem:[%s1 + $0x54] sm:$0xf]
  %v89 = vld [vmem:[%s1 + $0x58] sm:$0xf]
  %v90 = vld [vmem:[%s1 + $0x5c] sm:$0xf]
  %v91 = vld [vmem:[%s1 + $0x60] sm:$0xf]
  %v92 = vld [vmem:[%s1 + $0x64] sm:$0xf]
  %v93 = vld [vmem:[%s1 + $0x68] sm:$0xf]
  %v94 = vld [vmem:[%s1 + $0x6c] sm:$0xf]
  %v95 = vld [vmem:[%s1 + $0x70] sm:$0xf]
  %v96 = vld [vmem:[%s1 + $0x74] sm:$0xf]
  %v97 = vld [vmem:[%s1 + $0x78] sm:$0xf]
  %v98 = vld [vmem:[%s1 + $0x7c] sm:$0xf]
  %v115 = vunpack.c.l.b16 %v51
  %v116 = vunpack.c.h.b16 %v51
  %v117 = vunpack.c.l.b16 %v52
  %v118 = vunpack.c.h.b16 %v52
  %v119 = vunpack.c.l.b16 %v53
  %v120 = vunpack.c.h.b16 %v53
  %v121 = vunpack.c.l.b16 %v54
  %v122 = vunpack.c.h.b16 %v54
  %v123 = vunpack.c.l.b16 %v55
  %v124 = vunpack.c.h.b16 %v55
  %v125 = vunpack.c.l.b16 %v56
  %v126 = vunpack.c.h.b16 %v56
  %v127 = vunpack.c.l.b16 %v57
  %v128 = vunpack.c.h.b16 %v57
  %v129 = vunpack.c.l.b16 %v58
  %v130 = vunpack.c.h.b16 %v58
  %v131 = vunpack.c.l.b16 %v59
  %v132 = vunpack.c.h.b16 %v59
  %v133 = vunpack.c.l.b16 %v60
  %v134 = vunpack.c.h.b16 %v60
  %v135 = vunpack.c.l.b16 %v61
  %v136 = vunpack.c.h.b16 %v61
  %v137 = vunpack.c.l.b16 %v62
  %v138 = vunpack.c.h.b16 %v62
  %v139 = vunpack.c.l.b16 %v63
  %v140 = vunpack.c.h.b16 %v63
  %v141 = vunpack.c.l.b16 %v64
  %v142 = vunpack.c.h.b16 %v64
  %v143 = vunpack.c.l.b16 %v65
  %v144 = vunpack.c.h.b16 %v65
  %v145 = vunpack.c.l.b16 %v66
  %v146 = vunpack.c.h.b16 %v66
  %v147 = vpack.c.b16 %v117, %v115
  %v148 = vpack.c.b16 %v118, %v116
  %v149 = vpack.c.b16 %v121, %v119
  %v150 = vpack.c.b16 %v122, %v120
  %v151 = vpack.c.b16 %v125, %v123
  %v152 = vpack.c.b16 %v126, %v124
  %v153 = vpack.c.b16 %v129, %v127
  %v154 = vpack.c.b16 %v130, %v128
  %v155 = vpack.c.b16 %v133, %v131
  %v156 = vpack.c.b16 %v134, %v132
  %v157 = vpack.c.b16 %v137, %v135
  %v158 = vpack.c.b16 %v138, %v136
  %v159 = vpack.c.b16 %v141, %v139
  %v160 = vpack.c.b16 %v142, %v140
  %v161 = vpack.c.b16 %v145, %v143
  %v162 = vpack.c.b16 %v146, %v144
  %v211 = vunpack.c.l.b16 %v67
  %v212 = vunpack.c.l.b16 %v68
  %v213 = vunpack.c.l.b16 %v69
  %v214 = vunpack.c.l.b16 %v70
  %v215 = vunpack.c.l.b16 %v71
  %v216 = vunpack.c.l.b16 %v72
  %v217 = vunpack.c.l.b16 %v73
  %v218 = vunpack.c.l.b16 %v74
  %v219 = vunpack.c.l.b16 %v75
  %v220 = vunpack.c.l.b16 %v76
  %v221 = vunpack.c.l.b16 %v77
  %v222 = vunpack.c.l.b16 %v78
  %v223 = vunpack.c.l.b16 %v79
  %v224 = vunpack.c.l.b16 %v80
  %v225 = vunpack.c.l.b16 %v81
  %v226 = vunpack.c.l.b16 %v82
  %v227 = vunpack.c.l.b16 %v83
  %v228 = vunpack.c.l.b16 %v84
  %v229 = vunpack.c.l.b16 %v85
  %v230 = vunpack.c.l.b16 %v86
  %v231 = vunpack.c.l.b16 %v87
  %v232 = vunpack.c.l.b16 %v88
  %v233 = vunpack.c.l.b16 %v89
  %v234 = vunpack.c.l.b16 %v90
  %v235 = vunpack.c.l.b16 %v91
  %v236 = vunpack.c.l.b16 %v92
  %v237 = vunpack.c.l.b16 %v93
  %v238 = vunpack.c.l.b16 %v94
  %v239 = vunpack.c.l.b16 %v95
  %v240 = vunpack.c.l.b16 %v96
  %v241 = vunpack.c.l.b16 %v97
  %v242 = vunpack.c.l.b16 %v98
  %v243 = vpack.c.b16 %v212, %v211
  %v244 = vpack.c.b16 %v214, %v213
  %v245 = vpack.c.b16 %v216, %v215
  %v246 = vpack.c.b16 %v218, %v217
  %v247 = vpack.c.b16 %v220, %v219
  %v248 = vpack.c.b16 %v222, %v221
  %v249 = vpack.c.b16 %v224, %v223
  %v250 = vpack.c.b16 %v226, %v225
  %v251 = vpack.c.b16 %v228, %v227
  %v252 = vpack.c.b16 %v230, %v229
  %v253 = vpack.c.b16 %v232, %v231
  %v254 = vpack.c.b16 %v234, %v233
  %v255 = vpack.c.b16 %v236, %v235
  %v256 = vpack.c.b16 %v238, %v237
  %v257 = vpack.c.b16 %v240, %v239
  %v258 = vpack.c.b16 %v242, %v241
  %275 = vmatprep.subr.bf16.mxu0 0
  %276 = vmatpush1.bf16.msra.mxu0 %v243
  %277 = vmatprep.subr.bf16.mxu0 0
  %278 = vmatpush1.bf16.msra.mxu0 %v244
  %279 = vmatprep.subr.bf16.mxu0 0
  %280 = vmatpush1.bf16.msra.mxu0 %v245
  %281 = vmatprep.subr.bf16.mxu0 0
  %282 = vmatpush1.bf16.msra.mxu0 %v246
  %283 = vmatprep.subr.bf16.mxu0 0
  %284 = vmatpush1.bf16.msra.mxu0 %v247
  %285 = vmatprep.subr.bf16.mxu0 0
  %286 = vmatpush1.bf16.msra.mxu0 %v248
  %287 = vmatprep.subr.bf16.mxu0 0
  %288 = vmatpush1.bf16.msra.mxu0 %v249
  %289 = vmatprep.subr.bf16.mxu0 0
  %290 = vmatpush1.bf16.msra.mxu0 %v250
  %291 = vmatprep.subr.bf16.mxu0 0
  %292 = vmatpush1.bf16.msra.mxu0 %v251
  %293 = vmatprep.subr.bf16.mxu0 0
  %294 = vmatpush1.bf16.msra.mxu0 %v252
  %295 = vmatprep.subr.bf16.mxu0 0
  %296 = vmatpush1.bf16.msra.mxu0 %v253
  %297 = vmatprep.subr.bf16.mxu0 0
  %298 = vmatpush1.bf16.msra.mxu0 %v254
  %299 = vmatprep.subr.bf16.mxu0 0
  %300 = vmatpush1.bf16.msra.mxu0 %v255
  %301 = vmatprep.subr.bf16.mxu0 0
  %302 = vmatpush1.bf16.msra.mxu0 %v256
  %303 = vmatprep.subr.bf16.mxu0 0
  %304 = vmatpush1.bf16.msra.mxu0 %v257
  %305 = vmatprep.subr.bf16.mxu0 0
  %306 = vmatpush1.bf16.msra.mxu0 %v258
  %307 = vmatprep.mubr.bf16.mxu0 %v148
  %308 = vmatmul.mubr.bf16.gmra.mrb[0].mxu0 %v147
  %v309 = vpop.f32.mrb[0].mxu0
  %v310 = vadd.f32 0.0, %v309
  %v311 = vpop.f32.mrb[0].mxu0
  %v312 = vpop.f32.mrb[0].mxu0
  %v313 = vadd.f32 0.0, %v312
  %v314 = vpop.f32.mrb[0].mxu0
  %315 = vmatprep.mubr.bf16.mxu0 %v150
  %316 = vmatmul.mubr.bf16.gmra.mrb[0].mxu0 %v149
  %v317 = vpop.f32.mrb[0].mxu0
  %v318 = vadd.f32 0.0, %v317
  %v319 = vpop.f32.mrb[0].mxu0
  %v320 = vpop.f32.mrb[0].mxu0
  %v321 = vadd.f32 0.0, %v320
  %v322 = vpop.f32.mrb[0].mxu0
  %323 = vmatprep.mubr.bf16.mxu0 %v152
  %324 = vmatmul.mubr.bf16.gmra.mrb[0].mxu0 %v151
  %v325 = vpop.f32.mrb[0].mxu0
  %v326 = vadd.f32 0.0, %v325
  %v327 = vpop.f32.mrb[0].mxu0
  %v328 = vpop.f32.mrb[0].mxu0
  %v329 = vadd.f32 0.0, %v328
  %v330 = vpop.f32.mrb[0].mxu0
  %331 = vmatprep.mubr.bf16.mxu0 %v154
  %332 = vmatmul.mubr.bf16.gmra.mrb[0].mxu0 %v153
  %v333 = vpop.f32.mrb[0].mxu0
  %v334 = vadd.f32 0.0, %v333
  %v335 = vpop.f32.mrb[0].mxu0
  %v336 = vpop.f32.mrb[0].mxu0
  %v337 = vadd.f32 0.0, %v336
  %v338 = vpop.f32.mrb[0].mxu0
  %339 = vmatprep.mubr.bf16.mxu0 %v156
  %340 = vmatmul.mubr.bf16.gmra.mrb[0].mxu0 %v155
  %v341 = vpop.f32.mrb[0].mxu0
  %v342 = vadd.f32 0.0, %v341
  %v343 = vpop.f32.mrb[0].mxu0
  %v344 = vpop.f32.mrb[0].mxu0
  %v345 = vadd.f32 0.0, %v344
  %v346 = vpop.f32.mrb[0].mxu0
  %347 = vmatprep.mubr.bf16.mxu0 %v158
  %348 = vmatmul.mubr.bf16.gmra.mrb[0].mxu0 %v157
  %v349 = vpop.f32.mrb[0].mxu0
  %v350 = vadd.f32 0.0, %v349
  %v351 = vpop.f32.mrb[0].mxu0
  %v352 = vpop.f32.mrb[0].mxu0
  %v353 = vadd.f32 0.0, %v352
  %v354 = vpop.f32.mrb[0].mxu0
  %355 = vmatprep.mubr.bf16.mxu0 %v160
  %356 = vmatmul.mubr.bf16.gmra.mrb[0].mxu0 %v159
  %v357 = vpop.f32.mrb[0].mxu0
  %v358 = vadd.f32 0.0, %v357
  %v359 = vpop.f32.mrb[0].mxu0
  %v360 = vpop.f32.mrb[0].mxu0
  %v361 = vadd.f32 0.0, %v360
  %v362 = vpop.f32.mrb[0].mxu0
  %363 = vmatprep.mubr.bf16.mxu0 %v162
  %364 = vmatmul.mubr.bf16.gmra.mrb[0].mxu0 %v161
  %v365 = vpop.f32.mrb[0].mxu0
  %v366 = vadd.f32 0.0, %v365
  %v367 = vpop.f32.mrb[0].mxu0
  %v368 = vpop.f32.mrb[0].mxu0
  %v369 = vadd.f32 0.0, %v368
  %v370 = vpop.f32.mrb[0].mxu0
  %371 = vdwg.mxu0
  %v372 = vadd.f32 %v35, %v310
  %v373 = vadd.f32 %v36, %v313
  %v374 = vadd.f32 %v37, %v318
  %v375 = vadd.f32 %v38, %v321
  %v376 = vadd.f32 %v39, %v326
  %v377 = vadd.f32 %v40, %v329
  %v378 = vadd.f32 %v41, %v334
  %v379 = vadd.f32 %v42, %v337
  %v380 = vadd.f32 %v43, %v342
  %v381 = vadd.f32 %v44, %v345
  %v382 = vadd.f32 %v45, %v350
  %v383 = vadd.f32 %v46, %v353
  %v384 = vadd.f32 %v47, %v358
  %v385 = vadd.f32 %v48, %v361
  %v386 = vadd.f32 %v49, %v366
  %v387 = vadd.f32 %v50, %v369
  %388 = vst [vmem:[#allocation2] sm:$0xff] %v372
  %389 = vst [vmem:[#allocation2 + $0x8] sm:$0xff] %v373
  %390 = vst [vmem:[#allocation2 + $0x10] sm:$0xff] %v374
  %391 = vst [vmem:[#allocation2 + $0x18] sm:$0xff] %v375
  %392 = vst [vmem:[#allocation2 + $0x20] sm:$0xff] %v376
  %393 = vst [vmem:[#allocation2 + $0x28] sm:$0xff] %v377
  %394 = vst [vmem:[#allocation2 + $0x30] sm:$0xff] %v378
  %395 = vst [vmem:[#allocation2 + $0x38] sm:$0xff] %v379
  %396 = vst [vmem:[#allocation2 + $0x40] sm:$0xff] %v380
  %397 = vst [vmem:[#allocation2 + $0x48] sm:$0xff] %v381
  %398 = vst [vmem:[#allocation2 + $0x50] sm:$0xff] %v382
  %399 = vst [vmem:[#allocation2 + $0x58] sm:$0xff] %v383
  %400 = vst [vmem:[#allocation2 + $0x60] sm:$0xff] %v384
  %401 = vst [vmem:[#allocation2 + $0x68] sm:$0xff] %v385
  %402 = vst [vmem:[#allocation2 + $0x70] sm:$0xff] %v386
  %403 = vst [vmem:[#allocation2 + $0x78] sm:$0xff] %v387
  // Predicated region
  $region18: #{rdn_forward.13} parent=0 // pred_check
    %p404 = pneg %p15
  $region19: #{rdn_forward.13} parent=0 // pred_check_branch
    %406 = sbr.rel (%p404) target = $region21
  $region20: #{rdn_forward.13} parent=0 // pred_region
    %v407 = vld [vmem:[#allocation2] sm:$0xff]
    %v408 = vld [vmem:[#allocation2 + $0x8] sm:$0xff]
    %v409 = vld [vmem:[#allocation2 + $0x10] sm:$0xff]
    %v410 = vld [vmem:[#allocation2 + $0x18] sm:$0xff]
    %v411 = vld [vmem:[#allocation2 + $0x20] sm:$0xff]
    %v412 = vld [vmem:[#allocation2 + $0x28] sm:$0xff]
    %v413 = vld [vmem:[#allocation2 + $0x30] sm:$0xff]
    %v414 = vld [vmem:[#allocation2 + $0x38] sm:$0xff]
    %v415 = vld [vmem:[#allocation2 + $0x40] sm:$0xff]
    %v416 = vld [vmem:[#allocation2 + $0x48] sm:$0xff]
    %v417 = vld [vmem:[#allocation2 + $0x50] sm:$0xff]
    %v418 = vld [vmem:[#allocation2 + $0x58] sm:$0xff]
    %v419 = vld [vmem:[#allocation2 + $0x60] sm:$0xff]
    %v420 = vld [vmem:[#allocation2 + $0x68] sm:$0xff]
    %v421 = vld [vmem:[#allocation2 + $0x70] sm:$0xff]
    %v422 = vld [vmem:[#allocation2 + $0x78] sm:$0xff]
    %v423 = vld [vmem:[%s2] sm:$0x1]
    %v425 = vlaneseq
    %v426 = vshrl.u32 %v425, 7
    %v427 = vsub.s32 0, %v426
    %v428 = vrot.slane %v423, %v427
    %v430 = vadd.f32 %v407, %v428
    %v431 = vadd.f32 %v408, %v428
    %v432 = vadd.f32 %v409, %v428
    %v433 = vadd.f32 %v410, %v428
    %v434 = vadd.f32 %v411, %v428
    %v435 = vadd.f32 %v412, %v428
    %v436 = vadd.f32 %v413, %v428
    %v437 = vadd.f32 %v414, %v428
    %v438 = vadd.f32 %v415, %v428
    %v439 = vadd.f32 %v416, %v428
    %v440 = vadd.f32 %v417, %v428
    %v441 = vadd.f32 %v418, %v428
    %v442 = vadd.f32 %v419, %v428
    %v443 = vadd.f32 %v420, %v428
    %v444 = vadd.f32 %v421, %v428
    %v445 = vadd.f32 %v422, %v428
    %446 = vst [vmem:[%s3] sm:$0xff] %v430
    %447 = vst [vmem:[%s3 + $0x8] sm:$0xff] %v431
    %448 = vst [vmem:[%s3 + $0x10] sm:$0xff] %v432
    %449 = vst [vmem:[%s3 + $0x18] sm:$0xff] %v433
    %450 = vst [vmem:[%s3 + $0x20] sm:$0xff] %v434
    %451 = vst [vmem:[%s3 + $0x28] sm:$0xff] %v435
    %452 = vst [vmem:[%s3 + $0x30] sm:$0xff] %v436
    %453 = vst [vmem:[%s3 + $0x38] sm:$0xff] %v437
    %454 = vst [vmem:[%s3 + $0x40] sm:$0xff] %v438
    %455 = vst [vmem:[%s3 + $0x48] sm:$0xff] %v439
    %456 = vst [vmem:[%s3 + $0x50] sm:$0xff] %v440
    %457 = vst [vmem:[%s3 + $0x58] sm:$0xff] %v441
    %458 = vst [vmem:[%s3 + $0x60] sm:$0xff] %v442
    %459 = vst [vmem:[%s3 + $0x68] sm:$0xff] %v443
    %460 = vst [vmem:[%s3 + $0x70] sm:$0xff] %v444
    %461 = vst [vmem:[%s3 + $0x78] sm:$0xff] %v445
  $region21: #{rdn_forward.13} parent=0 // pred_fallthru
    _
  // Predicated region
  $region22: #{rdn_forward.13} parent=0 // pred_check
    _
  $region23: #{rdn_forward.13} parent=0 // pred_check_branch
    %463 = sbr.rel (0) target = $region25
  $region24: #{rdn_forward.13} parent=0 // pred_region
    _
  $region25: #{rdn_forward.13} parent=0 // pred_fallthru
    _
  // Predicated region
  $region26: #{rdn_forward.13} parent=0 // pred_check
    _
  $region27: #{rdn_forward.13} parent=0 // pred_check_branch
    %465 = sbr.rel (0) target = $region29
  $region28: #{rdn_forward.13} parent=0 // pred_region
    _
  $region29: #{rdn_forward.13} parent=0 // pred_fallthru
    _

// kernel: rdn_forward.15
$region0: #{rdn_forward.15}
  #allocation0 [shape = 'u32[]', space=smem, size = 0x4, offset = 0x4, fixed_abs, tag = 'smem constant byte address 0x4 - core index']
  #allocation1 [shape = 'u32[144,128]{1,0:T(1,128)}', space=vmem, size = 0x12000, scoped, tag = 'internal scratch']
  #allocation2 [shape = 'f32[128,128]{1,0:T(8,128)}', space=vmem, size = 0x10000, scoped, tag = 'scratch operand']
  %s0 = inlined_call_operand.vmem [shape: bf16[128,384], index: 0, kind: input, shape index: {}]
  %s1 = inlined_call_operand.vmem [shape: bf16[384,128], index: 1, kind: input, shape index: {}]
  %s2 = inlined_call_operand.vmem [shape: f32[1,128], index: 2, kind: input, shape index: {}]
  %s3 = inlined_call_operand.vmem [shape: f32[128,128], index: 3, kind: output, shape index: {}]
  %s4 = sld [smem:[#allocation0]]
  $region30: #{rdn_forward.15} parent=0
    _
  %s6 = ssub.s32 1, %s4
  %s7 = scalar_select 0, %s6, %s4
  // Predicated region
  $region2: #{rdn_forward.15} parent=0 // pred_check
    _
  $region3: #{rdn_forward.15} parent=0 // pred_check_branch
    %9 = sbr.rel (0) target = $region5
  $region4: #{rdn_forward.15} parent=0 // pred_region
    _
  $region5: #{rdn_forward.15} parent=0 // pred_fallthru
    _
  // Predicated region
  $region6: #{rdn_forward.15} parent=0 // pred_check
    _
  $region7: #{rdn_forward.15} parent=0 // pred_check_branch
    %11 = sbr.rel (0) target = $region9
  $region8: #{rdn_forward.15} parent=0 // pred_region
    _
  $region9: #{rdn_forward.15} parent=0 // pred_fallthru
    _
  // Predicated region
  $region10: #{rdn_forward.15} parent=0 // pred_check
    _
  $region11: #{rdn_forward.15} parent=0 // pred_check_branch
    %13 = sbr.rel (0) target = $region13
  $region12: #{rdn_forward.15} parent=0 // pred_region
    _
  $region13: #{rdn_forward.15} parent=0 // pred_fallthru
    _
  %p15 = scmp.eq.s32.totalorder 0, 0
  // Predicated region
  $region14: #{rdn_forward.15} parent=0 // pred_check
    %p16 = pneg %p15
  $region15: #{rdn_forward.15} parent=0 // pred_check_branch
    %18 = sbr.rel (%p16) target = $region17
  $region16: #{rdn_forward.15} parent=0 // pred_region
    %19 = vst [vmem:[#allocation2] sm:$0xff] 0.0
    %20 = vst [vmem:[#allocation2 + $0x8] sm:$0xff] 0.0
    %21 = vst [vmem:[#allocation2 + $0x10] sm:$0xff] 0.0
    %22 = vst [vmem:[#allocation2 + $0x18] sm:$0xff] 0.0
    %23 = vst [vmem:[#allocation2 + $0x20] sm:$0xff] 0.0
    %24 = vst [vmem:[#allocation2 + $0x28] sm:$0xff] 0.0
    %25 = vst [vmem:[#allocation2 + $0x30] sm:$0xff] 0.0
    %26 = vst [vmem:[#allocation2 + $0x38] sm:$0xff] 0.0
    %27 = vst [vmem:[#allocation2 + $0x40] sm:$0xff] 0.0
    %28 = vst [vmem:[#allocation2 + $0x48] sm:$0xff] 0.0
    %29 = vst [vmem:[#allocation2 + $0x50] sm:$0xff] 0.0
    %30 = vst [vmem:[#allocation2 + $0x58] sm:$0xff] 0.0
    %31 = vst [vmem:[#allocation2 + $0x60] sm:$0xff] 0.0
    %32 = vst [vmem:[#allocation2 + $0x68] sm:$0xff] 0.0
    %33 = vst [vmem:[#allocation2 + $0x70] sm:$0xff] 0.0
    %34 = vst [vmem:[#allocation2 + $0x78] sm:$0xff] 0.0
  $region17: #{rdn_forward.15} parent=0 // pred_fallthru
    _
  %v35 = vld [vmem:[#allocation2] sm:$0xff]
  %v36 = vld [vmem:[#allocation2 + $0x8] sm:$0xff]
  %v37 = vld [vmem:[#allocation2 + $0x10] sm:$0xff]
  %v38 = vld [vmem:[#allocation2 + $0x18] sm:$0xff]
  %v39 = vld [vmem:[#allocation2 + $0x20] sm:$0xff]
  %v40 = vld [vmem:[#allocation2 + $0x28] sm:$0xff]
  %v41 = vld [vmem:[#allocation2 + $0x30] sm:$0xff]
  %v42 = vld [vmem:[#allocation2 + $0x38] sm:$0xff]
  %v43 = vld [vmem:[#allocation2 + $0x40] sm:$0xff]
  %v44 = vld [vmem:[#allocation2 + $0x48] sm:$0xff]
  %v45 = vld [vmem:[#allocation2 + $0x50] sm:$0xff]
  %v46 = vld [vmem:[#allocation2 + $0x58] sm:$0xff]
  %v47 = vld [vmem:[#allocation2 + $0x60] sm:$0xff]
  %v48 = vld [vmem:[#allocation2 + $0x68] sm:$0xff]
  %v49 = vld [vmem:[#allocation2 + $0x70] sm:$0xff]
  %v50 = vld [vmem:[#allocation2 + $0x78] sm:$0xff]
  %v51 = vld [vmem:[%s0] sm:$0xff]
  %v52 = vld [vmem:[%s0 + $0x8] sm:$0xf]
  %v53 = vld [vmem:[%s0 + $0xc] sm:$0xff]
  %v54 = vld [vmem:[%s0 + $0x14] sm:$0xf]
  %v55 = vld [vmem:[%s0 + $0x18] sm:$0xff]
  %v56 = vld [vmem:[%s0 + $0x20] sm:$0xf]
  %v57 = vld [vmem:[%s0 + $0x24] sm:$0xff]
  %v58 = vld [vmem:[%s0 + $0x2c] sm:$0xf]
  %v59 = vld [vmem:[%s0 + $0x30] sm:$0xff]
  %v60 = vld [vmem:[%s0 + $0x38] sm:$0xf]
  %v61 = vld [vmem:[%s0 + $0x3c] sm:$0xff]
  %v62 = vld [vmem:[%s0 + $0x44] sm:$0xf]
  %v63 = vld [vmem:[%s0 + $0x48] sm:$0xff]
  %v64 = vld [vmem:[%s0 + $0x50] sm:$0xf]
  %v65 = vld [vmem:[%s0 + $0x54] sm:$0xff]
  %v66 = vld [vmem:[%s0 + $0x5c] sm:$0xf]
  %v67 = vld [vmem:[%s0 + $0x60] sm:$0xff]
  %v68 = vld [vmem:[%s0 + $0x68] sm:$0xf]
  %v69 = vld [vmem:[%s0 + $0x6c] sm:$0xff]
  %v70 = vld [vmem:[%s0 + $0x74] sm:$0xf]
  %v71 = vld [vmem:[%s0 + $0x78] sm:$0xff]
  %v72 = vld [vmem:[%s0 + $0x80] sm:$0xf]
  %v73 = vld [vmem:[%s0 + $0x84] sm:$0xff]
  %v74 = vld [vmem:[%s0 + $0x8c] sm:$0xf]
  %v75 = vld [vmem:[%s0 + $0x90] sm:$0xff]
  %v76 = vld [vmem:[%s0 + $0x98] sm:$0xf]
  %v77 = vld [vmem:[%s0 + $0x9c] sm:$0xff]
  %v78 = vld [vmem:[%s0 + $0xa4] sm:$0xf]
  %v79 = vld [vmem:[%s0 + $0xa8] sm:$0xff]
  %v80 = vld [vmem:[%s0 + $0xb0] sm:$0xf]
  %v81 = vld [vmem:[%s0 + $0xb4] sm:$0xff]
  %v82 = vld [vmem:[%s0 + $0xbc] sm:$0xf]
  %v83 = vld [vmem:[%s1] sm:$0xf]
  %v84 = vld [vmem:[%s1 + $0x4] sm:$0xf]
  %v85 = vld [vmem:[%s1 + $0x8] sm:$0xf]
  %v86 = vld [vmem:[%s1 + $0xc] sm:$0xf]
  %v87 = vld [vmem:[%s1 + $0x10] sm:$0xf]
  %v88 = vld [vmem:[%s1 + $0x14] sm:$0xf]
  %v89 = vld [vmem:[%s1 + $0x18] sm:$0xf]
  %v90 = vld [vmem:[%s1 + $0x1c] sm:$0xf]
  %v91 = vld [vmem:[%s1 + $0x20] sm:$0xf]
  %v92 = vld [vmem:[%s1 + $0x24] sm:$0xf]
  %v93 = vld [vmem:[%s1 + $0x28] sm:$0xf]
  %v94 = vld [vmem:[%s1 + $0x2c] sm:$0xf]
  %v95 = vld [vmem:[%s1 + $0x30] sm:$0xf]
  %v96 = vld [vmem:[%s1 + $0x34] sm:$0xf]
  %v97 = vld [vmem:[%s1 + $0x38] sm:$0xf]
  %v98 = vld [vmem:[%s1 + $0x3c] sm:$0xf]
  %v99 = vld [vmem:[%s1 + $0x40] sm:$0xf]
  %v100 = vld [vmem:[%s1 + $0x44] sm:$0xf]
  %v101 = vld [vmem:[%s1 + $0x48] sm:$0xf]
  %v102 = vld [vmem:[%s1 + $0x4c] sm:$0xf]
  %v103 = vld [vmem:[%s1 + $0x50] sm:$0xf]
  %v104 = vld [vmem:[%s1 + $0x54] sm:$0xf]
  %v105 = vld [vmem:[%s1 + $0x58] sm:$0xf]
  %v106 = vld [vmem:[%s1 + $0x5c] sm:$0xf]
  %v107 = vld [vmem:[%s1 + $0x60] sm:$0xf]
  %v108 = vld [vmem:[%s1 + $0x64] sm:$0xf]
  %v109 = vld [vmem:[%s1 + $0x68] sm:$0xf]
  %v110 = vld [vmem:[%s1 + $0x6c] sm:$0xf]
  %v111 = vld [vmem:[%s1 + $0x70] sm:$0xf]
  %v112 = vld [vmem:[%s1 + $0x74] sm:$0xf]
  %v113 = vld [vmem:[%s1 + $0x78] sm:$0xf]
  %v114 = vld [vmem:[%s1 + $0x7c] sm:$0xf]
  %v115 = vld [vmem:[%s1 + $0x80] sm:$0xf]
  %v116 = vld [vmem:[%s1 + $0x84] sm:$0xf]
  %v117 = vld [vmem:[%s1 + $0x88] sm:$0xf]
  %v118 = vld [vmem:[%s1 + $0x8c] sm:$0xf]
  %v119 = vld [vmem:[%s1 + $0x90] sm:$0xf]
  %v120 = vld [vmem:[%s1 + $0x94] sm:$0xf]
  %v121 = vld [vmem:[%s1 + $0x98] sm:$0xf]
  %v122 = vld [vmem:[%s1 + $0x9c] sm:$0xf]
  %v123 = vld [vmem:[%s1 + $0xa0] sm:$0xf]
  %v124 = vld [vmem:[%s1 + $0xa4] sm:$0xf]
  %v125 = vld [vmem:[%s1 + $0xa8] sm:$0xf]
  %v126 = vld [vmem:[%s1 + $0xac] sm:$0xf]
  %v127 = vld [vmem:[%s1 + $0xb0] sm:$0xf]
  %v128 = vld [vmem:[%s1 + $0xb4] sm:$0xf]
  %v129 = vld [vmem:[%s1 + $0xb8] sm:$0xf]
  %v130 = vld [vmem:[%s1 + $0xbc] sm:$0xf]
  %v163 = vunpack.c.l.b16 %v51
  %v164 = vunpack.c.h.b16 %v51
  %v165 = vunpack.c.l.b16 %v52
  %v166 = vunpack.c.l.b16 %v53
  %v167 = vunpack.c.h.b16 %v53
  %v168 = vunpack.c.l.b16 %v54
  %v169 = vunpack.c.l.b16 %v55
  %v170 = vunpack.c.h.b16 %v55
  %v171 = vunpack.c.l.b16 %v56
  %v172 = vunpack.c.l.b16 %v57
  %v173 = vunpack.c.h.b16 %v57
  %v174 = vunpack.c.l.b16 %v58
  %v175 = vunpack.c.l.b16 %v59
  %v176 = vunpack.c.h.b16 %v59
  %v177 = vunpack.c.l.b16 %v60
  %v178 = vunpack.c.l.b16 %v61
  %v179 = vunpack.c.h.b16 %v61
  %v180 = vunpack.c.l.b16 %v62
  %v181 = vunpack.c.l.b16 %v63
  %v182 = vunpack.c.h.b16 %v63
  %v183 = vunpack.c.l.b16 %v64
  %v184 = vunpack.c.l.b16 %v65
  %v185 = vunpack.c.h.b16 %v65
  %v186 = vunpack.c.l.b16 %v66
  %v187 = vunpack.c.l.b16 %v67
  %v188 = vunpack.c.h.b16 %v67
  %v189 = vunpack.c.l.b16 %v68
  %v190 = vunpack.c.l.b16 %v69
  %v191 = vunpack.c.h.b16 %v69
  %v192 = vunpack.c.l.b16 %v70
  %v193 = vunpack.c.l.b16 %v71
  %v194 = vunpack.c.h.b16 %v71
  %v195 = vunpack.c.l.b16 %v72
  %v196 = vunpack.c.l.b16 %v73
  %v197 = vunpack.c.h.b16 %v73
  %v198 = vunpack.c.l.b16 %v74
  %v199 = vunpack.c.l.b16 %v75
  %v200 = vunpack.c.h.b16 %v75
  %v201 = vunpack.c.l.b16 %v76
  %v202 = vunpack.c.l.b16 %v77
  %v203 = vunpack.c.h.b16 %v77
  %v204 = vunpack.c.l.b16 %v78
  %v205 = vunpack.c.l.b16 %v79
  %v206 = vunpack.c.h.b16 %v79
  %v207 = vunpack.c.l.b16 %v80
  %v208 = vunpack.c.l.b16 %v81
  %v209 = vunpack.c.h.b16 %v81
  %v210 = vunpack.c.l.b16 %v82
  %v211 = vpack.c.b16 %v166, %v163
  %v212 = vpack.c.b16 %v167, %v164
  %v213 = vpack.c.b16 %v168, %v165
  %v214 = vpack.c.b16 %v172, %v169
  %v215 = vpack.c.b16 %v173, %v170
  %v216 = vpack.c.b16 %v174, %v171
  %v217 = vpack.c.b16 %v178, %v175
  %v218 = vpack.c.b16 %v179, %v176
  %v219 = vpack.c.b16 %v180, %v177
  %v220 = vpack.c.b16 %v184, %v181
  %v221 = vpack.c.b16 %v185, %v182
  %v222 = vpack.c.b16 %v186, %v183
  %v223 = vpack.c.b16 %v190, %v187
  %v224 = vpack.c.b16 %v191, %v188
  %v225 = vpack.c.b16 %v192, %v189
  %v226 = vpack.c.b16 %v196, %v193
  %v227 = vpack.c.b16 %v197, %v194
  %v228 = vpack.c.b16 %v198, %v195
  %v229 = vpack.c.b16 %v202, %v199
  %v230 = vpack.c.b16 %v203, %v200
  %v231 = vpack.c.b16 %v204, %v201
  %v232 = vpack.c.b16 %v208, %v205
  %v233 = vpack.c.b16 %v209, %v206
  %v234 = vpack.c.b16 %v210, %v207
  %v307 = vunpack.c.l.b16 %v83
  %v308 = vunpack.c.l.b16 %v84
  %v309 = vunpack.c.l.b16 %v85
  %v310 = vunpack.c.l.b16 %v86
  %v311 = vunpack.c.l.b16 %v87
  %v312 = vunpack.c.l.b16 %v88
  %v313 = vunpack.c.l.b16 %v89
  %v314 = vunpack.c.l.b16 %v90
  %v315 = vunpack.c.l.b16 %v91
  %v316 = vunpack.c.l.b16 %v92
  %v317 = vunpack.c.l.b16 %v93
  %v318 = vunpack.c.l.b16 %v94
  %v319 = vunpack.c.l.b16 %v95
  %v320 = vunpack.c.l.b16 %v96
  %v321 = vunpack.c.l.b16 %v97
  %v322 = vunpack.c.l.b16 %v98
  %v323 = vunpack.c.l.b16 %v99
  %v324 = vunpack.c.l.b16 %v100
  %v325 = vunpack.c.l.b16 %v101
  %v326 = vunpack.c.l.b16 %v102
  %v327 = vunpack.c.l.b16 %v103
  %v328 = vunpack.c.l.b16 %v104
  %v329 = vunpack.c.l.b16 %v105
  %v330 = vunpack.c.l.b16 %v106
  %v331 = vunpack.c.l.b16 %v107
  %v332 = vunpack.c.l.b16 %v108
  %v333 = vunpack.c.l.b16 %v109
  %v334 = vunpack.c.l.b16 %v110
  %v335 = vunpack.c.l.b16 %v111
  %v336 = vunpack.c.l.b16 %v112
  %v337 = vunpack.c.l.b16 %v113
  %v338 = vunpack.c.l.b16 %v114
  %v339 = vunpack.c.l.b16 %v115
  %v340 = vunpack.c.l.b16 %v116
  %v341 = vunpack.c.l.b16 %v117
  %v342 = vunpack.c.l.b16 %v118
  %v343 = vunpack.c.l.b16 %v119
  %v344 = vunpack.c.l.b16 %v120
  %v345 = vunpack.c.l.b16 %v121
  %v346 = vunpack.c.l.b16 %v122
  %v347 = vunpack.c.l.b16 %v123
  %v348 = vunpack.c.l.b16 %v124
  %v349 = vunpack.c.l.b16 %v125
  %v350 = vunpack.c.l.b16 %v126
  %v351 = vunpack.c.l.b16 %v127
  %v352 = vunpack.c.l.b16 %v128
  %v353 = vunpack.c.l.b16 %v129
  %v354 = vunpack.c.l.b16 %v130
  %v355 = vpack.c.b16 %v308, %v307
  %v356 = vpack.c.b16 %v310, %v309
  %v357 = vpack.c.b16 %v312, %v311
  %v358 = vpack.c.b16 %v314, %v313
  %v359 = vpack.c.b16 %v316, %v315
  %v360 = vpack.c.b16 %v318, %v317
  %v361 = vpack.c.b16 %v320, %v319
  %v362 = vpack.c.b16 %v322, %v321
  %v363 = vpack.c.b16 %v324, %v323
  %v364 = vpack.c.b16 %v326, %v325
  %v365 = vpack.c.b16 %v328, %v327
  %v366 = vpack.c.b16 %v330, %v329
  %v367 = vpack.c.b16 %v332, %v331
  %v368 = vpack.c.b16 %v334, %v333
  %v369 = vpack.c.b16 %v336, %v335
  %v370 = vpack.c.b16 %v338, %v337
  %v371 = vpack.c.b16 %v340, %v339
  %v372 = vpack.c.b16 %v342, %v341
  %v373 = vpack.c.b16 %v344, %v343
  %v374 = vpack.c.b16 %v346, %v345
  %v375 = vpack.c.b16 %v348, %v347
  %v376 = vpack.c.b16 %v350, %v349
  %v377 = vpack.c.b16 %v352, %v351
  %v378 = vpack.c.b16 %v354, %v353
  %403 = vmatprep.subr.bf16.mxu0 0
  %404 = vmatpush1.bf16.msra.mxu0 %v355
  %405 = vmatprep.subr.bf16.mxu0 0
  %406 = vmatpush1.bf16.msra.mxu0 %v356
  %407 = vmatprep.subr.bf16.mxu0 0
  %408 = vmatpush1.bf16.msra.mxu0 %v357
  %409 = vmatprep.subr.bf16.mxu0 0
  %410 = vmatpush1.bf16.msra.mxu0 %v358
  %411 = vmatprep.subr.bf16.mxu0 0
  %412 = vmatpush1.bf16.msra.mxu0 %v359
  %413 = vmatprep.subr.bf16.mxu0 0
  %414 = vmatpush1.bf16.msra.mxu0 %v360
  %415 = vmatprep.subr.bf16.mxu0 0
  %416 = vmatpush1.bf16.msra.mxu0 %v361
  %417 = vmatprep.subr.bf16.mxu0 0
  %418 = vmatpush1.bf16.msra.mxu0 %v362
  %419 = vmatprep.subr.bf16.mxu0 0
  %420 = vmatpush1.bf16.msra.mxu0 %v363
  %421 = vmatprep.subr.bf16.mxu0 0
  %422 = vmatpush1.bf16.msra.mxu0 %v364
  %423 = vmatprep.subr.bf16.mxu0 0
  %424 = vmatpush1.bf16.msra.mxu0 %v365
  %425 = vmatprep.subr.bf16.mxu0 0
  %426 = vmatpush1.bf16.msra.mxu0 %v366
  %427 = vmatprep.subr.bf16.mxu0 0
  %428 = vmatpush1.bf16.msra.mxu0 %v367
  %429 = vmatprep.subr.bf16.mxu0 0
  %430 = vmatpush1.bf16.msra.mxu0 %v368
  %431 = vmatprep.subr.bf16.mxu0 0
  %432 = vmatpush1.bf16.msra.mxu0 %v369
  %433 = vmatprep.subr.bf16.mxu0 0
  %434 = vmatpush1.bf16.msra.mxu0 %v370
  %435 = vmatprep.mubr.bf16.mxu0 %v212
  %436 = vmatmul.mubr.bf16.gmra.mrb[0].mxu0 %v211
  %v437 = vpop.f32.mrb[0].mxu0
  %v438 = vadd.f32 0.0, %v437
  %v439 = vpop.f32.mrb[0].mxu0
  %v440 = vpop.f32.mrb[0].mxu0
  %v441 = vadd.f32 0.0, %v440
  %v442 = vpop.f32.mrb[0].mxu0
  %443 = vmatprep.mubr.bf16.mxu0 %v215
  %444 = vmatmul.mubr.bf16.gmra.mrb[0].mxu0 %v214
  %v445 = vpop.f32.mrb[0].mxu0
  %v446 = vadd.f32 0.0, %v445
  %v447 = vpop.f32.mrb[0].mxu0
  %v448 = vpop.f32.mrb[0].mxu0
  %v449 = vadd.f32 0.0, %v448
  %v450 = vpop.f32.mrb[0].mxu0
  %451 = vmatprep.mubr.bf16.mxu0 %v218
  %452 = vmatmul.mubr.bf16.gmra.mrb[0].mxu0 %v217
  %v453 = vpop.f32.mrb[0].mxu0
  %v454 = vadd.f32 0.0, %v453
  %v455 = vpop.f32.mrb[0].mxu0
  %v456 = vpop.f32.mrb[0].mxu0
  %v457 = vadd.f32 0.0, %v456
  %v458 = vpop.f32.mrb[0].mxu0
  %459 = vmatprep.mubr.bf16.mxu0 %v221
  %460 = vmatmul.mubr.bf16.gmra.mrb[0].mxu0 %v220
  %v461 = vpop.f32.mrb[0].mxu0
  %v462 = vadd.f32 0.0, %v461
  %v463 = vpop.f32.mrb[0].mxu0
  %v464 = vpop.f32.mrb[0].mxu0
  %v465 = vadd.f32 0.0, %v464
  %v466 = vpop.f32.mrb[0].mxu0
  %467 = vmatprep.mubr.bf16.mxu0 %v224
  %468 = vmatmul.mubr.bf16.gmra.mrb[0].mxu0 %v223
  %v469 = vpop.f32.mrb[0].mxu0
  %v470 = vadd.f32 0.0, %v469
  %v471 = vpop.f32.mrb[0].mxu0
  %v472 = vpop.f32.mrb[0].mxu0
  %v473 = vadd.f32 0.0, %v472
  %v474 = vpop.f32.mrb[0].mxu0
  %475 = vmatprep.mubr.bf16.mxu0 %v227
  %476 = vmatmul.mubr.bf16.gmra.mrb[0].mxu0 %v226
  %v477 = vpop.f32.mrb[0].mxu0
  %v478 = vadd.f32 0.0, %v477
  %v479 = vpop.f32.mrb[0].mxu0
  %v480 = vpop.f32.mrb[0].mxu0
  %v481 = vadd.f32 0.0, %v480
  %v482 = vpop.f32.mrb[0].mxu0
  %483 = vmatprep.mubr.bf16.mxu0 %v230
  %484 = vmatmul.mubr.bf16.gmra.mrb[0].mxu0 %v229
  %v485 = vpop.f32.mrb[0].mxu0
  %v486 = vadd.f32 0.0, %v485
  %v487 = vpop.f32.mrb[0].mxu0
  %v488 = vpop.f32.mrb[0].mxu0
  %v489 = vadd.f32 0.0, %v488
  %v490 = vpop.f32.mrb[0].mxu0
  %491 = vmatprep.mubr.bf16.mxu0 %v233
  %492 = vmatmul.mubr.bf16.gmra.mrb[0].mxu0 %v232
  %v493 = vpop.f32.mrb[0].mxu0
  %v494 = vadd.f32 0.0, %v493
  %v495 = vpop.f32.mrb[0].mxu0
  %v496 = vpop.f32.mrb[0].mxu0
  %v497 = vadd.f32 0.0, %v496
  %v498 = vpop.f32.mrb[0].mxu0
  %499 = vdwg.mxu0
  %500 = vmatprep.subr.bf16.mxu0 0
  %501 = vmatpush1.bf16.msra.mxu0 %v371
  %502 = vmatprep.subr.bf16.mxu0 0
  %503 = vmatpush1.bf16.msra.mxu0 %v372
  %504 = vmatprep.subr.bf16.mxu0 0
  %505 = vmatpush1.bf16.msra.mxu0 %v373
  %506 = vmatprep.subr.bf16.mxu0 0
  %507 = vmatpush1.bf16.msra.mxu0 %v374
  %508 = vmatprep.subr.bf16.mxu0 0
  %509 = vmatpush1.bf16.msra.mxu0 %v375
  %510 = vmatprep.subr.bf16.mxu0 0
  %511 = vmatpush1.bf16.msra.mxu0 %v376
  %512 = vmatprep.subr.bf16.mxu0 0
  %513 = vmatpush1.bf16.msra.mxu0 %v377
  %514 = vmatprep.subr.bf16.mxu0 0
  %515 = vmatpush1.bf16.msra.mxu0 %v378
  %516 = vmatprep.subr.bf16.mxu0 0
  %517 = vmatpush1.bf16.msra.mxu0 0
  %518 = vmatprep.subr.bf16.mxu0 0
  %519 = vmatpush1.bf16.msra.mxu0 0
  %520 = vmatprep.subr.bf16.mxu0 0
  %521 = vmatpush1.bf16.msra.mxu0 0
  %522 = vmatprep.subr.bf16.mxu0 0
  %523 = vmatpush1.bf16.msra.mxu0 0
  %524 = vmatprep.subr.bf16.mxu0 0
  %525 = vmatpush1.bf16.msra.mxu0 0
  %526 = vmatprep.subr.bf16.mxu0 0
  %527 = vmatpush1.bf16.msra.mxu0 0
  %528 = vmatprep.subr.bf16.mxu0 0
  %529 = vmatpush1.bf16.msra.mxu0 0
  %530 = vmatprep.subr.bf16.mxu0 0
  %531 = vmatpush1.bf16.msra.mxu0 0
  %532 = vmatprep.mubr.bf16.mxu0 0
  %533 = vmatmul.mubr.bf16.gmra.mrb[0].mxu0 %v213
  %v534 = vpop.f32.mrb[0].mxu0
  %v535 = vadd.f32 %v438, %v534
  %v536 = vpop.f32.mrb[0].mxu0
  %v537 = vpop.f32.mrb[0].mxu0
  %v538 = vadd.f32 %v441, %v537
  %v539 = vpop.f32.mrb[0].mxu0
  %540 = vmatprep.mubr.bf16.mxu0 0
  %541 = vmatmul.mubr.bf16.gmra.mrb[0].mxu0 %v216
  %v542 = vpop.f32.mrb[0].mxu0
  %v543 = vadd.f32 %v446, %v542
  %v544 = vpop.f32.mrb[0].mxu0
  %v545 = vpop.f32.mrb[0].mxu0
  %v546 = vadd.f32 %v449, %v545
  %v547 = vpop.f32.mrb[0].mxu0
  %548 = vmatprep.mubr.bf16.mxu0 0
  %549 = vmatmul.mubr.bf16.gmra.mrb[0].mxu0 %v219
  %v550 = vpop.f32.mrb[0].mxu0
  %v551 = vadd.f32 %v454, %v550
  %v552 = vpop.f32.mrb[0].mxu0
  %v553 = vpop.f32.mrb[0].mxu0
  %v554 = vadd.f32 %v457, %v553
  %v555 = vpop.f32.mrb[0].mxu0
  %556 = vmatprep.mubr.bf16.mxu0 0
  %557 = vmatmul.mubr.bf16.gmra.mrb[0].mxu0 %v222
  %v558 = vpop.f32.mrb[0].mxu0
  %v559 = vadd.f32 %v462, %v558
  %v560 = vpop.f32.mrb[0].mxu0
  %v561 = vpop.f32.mrb[0].mxu0
  %v562 = vadd.f32 %v465, %v561
  %v563 = vpop.f32.mrb[0].mxu0
  %564 = vmatprep.mubr.bf16.mxu0 0
  %565 = vmatmul.mubr.bf16.gmra.mrb[0].mxu0 %v225
  %v566 = vpop.f32.mrb[0].mxu0
  %v567 = vadd.f32 %v470, %v566
  %v568 = vpop.f32.mrb[0].mxu0
  %v569 = vpop.f32.mrb[0].mxu0
  %v570 = vadd.f32 %v473, %v569
  %v571 = vpop.f32.mrb[0].mxu0
  %572 = vmatprep.mubr.bf16.mxu0 0
  %573 = vmatmul.mubr.bf16.gmra.mrb[0].mxu0 %v228
  %v574 = vpop.f32.mrb[0].mxu0
  %v575 = vadd.f32 %v478, %v574
  %v576 = vpop.f32.mrb[0].mxu0
  %v577 = vpop.f32.mrb[0].mxu0
  %v578 = vadd.f32 %v481, %v577
  %v579 = vpop.f32.mrb[0].mxu0
  %580 = vmatprep.mubr.bf16.mxu0 0
  %581 = vmatmul.mubr.bf16.gmra.mrb[0].mxu0 %v231
  %v582 = vpop.f32.mrb[0].mxu0
  %v583 = vadd.f32 %v486, %v582
  %v584 = vpop.f32.mrb[0].mxu0
  %v585 = vpop.f32.mrb[0].mxu0
  %v586 = vadd.f32 %v489, %v585
  %v587 = vpop.f32.mrb[0].mxu0
  %588 = vmatprep.mubr.bf16.mxu0 0
  %589 = vmatmul.mubr.bf16.gmra.mrb[0].mxu0 %v234
  %v590 = vpop.f32.mrb[0].mxu0
  %v591 = vadd.f32 %v494, %v590
  %v592 = vpop.f32.mrb[0].mxu0
  %v593 = vpop.f32.mrb[0].mxu0
  %v594 = vadd.f32 %v497, %v593
  %v595 = vpop.f32.mrb[0].mxu0
  %596 = vdwg.mxu0
  %v597 = vadd.f32 %v35, %v535
  %v598 = vadd.f32 %v36, %v538
  %v599 = vadd.f32 %v37, %v543
  %v600 = vadd.f32 %v38, %v546
  %v601 = vadd.f32 %v39, %v551
  %v602 = vadd.f32 %v40, %v554
  %v603 = vadd.f32 %v41, %v559
  %v604 = vadd.f32 %v42, %v562
  %v605 = vadd.f32 %v43, %v567
  %v606 = vadd.f32 %v44, %v570
  %v607 = vadd.f32 %v45, %v575
  %v608 = vadd.f32 %v46, %v578
  %v609 = vadd.f32 %v47, %v583
  %v610 = vadd.f32 %v48, %v586
  %v611 = vadd.f32 %v49, %v591
  %v612 = vadd.f32 %v50, %v594
  %613 = vst [vmem:[#allocation2] sm:$0xff] %v597
  %614 = vst [vmem:[#allocation2 + $0x8] sm:$0xff] %v598
  %615 = vst [vmem:[#allocation2 + $0x10] sm:$0xff] %v599
  %616 = vst [vmem:[#allocation2 + $0x18] sm:$0xff] %v600
  %617 = vst [vmem:[#allocation2 + $0x20] sm:$0xff] %v601
  %618 = vst [vmem:[#allocation2 + $0x28] sm:$0xff] %v602
  %619 = vst [vmem:[#allocation2 + $0x30] sm:$0xff] %v603
  %620 = vst [vmem:[#allocation2 + $0x38] sm:$0xff] %v604
  %621 = vst [vmem:[#allocation2 + $0x40] sm:$0xff] %v605
  %622 = vst [vmem:[#allocation2 + $0x48] sm:$0xff] %v606
  %623 = vst [vmem:[#allocation2 + $0x50] sm:$0xff] %v607
  %624 = vst [vmem:[#allocation2 + $0x58] sm:$0xff] %v608
  %625 = vst [vmem:[#allocation2 + $0x60] sm:$0xff] %v609
  %626 = vst [vmem:[#allocation2 + $0x68] sm:$0xff] %v610
  %627 = vst [vmem:[#allocation2 + $0x70] sm:$0xff] %v611
  %628 = vst [vmem:[#allocation2 + $0x78] sm:$0xff] %v612
  // Predicated region
  $region18: #{rdn_forward.15} parent=0 // pred_check
    %p629 = pneg %p15
  $region19: #{rdn_forward.15} parent=0 // pred_check_branch
    %631 = sbr.rel (%p629) target = $region21
  $region20: #{rdn_forward.15} parent=0 // pred_region
    %v632 = vld [vmem:[#allocation2] sm:$0xff]
    %v633 = vld [vmem:[#allocation2 + $0x8] sm:$0xff]
    %v634 = vld [vmem:[#allocation2 + $0x10] sm:$0xff]
    %v635 = vld [vmem:[#allocation2 + $0x18] sm:$0xff]
    %v636 = vld [vmem:[#allocation2 + $0x20] sm:$0xff]
    %v637 = vld [vmem:[#allocation2 + $0x28] sm:$0xff]
    %v638 = vld [vmem:[#allocation2 + $0x30] sm:$0xff]
    %v639 = vld [vmem:[#allocation2 + $0x38] sm:$0xff]
    %v640 = vld [vmem:[#allocation2 + $0x40] sm:$0xff]
    %v641 = vld [vmem:[#allocation2 + $0x48] sm:$0xff]
    %v642 = vld [vmem:[#allocation2 + $0x50] sm:$0xff]
    %v643 = vld [vmem:[#allocation2 + $0x58] sm:$0xff]
    %v644 = vld [vmem:[#allocation2 + $0x60] sm:$0xff]
    %v645 = vld [vmem:[#allocation2 + $0x68] sm:$0xff]
    %v646 = vld [vmem:[#allocation2 + $0x70] sm:$0xff]
    %v647 = vld [vmem:[#allocation2 + $0x78] sm:$0xff]
    %v648 = vld [vmem:[%s2] sm:$0x1]
    %v650 = vlaneseq
    %v651 = vshrl.u32 %v650, 7
    %v652 = vsub.s32 0, %v651
    %v653 = vrot.slane %v648, %v652
    %v655 = vadd.f32 %v632, %v653
    %v656 = vadd.f32 %v633, %v653
    %v657 = vadd.f32 %v634, %v653
    %v658 = vadd.f32 %v635, %v653
    %v659 = vadd.f32 %v636, %v653
    %v660 = vadd.f32 %v637, %v653
    %v661 = vadd.f32 %v638, %v653
    %v662 = vadd.f32 %v639, %v653
    %v663 = vadd.f32 %v640, %v653
    %v664 = vadd.f32 %v641, %v653
    %v665 = vadd.f32 %v642, %v653
    %v666 = vadd.f32 %v643, %v653
    %v667 = vadd.f32 %v644, %v653
    %v668 = vadd.f32 %v645, %v653
    %v669 = vadd.f32 %v646, %v653
    %v670 = vadd.f32 %v647, %v653
    %v671 = vmax.f32 %v655, 0.0
    %v672 = vmax.f32 %v656, 0.0
    %v673 = vmax.f32 %v657, 0.0
    %v674 = vmax.f32 %v658, 0.0
    %v675 = vmax.f32 %v659, 0.0
    %v676 = vmax.f32 %v660, 0.0
    %v677 = vmax.f32 %v661, 0.0
    %v678 = vmax.f32 %v662, 0.0
    %v679 = vmax.f32 %v663, 0.0
    %v680 = vmax.f32 %v664, 0.0
    %v681 = vmax.f32 %v665, 0.0
    %v682 = vmax.f32 %v666, 0.0
    %v683 = vmax.f32 %v667, 0.0
    %v684 = vmax.f32 %v668, 0.0
    %v685 = vmax.f32 %v669, 0.0
    %v686 = vmax.f32 %v670, 0.0
    %687 = vst [vmem:[%s3] sm:$0xff] %v671
    %688 = vst [vmem:[%s3 + $0x8] sm:$0xff] %v672
    %689 = vst [vmem:[%s3 + $0x10] sm:$0xff] %v673
    %690 = vst [vmem:[%s3 + $0x18] sm:$0xff] %v674
    %691 = vst [vmem:[%s3 + $0x20] sm:$0xff] %v675
    %692 = vst [vmem:[%s3 + $0x28] sm:$0xff] %v676
    %693 = vst [vmem:[%s3 + $0x30] sm:$0xff] %v677
    %694 = vst [vmem:[%s3 + $0x38] sm:$0xff] %v678
    %695 = vst [vmem:[%s3 + $0x40] sm:$0xff] %v679
    %696 = vst [vmem:[%s3 + $0x48] sm:$0xff] %v680
    %697 = vst [vmem:[%s3 + $0x50] sm:$0xff] %v681
    %698 = vst [vmem:[%s3 + $0x58] sm:$0xff] %v682
    %699 = vst [vmem:[%s3 + $0x60] sm:$0xff] %v683
    %700 = vst [vmem:[%s3 + $0x68] sm:$0xff] %v684
    %701 = vst [vmem:[%s3 + $0x70] sm:$0xff] %v685
    %702 = vst [vmem:[%s3 + $0x78] sm:$0xff] %v686
  $region21: #{rdn_forward.15} parent=0 // pred_fallthru
    _
  // Predicated region
  $region22: #{rdn_forward.15} parent=0 // pred_check
    _
  $region23: #{rdn_forward.15} parent=0 // pred_check_branch
    %704 = sbr.rel (0) target = $region25
  $region24: #{rdn_forward.15} parent=0 // pred_region
    _
  $region25: #{rdn_forward.15} parent=0 // pred_fallthru
    _
  // Predicated region
  $region26: #{rdn_forward.15} parent=0 // pred_check
    _
  $region27: #{rdn_forward.15} parent=0 // pred_check_branch
    %706 = sbr.rel (0) target = $region29
  $region28: #{rdn_forward.15} parent=0 // pred_region
    _
  $region29: #{rdn_forward.15} parent=0 // pred_fallthru
    _

// kernel: rdn_forward.23
$region0: #{rdn_forward.23}
  #allocation0 [shape = 'u32[]', space=smem, size = 0x4, offset = 0x4, fixed_abs, tag = 'smem constant byte address 0x4 - core index']
  #allocation1 [shape = 'u32[144,128]{1,0:T(1,128)}', space=vmem, size = 0x12000, scoped, tag = 'internal scratch']
  #allocation2 [shape = 'f32[512,128]{1,0:T(8,128)}', space=vmem, size = 0x40000, scoped, tag = 'scratch operand']
  %s0 = inlined_call_operand.vmem [shape: bf16[512,256], index: 0, kind: input, shape index: {}]
  %s1 = inlined_call_operand.vmem [shape: bf16[256,128], index: 1, kind: input, shape index: {}]
  %s2 = inlined_call_operand.vmem [shape: f32[1,128], index: 2, kind: input, shape index: {}]
  %s3 = inlined_call_operand.vmem [shape: f32[512,128], index: 3, kind: output, shape index: {}]
  %s4 = sld [smem:[#allocation0]]
  $region30: #{rdn_forward.23} parent=0
    _
  %s6 = ssub.s32 1, %s4
  %s7 = scalar_select 0, %s6, %s4
  // Predicated region
  $region2: #{rdn_forward.23} parent=0 // pred_check
    _
  $region3: #{rdn_forward.23} parent=0 // pred_check_branch
    %9 = sbr.rel (0) target = $region5
  $region4: #{rdn_forward.23} parent=0 // pred_region
    _
  $region5: #{rdn_forward.23} parent=0 // pred_fallthru
    _
  // Predicated region
  $region6: #{rdn_forward.23} parent=0 // pred_check
    _
  $region7: #{rdn_forward.23} parent=0 // pred_check_branch
    %11 = sbr.rel (0) target = $region9
  $region8: #{rdn_forward.23} parent=0 // pred_region
    _
  $region9: #{rdn_forward.23} parent=0 // pred_fallthru
    _
  // Predicated region
  $region10: #{rdn_forward.23} parent=0 // pred_check
    _
  $region11: #{rdn_forward.23} parent=0 // pred_check_branch
    %13 = sbr.rel (0) target = $region13
  $region12: #{rdn_forward.23} parent=0 // pred_region
    _
  $region13: #{rdn_forward.23} parent=0 // pred_fallthru
    _
  %p15 = scmp.eq.s32.totalorder 0, 0
  // Predicated region
  $region14: #{rdn_forward.23} parent=0 // pred_check
    %p16 = pneg %p15
  $region15: #{rdn_forward.23} parent=0 // pred_check_branch
    %18 = sbr.rel (%p16) target = $region17
  $region16: #{rdn_forward.23} parent=0 // pred_region
    %19 = vst [vmem:[#allocation2] sm:$0xff] 0.0
    %20 = vst [vmem:[#allocation2 + $0x8] sm:$0xff] 0.0
    %21 = vst [vmem:[#allocation2 + $0x10] sm:$0xff] 0.0
    %22 = vst [vmem:[#allocation2 + $0x18] sm:$0xff] 0.0
    %23 = vst [vmem:[#allocation2 + $0x20] sm:$0xff] 0.0
    %24 = vst [vmem:[#allocation2 + $0x28] sm:$0xff] 0.0
    %25 = vst [vmem:[#allocation2 + $0x30] sm:$0xff] 0.0
    %26 = vst [vmem:[#allocation2 + $0x38] sm:$0xff] 0.0
    %27 = vst [vmem:[#allocation2 + $0x40] sm:$0xff] 0.0
    %28 = vst [vmem:[#allocation2 + $0x48] sm:$0xff] 0.0
    %29 = vst [vmem:[#allocation2 + $0x50] sm:$0xff] 0.0
    %30 = vst [vmem:[#allocation2 + $0x58] sm:$0xff] 0.0
    %31 = vst [vmem:[#allocation2 + $0x60] sm:$0xff] 0.0
    %32 = vst [vmem:[#allocation2 + $0x68] sm:$0xff] 0.0
    %33 = vst [vmem:[#allocation2 + $0x70] sm:$0xff] 0.0
    %34 = vst [vmem:[#allocation2 + $0x78] sm:$0xff] 0.0
    %35 = vst [vmem:[#allocation2 + $0x80] sm:$0xff] 0.0
    %36 = vst [vmem:[#allocation2 + $0x88] sm:$0xff] 0.0
    %37 = vst [vmem:[#allocation2 + $0x90] sm:$0xff] 0.0
    %38 = vst [vmem:[#allocation2 + $0x98] sm:$0xff] 0.0
    %39 = vst [vmem:[#allocation2 + $0xa0] sm:$0xff] 0.0
    %40 = vst [vmem:[#allocation2 + $0xa8] sm:$0xff] 0.0
    %41 = vst [vmem:[#allocation2 + $0xb0] sm:$0xff] 0.0
    %42 = vst [vmem:[#allocation2 + $0xb8] sm:$0xff] 0.0
    %43 = vst [vmem:[#allocation2 + $0xc0] sm:$0xff] 0.0
    %44 = vst [vmem:[#allocation2 + $0xc8] sm:$0xff] 0.0
    %45 = vst [vmem:[#allocation2 + $0xd0] sm:$0xff] 0.0
    %46 = vst [vmem:[#allocation2 + $0xd8] sm:$0xff] 0.0
    %47 = vst [vmem:[#allocation2 + $0xe0] sm:$0xff] 0.0
    %48 = vst [vmem:[#allocation2 + $0xe8] sm:$0xff] 0.0
    %49 = vst [vmem:[#allocation2 + $0xf0] sm:$0xff] 0.0
    %50 = vst [vmem:[#allocation2 + $0xf8] sm:$0xff] 0.0
    %51 = vst [vmem:[#allocation2 + $0x100] sm:$0xff] 0.0
    %52 = vst [vmem:[#allocation2 + $0x108] sm:$0xff] 0.0
    %53 = vst [vmem:[#allocation2 + $0x110] sm:$0xff] 0.0
    %54 = vst [vmem:[#allocation2 + $0x118] sm:$0xff] 0.0
    %55 = vst [vmem:[#allocation2 + $0x120] sm:$0xff] 0.0
    %56 = vst [vmem:[#allocation2 + $0x128] sm:$0xff] 0.0
    %57 = vst [vmem:[#allocation2 + $0x130] sm:$0xff] 0.0
    %58 = vst [vmem:[#allocation2 + $0x138] sm:$0xff] 0.0
    %59 = vst [vmem:[#allocation2 + $0x140] sm:$0xff] 0.0
    %60 = vst [vmem:[#allocation2 + $0x148] sm:$0xff] 0.0
    %61 = vst [vmem:[#allocation2 + $0x150] sm:$0xff] 0.0
    %62 = vst [vmem:[#allocation2 + $0x158] sm:$0xff] 0.0
    %63 = vst [vmem:[#allocation2 + $0x160] sm:$0xff] 0.0
    %64 = vst [vmem:[#allocation2 + $0x168] sm:$0xff] 0.0
    %65 = vst [vmem:[#allocation2 + $0x170] sm:$0xff] 0.0
    %66 = vst [vmem:[#allocation2 + $0x178] sm:$0xff] 0.0
    %67 = vst [vmem:[#allocation2 + $0x180] sm:$0xff] 0.0
    %68 = vst [vmem:[#allocation2 + $0x188] sm:$0xff] 0.0
    %69 = vst [vmem:[#allocation2 + $0x190] sm:$0xff] 0.0
    %70 = vst [vmem:[#allocation2 + $0x198] sm:$0xff] 0.0
    %71 = vst [vmem:[#allocation2 + $0x1a0] sm:$0xff] 0.0
    %72 = vst [vmem:[#allocation2 + $0x1a8] sm:$0xff] 0.0
    %73 = vst [vmem:[#allocation2 + $0x1b0] sm:$0xff] 0.0
    %74 = vst [vmem:[#allocation2 + $0x1b8] sm:$0xff] 0.0
    %75 = vst [vmem:[#allocation2 + $0x1c0] sm:$0xff] 0.0
    %76 = vst [vmem:[#allocation2 + $0x1c8] sm:$0xff] 0.0
    %77 = vst [vmem:[#allocation2 + $0x1d0] sm:$0xff] 0.0
    %78 = vst [vmem:[#allocation2 + $0x1d8] sm:$0xff] 0.0
    %79 = vst [vmem:[#allocation2 + $0x1e0] sm:$0xff] 0.0
    %80 = vst [vmem:[#allocation2 + $0x1e8] sm:$0xff] 0.0
    %81 = vst [vmem:[#allocation2 + $0x1f0] sm:$0xff] 0.0
    %82 = vst [vmem:[#allocation2 + $0x1f8] sm:$0xff] 0.0
  $region17: #{rdn_forward.23} parent=0 // pred_fallthru
    _
  %v83 = vld [vmem:[#allocation2] sm:$0xff]
  %v84 = vld [vmem:[#allocation2 + $0x8] sm:$0xff]
  %v85 = vld [vmem:[#allocation2 + $0x10] sm:$0xff]
  %v86 = vld [vmem:[#allocation2 + $0x18] sm:$0xff]
  %v87 = vld [vmem:[#allocation2 + $0x20] sm:$0xff]
  %v88 = vld [vmem:[#allocation2 + $0x28] sm:$0xff]
  %v89 = vld [vmem:[#allocation2 + $0x30] sm:$0xff]
  %v90 = vld [vmem:[#allocation2 + $0x38] sm:$0xff]
  %v91 = vld [vmem:[#allocation2 + $0x40] sm:$0xff]
  %v92 = vld [vmem:[#allocation2 + $0x48] sm:$0xff]
  %v93 = vld [vmem:[#allocation2 + $0x50] sm:$0xff]
  %v94 = vld [vmem:[#allocation2 + $0x58] sm:$0xff]
  %v95 = vld [vmem:[#allocation2 + $0x60] sm:$0xff]
  %v96 = vld [vmem:[#allocation2 + $0x68] sm:$0xff]
  %v97 = vld [vmem:[#allocation2 + $0x70] sm:$0xff]
  %v98 = vld [vmem:[#allocation2 + $0x78] sm:$0xff]
  %v99 = vld [vmem:[#allocation2 + $0x80] sm:$0xff]
  %v100 = vld [vmem:[#allocation2 + $0x88] sm:$0xff]
  %v101 = vld [vmem:[#allocation2 + $0x90] sm:$0xff]
  %v102 = vld [vmem:[#allocation2 + $0x98] sm:$0xff]
  %v103 = vld [vmem:[#allocation2 + $0xa0] sm:$0xff]
  %v104 = vld [vmem:[#allocation2 + $0xa8] sm:$0xff]
  %v105 = vld [vmem:[#allocation2 + $0xb0] sm:$0xff]
  %v106 = vld [vmem:[#allocation2 + $0xb8] sm:$0xff]
  %v107 = vld [vmem:[#allocation2 + $0xc0] sm:$0xff]
  %v108 = vld [vmem:[#allocation2 + $0xc8] sm:$0xff]
  %v109 = vld [vmem:[#allocation2 + $0xd0] sm:$0xff]
  %v110 = vld [vmem:[#allocation2 + $0xd8] sm:$0xff]
  %v111 = vld [vmem:[#allocation2 + $0xe0] sm:$0xff]
  %v112 = vld [vmem:[#allocation2 + $0xe8] sm:$0xff]
  %v113 = vld [vmem:[#allocation2 + $0xf0] sm:$0xff]
  %v114 = vld [vmem:[#allocation2 + $0xf8] sm:$0xff]
  %v115 = vld [vmem:[#allocation2 + $0x100] sm:$0xff]
  %v116 = vld [vmem:[#allocation2 + $0x108] sm:$0xff]
  %v117 = vld [vmem:[#allocation2 + $0x110] sm:$0xff]
  %v118 = vld [vmem:[#allocation2 + $0x118] sm:$0xff]
  %v119 = vld [vmem:[#allocation2 + $0x120] sm:$0xff]
  %v120 = vld [vmem:[#allocation2 + $0x128] sm:$0xff]
  %v121 = vld [vmem:[#allocation2 + $0x130] sm:$0xff]
  %v122 = vld [vmem:[#allocation2 + $0x138] sm:$0xff]
  %v123 = vld [vmem:[#allocation2 + $0x140] sm:$0xff]
  %v124 = vld [vmem:[#allocation2 + $0x148] sm:$0xff]
  %v125 = vld [vmem:[#allocation2 + $0x150] sm:$0xff]
  %v126 = vld [vmem:[#allocation2 + $0x158] sm:$0xff]
  %v127 = vld [vmem:[#allocation2 + $0x160] sm:$0xff]
  %v128 = vld [vmem:[#allocation2 + $0x168] sm:$0xff]
  %v129 = vld [vmem:[#allocation2 + $0x170] sm:$0xff]
  %v130 = vld [vmem:[#allocation2 + $0x178] sm:$0xff]
  %v131 = vld [vmem:[#allocation2 + $0x180] sm:$0xff]
  %v132 = vld [vmem:[#allocation2 + $0x188] sm:$0xff]
  %v133 = vld [vmem:[#allocation2 + $0x190] sm:$0xff]
  %v134 = vld [vmem:[#allocation2 + $0x198] sm:$0xff]
  %v135 = vld [vmem:[#allocation2 + $0x1a0] sm:$0xff]
  %v136 = vld [vmem:[#allocation2 + $0x1a8] sm:$0xff]
  %v137 = vld [vmem:[#allocation2 + $0x1b0] sm:$0xff]
  %v138 = vld [vmem:[#allocation2 + $0x1b8] sm:$0xff]
  %v139 = vld [vmem:[#allocation2 + $0x1c0] sm:$0xff]
  %v140 = vld [vmem:[#allocation2 + $0x1c8] sm:$0xff]
  %v141 = vld [vmem:[#allocation2 + $0x1d0] sm:$0xff]
  %v142 = vld [vmem:[#allocation2 + $0x1d8] sm:$0xff]
  %v143 = vld [vmem:[#allocation2 + $0x1e0] sm:$0xff]
  %v144 = vld [vmem:[#allocation2 + $0x1e8] sm:$0xff]
  %v145 = vld [vmem:[#allocation2 + $0x1f0] sm:$0xff]
  %v146 = vld [vmem:[#allocation2 + $0x1f8] sm:$0xff]
  %v147 = vld [vmem:[%s0] sm:$0xff]
  %v148 = vld [vmem:[%s0 + $0x8] sm:$0xff]
  %v149 = vld [vmem:[%s0 + $0x10] sm:$0xff]
  %v150 = vld [vmem:[%s0 + $0x18] sm:$0xff]
  %v151 = vld [vmem:[%s0 + $0x20] sm:$0xff]
  %v152 = vld [vmem:[%s0 + $0x28] sm:$0xff]
  %v153 = vld [vmem:[%s0 + $0x30] sm:$0xff]
  %v154 = vld [vmem:[%s0 + $0x38] sm:$0xff]
  %v155 = vld [vmem:[%s0 + $0x40] sm:$0xff]
  %v156 = vld [vmem:[%s0 + $0x48] sm:$0xff]
  %v157 = vld [vmem:[%s0 + $0x50] sm:$0xff]
  %v158 = vld [vmem:[%s0 + $0x58] sm:$0xff]
  %v159 = vld [vmem:[%s0 + $0x60] sm:$0xff]
  %v160 = vld [vmem:[%s0 + $0x68] sm:$0xff]
  %v161 = vld [vmem:[%s0 + $0x70] sm:$0xff]
  %v162 = vld [vmem:[%s0 + $0x78] sm:$0xff]
  %v163 = vld [vmem:[%s0 + $0x80] sm:$0xff]
  %v164 = vld [vmem:[%s0 + $0x88] sm:$0xff]
  %v165 = vld [vmem:[%s0 + $0x90] sm:$0xff]
  %v166 = vld [vmem:[%s0 + $0x98] sm:$0xff]
  %v167 = vld [vmem:[%s0 + $0xa0] sm:$0xff]
  %v168 = vld [vmem:[%s0 + $0xa8] sm:$0xff]
  %v169 = vld [vmem:[%s0 + $0xb0] sm:$0xff]
  %v170 = vld [vmem:[%s0 + $0xb8] sm:$0xff]
  %v171 = vld [vmem:[%s0 + $0xc0] sm:$0xff]
  %v172 = vld [vmem:[%s0 + $0xc8] sm:$0xff]
  %v173 = vld [vmem:[%s0 + $0xd0] sm:$0xff]
  %v174 = vld [vmem:[%s0 + $0xd8] sm:$0xff]
  %v175 = vld [vmem:[%s0 + $0xe0] sm:$0xff]
  %v176 = vld [vmem:[%s0 + $0xe8] sm:$0xff]
  %v177 = vld [vmem:[%s0 + $0xf0] sm:$0xff]
  %v178 = vld [vmem:[%s0 + $0xf8] sm:$0xff]
  %v179 = vld [vmem:[%s0 + $0x100] sm:$0xff]
  %v180 = vld [vmem:[%s0 + $0x108] sm:$0xff]
  %v181 = vld [vmem:[%s0 + $0x110] sm:$0xff]
  %v182 = vld [vmem:[%s0 + $0x118] sm:$0xff]
  %v183 = vld [vmem:[%s0 + $0x120] sm:$0xff]
  %v184 = vld [vmem:[%s0 + $0x128] sm:$0xff]
  %v185 = vld [vmem:[%s0 + $0x130] sm:$0xff]
  %v186 = vld [vmem:[%s0 + $0x138] sm:$0xff]
  %v187 = vld [vmem:[%s0 + $0x140] sm:$0xff]
  %v188 = vld [vmem:[%s0 + $0x148] sm:$0xff]
  %v189 = vld [vmem:[%s0 + $0x150] sm:$0xff]
  %v190 = vld [vmem:[%s0 + $0x158] sm:$0xff]
  %v191 = vld [vmem:[%s0 + $0x160] sm:$0xff]
  %v192 = vld [vmem:[%s0 + $0x168] sm:$0xff]
  %v193 = vld [vmem:[%s0 + $0x170] sm:$0xff]
  %v194 = vld [vmem:[%s0 + $0x178] sm:$0xff]
  %v195 = vld [vmem:[%s0 + $0x180] sm:$0xff]
  %v196 = vld [vmem:[%s0 + $0x188] sm:$0xff]
  %v197 = vld [vmem:[%s0 + $0x190] sm:$0xff]
  %v198 = vld [vmem:[%s0 + $0x198] sm:$0xff]
  %v199 = vld [vmem:[%s0 + $0x1a0] sm:$0xff]
  %v200 = vld [vmem:[%s0 + $0x1a8] sm:$0xff]
  %v201 = vld [vmem:[%s0 + $0x1b0] sm:$0xff]
  %v202 = vld [vmem:[%s0 + $0x1b8] sm:$0xff]
  %v203 = vld [vmem:[%s0 + $0x1c0] sm:$0xff]
  %v204 = vld [vmem:[%s0 + $0x1c8] sm:$0xff]
  %v205 = vld [vmem:[%s0 + $0x1d0] sm:$0xff]
  %v206 = vld [vmem:[%s0 + $0x1d8] sm:$0xff]
  %v207 = vld [vmem:[%s0 + $0x1e0] sm:$0xff]
  %v208 = vld [vmem:[%s0 + $0x1e8] sm:$0xff]
  %v209 = vld [vmem:[%s0 + $0x1f0] sm:$0xff]
  %v210 = vld [vmem:[%s0 + $0x1f8] sm:$0xff]
  %v211 = vld [vmem:[%s1] sm:$0xf]
  %v212 = vld [vmem:[%s1 + $0x4] sm:$0xf]
  %v213 = vld [vmem:[%s1 + $0x8] sm:$0xf]
  %v214 = vld [vmem:[%s1 + $0xc] sm:$0xf]
  %v215 = vld [vmem:[%s1 + $0x10] sm:$0xf]
  %v216 = vld [vmem:[%s1 + $0x14] sm:$0xf]
  %v217 = vld [vmem:[%s1 + $0x18] sm:$0xf]
  %v218 = vld [vmem:[%s1 + $0x1c] sm:$0xf]
  %v219 = vld [vmem:[%s1 + $0x20] sm:$0xf]
  %v220 = vld [vmem:[%s1 + $0x24] sm:$0xf]
  %v221 = vld [vmem:[%s1 + $0x28] sm:$0xf]
  %v222 = vld [vmem:[%s1 + $0x2c] sm:$0xf]
  %v223 = vld [vmem:[%s1 + $0x30] sm:$0xf]
  %v224 = vld [vmem:[%s1 + $0x34] sm:$0xf]
  %v225 = vld [vmem:[%s1 + $0x38] sm:$0xf]
  %v226 = vld [vmem:[%s1 + $0x3c] sm:$0xf]
  %v227 = vld [vmem:[%s1 + $0x40] sm:$0xf]
  %v228 = vld [vmem:[%s1 + $0x44] sm:$0xf]
  %v229 = vld [vmem:[%s1 + $0x48] sm:$0xf]
  %v230 = vld [vmem:[%s1 + $0x4c] sm:$0xf]
  %v231 = vld [vmem:[%s1 + $0x50] sm:$0xf]
  %v232 = vld [vmem:[%s1 + $0x54] sm:$0xf]
  %v233 = vld [vmem:[%s1 + $0x58] sm:$0xf]
  %v234 = vld [vmem:[%s1 + $0x5c] sm:$0xf]
  %v235 = vld [vmem:[%s1 + $0x60] sm:$0xf]
  %v236 = vld [vmem:[%s1 + $0x64] sm:$0xf]
  %v237 = vld [vmem:[%s1 + $0x68] sm:$0xf]
  %v238 = vld [vmem:[%s1 + $0x6c] sm:$0xf]
  %v239 = vld [vmem:[%s1 + $0x70] sm:$0xf]
  %v240 = vld [vmem:[%s1 + $0x74] sm:$0xf]
  %v241 = vld [vmem:[%s1 + $0x78] sm:$0xf]
  %v242 = vld [vmem:[%s1 + $0x7c] sm:$0xf]
  %v307 = vunpack.c.l.b16 %v147
  %v308 = vunpack.c.h.b16 %v147
  %v309 = vunpack.c.l.b16 %v148
  %v310 = vunpack.c.h.b16 %v148
  %v311 = vunpack.c.l.b16 %v149
  %v312 = vunpack.c.h.b16 %v149
  %v313 = vunpack.c.l.b16 %v150
  %v314 = vunpack.c.h.b16 %v150
  %v315 = vunpack.c.l.b16 %v151
  %v316 = vunpack.c.h.b16 %v151
  %v317 = vunpack.c.l.b16 %v152
  %v318 = vunpack.c.h.b16 %v152
  %v319 = vunpack.c.l.b16 %v153
  %v320 = vunpack.c.h.b16 %v153
  %v321 = vunpack.c.l.b16 %v154
  %v322 = vunpack.c.h.b16 %v154
  %v323 = vunpack.c.l.b16 %v155
  %v324 = vunpack.c.h.b16 %v155
  %v325 = vunpack.c.l.b16 %v156
  %v326 = vunpack.c.h.b16 %v156
  %v327 = vunpack.c.l.b16 %v157
  %v328 = vunpack.c.h.b16 %v157
  %v329 = vunpack.c.l.b16 %v158
  %v330 = vunpack.c.h.b16 %v158
  %v331 = vunpack.c.l.b16 %v159
  %v332 = vunpack.c.h.b16 %v159
  %v333 = vunpack.c.l.b16 %v160
  %v334 = vunpack.c.h.b16 %v160
  %v335 = vunpack.c.l.b16 %v161
  %v336 = vunpack.c.h.b16 %v161
  %v337 = vunpack.c.l.b16 %v162
  %v338 = vunpack.c.h.b16 %v162
  %v339 = vunpack.c.l.b16 %v163
  %v340 = vunpack.c.h.b16 %v163
  %v341 = vunpack.c.l.b16 %v164
  %v342 = vunpack.c.h.b16 %v164
  %v343 = vunpack.c.l.b16 %v165
  %v344 = vunpack.c.h.b16 %v165
  %v345 = vunpack.c.l.b16 %v166
  %v346 = vunpack.c.h.b16 %v166
  %v347 = vunpack.c.l.b16 %v167
  %v348 = vunpack.c.h.b16 %v167
  %v349 = vunpack.c.l.b16 %v168
  %v350 = vunpack.c.h.b16 %v168
  %v351 = vunpack.c.l.b16 %v169
  %v352 = vunpack.c.h.b16 %v169
  %v353 = vunpack.c.l.b16 %v170
  %v354 = vunpack.c.h.b16 %v170
  %v355 = vunpack.c.l.b16 %v171
  %v356 = vunpack.c.h.b16 %v171
  %v357 = vunpack.c.l.b16 %v172
  %v358 = vunpack.c.h.b16 %v172
  %v359 = vunpack.c.l.b16 %v173
  %v360 = vunpack.c.h.b16 %v173
  %v361 = vunpack.c.l.b16 %v174
  %v362 = vunpack.c.h.b16 %v174
  %v363 = vunpack.c.l.b16 %v175
  %v364 = vunpack.c.h.b16 %v175
  %v365 = vunpack.c.l.b16 %v176
  %v366 = vunpack.c.h.b16 %v176
  %v367 = vunpack.c.l.b16 %v177
  %v368 = vunpack.c.h.b16 %v177
  %v369 = vunpack.c.l.b16 %v178
  %v370 = vunpack.c.h.b16 %v178
  %v371 = vunpack.c.l.b16 %v179
  %v372 = vunpack.c.h.b16 %v179
  %v373 = vunpack.c.l.b16 %v180
  %v374 = vunpack.c.h.b16 %v180
  %v375 = vunpack.c.l.b16 %v181
  %v376 = vunpack.c.h.b16 %v181
  %v377 = vunpack.c.l.b16 %v182
  %v378 = vunpack.c.h.b16 %v182
  %v379 = vunpack.c.l.b16 %v183
  %v380 = vunpack.c.h.b16 %v183
  %v381 = vunpack.c.l.b16 %v184
  %v382 = vunpack.c.h.b16 %v184
  %v383 = vunpack.c.l.b16 %v185
  %v384 = vunpack.c.h.b16 %v185
  %v385 = vunpack.c.l.b16 %v186
  %v386 = vunpack.c.h.b16 %v186
  %v387 = vunpack.c.l.b16 %v187
  %v388 = vunpack.c.h.b16 %v187
  %v389 = vunpack.c.l.b16 %v188
  %v390 = vunpack.c.h.b16 %v188
  %v391 = vunpack.c.l.b16 %v189
  %v392 = vunpack.c.h.b16 %v189
  %v393 = vunpack.c.l.b16 %v190
  %v394 = vunpack.c.h.b16 %v190
  %v395 = vunpack.c.l.b16 %v191
  %v396 = vunpack.c.h.b16 %v191
  %v397 = vunpack.c.l.b16 %v192
  %v398 = vunpack.c.h.b16 %v192
  %v399 = vunpack.c.l.b16 %v193
  %v400 = vunpack.c.h.b16 %v193
  %v401 = vunpack.c.l.b16 %v194
  %v402 = vunpack.c.h.b16 %v194
  %v403 = vunpack.c.l.b16 %v195
  %v404 = vunpack.c.h.b16 %v195
  %v405 = vunpack.c.l.b16 %v196
  %v406 = vunpack.c.h.b16 %v196
  %v407 = vunpack.c.l.b16 %v197
  %v408 = vunpack.c.h.b16 %v197
  %v409 = vunpack.c.l.b16 %v198
  %v410 = vunpack.c.h.b16 %v198
  %v411 = vunpack.c.l.b16 %v199
  %v412 = vunpack.c.h.b16 %v199
  %v413 = vunpack.c.l.b16 %v200
  %v414 = vunpack.c.h.b16 %v200
  %v415 = vunpack.c.l.b16 %v201
  %v416 = vunpack.c.h.b16 %v201
  %v417 = vunpack.c.l.b16 %v202
  %v418 = vunpack.c.h.b16 %v202
  %v419 = vunpack.c.l.b16 %v203
  %v420 = vunpack.c.h.b16 %v203
  %v421 = vunpack.c.l.b16 %v204
  %v422 = vunpack.c.h.b16 %v204
  %v423 = vunpack.c.l.b16 %v205
  %v424 = vunpack.c.h.b16 %v205
  %v425 = vunpack.c.l.b16 %v206
  %v426 = vunpack.c.h.b16 %v206
  %v427 = vunpack.c.l.b16 %v207
  %v428 = vunpack.c.h.b16 %v207
  %v429 = vunpack.c.l.b16 %v208
  %v430 = vunpack.c.h.b16 %v208
  %v431 = vunpack.c.l.b16 %v209
  %v432 = vunpack.c.h.b16 %v209
  %v433 = vunpack.c.l.b16 %v210
  %v434 = vunpack.c.h.b16 %v210
  %v435 = vpack.c.b16 %v309, %v307
  %v436 = vpack.c.b16 %v310, %v308
  %v437 = vpack.c.b16 %v313, %v311
  %v438 = vpack.c.b16 %v314, %v312
  %v439 = vpack.c.b16 %v317, %v315
  %v440 = vpack.c.b16 %v318, %v316
  %v441 = vpack.c.b16 %v321, %v319
  %v442 = vpack.c.b16 %v322, %v320
  %v443 = vpack.c.b16 %v325, %v323
  %v444 = vpack.c.b16 %v326, %v324
  %v445 = vpack.c.b16 %v329, %v327
  %v446 = vpack.c.b16 %v330, %v328
  %v447 = vpack.c.b16 %v333, %v331
  %v448 = vpack.c.b16 %v334, %v332
  %v449 = vpack.c.b16 %v337, %v335
  %v450 = vpack.c.b16 %v338, %v336
  %v451 = vpack.c.b16 %v341, %v339
  %v452 = vpack.c.b16 %v342, %v340
  %v453 = vpack.c.b16 %v345, %v343
  %v454 = vpack.c.b16 %v346, %v344
  %v455 = vpack.c.b16 %v349, %v347
  %v456 = vpack.c.b16 %v350, %v348
  %v457 = vpack.c.b16 %v353, %v351
  %v458 = vpack.c.b16 %v354, %v352
  %v459 = vpack.c.b16 %v357, %v355
  %v460 = vpack.c.b16 %v358, %v356
  %v461 = vpack.c.b16 %v361, %v359
  %v462 = vpack.c.b16 %v362, %v360
  %v463 = vpack.c.b16 %v365, %v363
  %v464 = vpack.c.b16 %v366, %v364
  %v465 = vpack.c.b16 %v369, %v367
  %v466 = vpack.c.b16 %v370, %v368
  %v467 = vpack.c.b16 %v373, %v371
  %v468 = vpack.c.b16 %v374, %v372
  %v469 = vpack.c.b16 %v377, %v375
  %v470 = vpack.c.b16 %v378, %v376
  %v471 = vpack.c.b16 %v381, %v379
  %v472 = vpack.c.b16 %v382, %v380
  %v473 = vpack.c.b16 %v385, %v383
  %v474 = vpack.c.b16 %v386, %v384
  %v475 = vpack.c.b16 %v389, %v387
  %v476 = vpack.c.b16 %v390, %v388
  %v477 = vpack.c.b16 %v393, %v391
  %v478 = vpack.c.b16 %v394, %v392
  %v479 = vpack.c.b16 %v397, %v395
  %v480 = vpack.c.b16 %v398, %v396
  %v481 = vpack.c.b16 %v401, %v399
  %v482 = vpack.c.b16 %v402, %v400
  %v483 = vpack.c.b16 %v405, %v403
  %v484 = vpack.c.b16 %v406, %v404
  %v485 = vpack.c.b16 %v409, %v407
  %v486 = vpack.c.b16 %v410, %v408
  %v487 = vpack.c.b16 %v413, %v411
  %v488 = vpack.c.b16 %v414, %v412
  %v489 = vpack.c.b16 %v417, %v415
  %v490 = vpack.c.b16 %v418, %v416
  %v491 = vpack.c.b16 %v421, %v419
  %v492 = vpack.c.b16 %v422, %v420
  %v493 = vpack.c.b16 %v425, %v423
  %v494 = vpack.c.b16 %v426, %v424
  %v495 = vpack.c.b16 %v429, %v427
  %v496 = vpack.c.b16 %v430, %v428
  %v497 = vpack.c.b16 %v433, %v431
  %v498 = vpack.c.b16 %v434, %v432
  %v595 = vunpack.c.l.b16 %v211
  %v596 = vunpack.c.l.b16 %v212
  %v597 = vunpack.c.l.b16 %v213
  %v598 = vunpack.c.l.b16 %v214
  %v599 = vunpack.c.l.b16 %v215
  %v600 = vunpack.c.l.b16 %v216
  %v601 = vunpack.c.l.b16 %v217
  %v602 = vunpack.c.l.b16 %v218
  %v603 = vunpack.c.l.b16 %v219
  %v604 = vunpack.c.l.b16 %v220
  %v605 = vunpack.c.l.b16 %v221
  %v606 = vunpack.c.l.b16 %v222
  %v607 = vunpack.c.l.b16 %v223
  %v608 = vunpack.c.l.b16 %v224
  %v609 = vunpack.c.l.b16 %v225
  %v610 = vunpack.c.l.b16 %v226
  %v611 = vunpack.c.l.b16 %v227
  %v612 = vunpack.c.l.b16 %v228
  %v613 = vunpack.c.l.b16 %v229
  %v614 = vunpack.c.l.b16 %v230
  %v615 = vunpack.c.l.b16 %v231
  %v616 = vunpack.c.l.b16 %v232
  %v617 = vunpack.c.l.b16 %v233
  %v618 = vunpack.c.l.b16 %v234
  %v619 = vunpack.c.l.b16 %v235
  %v620 = vunpack.c.l.b16 %v236
  %v621 = vunpack.c.l.b16 %v237
  %v622 = vunpack.c.l.b16 %v238
  %v623 = vunpack.c.l.b16 %v239
  %v624 = vunpack.c.l.b16 %v240
  %v625 = vunpack.c.l.b16 %v241
  %v626 = vunpack.c.l.b16 %v242
  %v627 = vpack.c.b16 %v596, %v595
  %v628 = vpack.c.b16 %v598, %v597
  %v629 = vpack.c.b16 %v600, %v599
  %v630 = vpack.c.b16 %v602, %v601
  %v631 = vpack.c.b16 %v604, %v603
  %v632 = vpack.c.b16 %v606, %v605
  %v633 = vpack.c.b16 %v608, %v607
  %v634 = vpack.c.b16 %v610, %v609
  %v635 = vpack.c.b16 %v612, %v611
  %v636 = vpack.c.b16 %v614, %v613
  %v637 = vpack.c.b16 %v616, %v615
  %v638 = vpack.c.b16 %v618, %v617
  %v639 = vpack.c.b16 %v620, %v619
  %v640 = vpack.c.b16 %v622, %v621
  %v641 = vpack.c.b16 %v624, %v623
  %v642 = vpack.c.b16 %v626, %v625
  %659 = vmatprep.subr.bf16.mxu0 0
  %660 = vmatpush1.bf16.msra.mxu0 %v627
  %661 = vmatprep.subr.bf16.mxu0 0
  %662 = vmatpush1.bf16.msra.mxu0 %v628
  %663 = vmatprep.subr.bf16.mxu0 0
  %664 = vmatpush1.bf16.msra.mxu0 %v629
  %665 = vmatprep.subr.bf16.mxu0 0
  %666 = vmatpush1.bf16.msra.mxu0 %v630
  %667 = vmatprep.subr.bf16.mxu0 0
  %668 = vmatpush1.bf16.msra.mxu0 %v631
  %669 = vmatprep.subr.bf16.mxu0 0
  %670 = vmatpush1.bf16.msra.mxu0 %v632
  %671 = vmatprep.subr.bf16.mxu0 0
  %672 = vmatpush1.bf16.msra.mxu0 %v633
  %673 = vmatprep.subr.bf16.mxu0 0
  %674 = vmatpush1.bf16.msra.mxu0 %v634
  %675 = vmatprep.subr.bf16.mxu0 0
  %676 = vmatpush1.bf16.msra.mxu0 %v635
  %677 = vmatprep.subr.bf16.mxu0 0
  %678 = vmatpush1.bf16.msra.mxu0 %v636
  %679 = vmatprep.subr.bf16.mxu0 0
  %680 = vmatpush1.bf16.msra.mxu0 %v637
  %681 = vmatprep.subr.bf16.mxu0 0
  %682 = vmatpush1.bf16.msra.mxu0 %v638
  %683 = vmatprep.subr.bf16.mxu0 0
  %684 = vmatpush1.bf16.msra.mxu0 %v639
  %685 = vmatprep.subr.bf16.mxu0 0
  %686 = vmatpush1.bf16.msra.mxu0 %v640
  %687 = vmatprep.subr.bf16.mxu0 0
  %688 = vmatpush1.bf16.msra.mxu0 %v641
  %689 = vmatprep.subr.bf16.mxu0 0
  %690 = vmatpush1.bf16.msra.mxu0 %v642
  %691 = vmatprep.mubr.bf16.mxu0 %v436
  %692 = vmatmul.mubr.bf16.gmra.mrb[0].mxu0 %v435
  %v693 = vpop.f32.mrb[0].mxu0
  %v694 = vadd.f32 0.0, %v693
  %v695 = vpop.f32.mrb[0].mxu0
  %v696 = vpop.f32.mrb[0].mxu0
  %v697 = vadd.f32 0.0, %v696
  %v698 = vpop.f32.mrb[0].mxu0
  %699 = vmatprep.mubr.bf16.mxu0 %v438
  %700 = vmatmul.mubr.bf16.gmra.mrb[0].mxu0 %v437
  %v701 = vpop.f32.mrb[0].mxu0
  %v702 = vadd.f32 0.0, %v701
  %v703 = vpop.f32.mrb[0].mxu0
  %v704 = vpop.f32.mrb[0].mxu0
  %v705 = vadd.f32 0.0, %v704
  %v706 = vpop.f32.mrb[0].mxu0
  %707 = vmatprep.mubr.bf16.mxu0 %v440
  %708 = vmatmul.mubr.bf16.gmra.mrb[0].mxu0 %v439
  %v709 = vpop.f32.mrb[0].mxu0
  %v710 = vadd.f32 0.0, %v709
  %v711 = vpop.f32.mrb[0].mxu0
  %v712 = vpop.f32.mrb[0].mxu0
  %v713 = vadd.f32 0.0, %v712
  %v714 = vpop.f32.mrb[0].mxu0
  %715 = vmatprep.mubr.bf16.mxu0 %v442
  %716 = vmatmul.mubr.bf16.gmra.mrb[0].mxu0 %v441
  %v717 = vpop.f32.mrb[0].mxu0
  %v718 = vadd.f32 0.0, %v717
  %v719 = vpop.f32.mrb[0].mxu0
  %v720 = vpop.f32.mrb[0].mxu0
  %v721 = vadd.f32 0.0, %v720
  %v722 = vpop.f32.mrb[0].mxu0
  %723 = vmatprep.mubr.bf16.mxu0 %v444
  %724 = vmatmul.mubr.bf16.gmra.mrb[0].mxu0 %v443
  %v725 = vpop.f32.mrb[0].mxu0
  %v726 = vadd.f32 0.0, %v725
  %v727 = vpop.f32.mrb[0].mxu0
  %v728 = vpop.f32.mrb[0].mxu0
  %v729 = vadd.f32 0.0, %v728
  %v730 = vpop.f32.mrb[0].mxu0
  %731 = vmatprep.mubr.bf16.mxu0 %v446
  %732 = vmatmul.mubr.bf16.gmra.mrb[0].mxu0 %v445
  %v733 = vpop.f32.mrb[0].mxu0
  %v734 = vadd.f32 0.0, %v733
  %v735 = vpop.f32.mrb[0].mxu0
  %v736 = vpop.f32.mrb[0].mxu0
  %v737 = vadd.f32 0.0, %v736
  %v738 = vpop.f32.mrb[0].mxu0
  %739 = vmatprep.mubr.bf16.mxu0 %v448
  %740 = vmatmul.mubr.bf16.gmra.mrb[0].mxu0 %v447
  %v741 = vpop.f32.mrb[0].mxu0
  %v742 = vadd.f32 0.0, %v741
  %v743 = vpop.f32.mrb[0].mxu0
  %v744 = vpop.f32.mrb[0].mxu0
  %v745 = vadd.f32 0.0, %v744
  %v746 = vpop.f32.mrb[0].mxu0
  %747 = vmatprep.mubr.bf16.mxu0 %v450
  %748 = vmatmul.mubr.bf16.gmra.mrb[0].mxu0 %v449
  %v749 = vpop.f32.mrb[0].mxu0
  %v750 = vadd.f32 0.0, %v749
  %v751 = vpop.f32.mrb[0].mxu0
  %v752 = vpop.f32.mrb[0].mxu0
  %v753 = vadd.f32 0.0, %v752
  %v754 = vpop.f32.mrb[0].mxu0
  %755 = vmatprep.mubr.bf16.mxu0 %v452
  %756 = vmatmul.mubr.bf16.gmra.mrb[0].mxu0 %v451
  %v757 = vpop.f32.mrb[0].mxu0
  %v758 = vadd.f32 0.0, %v757
  %v759 = vpop.f32.mrb[0].mxu0
  %v760 = vpop.f32.mrb[0].mxu0
  %v761 = vadd.f32 0.0, %v760
  %v762 = vpop.f32.mrb[0].mxu0
  %763 = vmatprep.mubr.bf16.mxu0 %v454
  %764 = vmatmul.mubr.bf16.gmra.mrb[0].mxu0 %v453
  %v765 = vpop.f32.mrb[0].mxu0
  %v766 = vadd.f32 0.0, %v765
  %v767 = vpop.f32.mrb[0].mxu0
  %v768 = vpop.f32.mrb[0].mxu0
  %v769 = vadd.f32 0.0, %v768
  %v770 = vpop.f32.mrb[0].mxu0
  %771 = vmatprep.mubr.bf16.mxu0 %v456
  %772 = vmatmul.mubr.bf16.gmra.mrb[0].mxu0 %v455
  %v773 = vpop.f32.mrb[0].mxu0
  %v774 = vadd.f32 0.0, %v773
  %v775 = vpop.f32.mrb[0].mxu0
  %v776 = vpop.f32.mrb[0].mxu0
  %v777 = vadd.f32 0.0, %v776
  %v778 = vpop.f32.mrb[0].mxu0
  %779 = vmatprep.mubr.bf16.mxu0 %v458
  %780 = vmatmul.mubr.bf16.gmra.mrb[0].mxu0 %v457
  %v781 = vpop.f32.mrb[0].mxu0
  %v782 = vadd.f32 0.0, %v781
  %v783 = vpop.f32.mrb[0].mxu0
  %v784 = vpop.f32.mrb[0].mxu0
  %v785 = vadd.f32 0.0, %v784
  %v786 = vpop.f32.mrb[0].mxu0
  %787 = vmatprep.mubr.bf16.mxu0 %v460
  %788 = vmatmul.mubr.bf16.gmra.mrb[0].mxu0 %v459
  %v789 = vpop.f32.mrb[0].mxu0
  %v790 = vadd.f32 0.0, %v789
  %v791 = vpop.f32.mrb[0].mxu0
  %v792 = vpop.f32.mrb[0].mxu0
  %v793 = vadd.f32 0.0, %v792
  %v794 = vpop.f32.mrb[0].mxu0
  %795 = vmatprep.mubr.bf16.mxu0 %v462
  %796 = vmatmul.mubr.bf16.gmra.mrb[0].mxu0 %v461
  %v797 = vpop.f32.mrb[0].mxu0
  %v798 = vadd.f32 0.0, %v797
  %v799 = vpop.f32.mrb[0].mxu0
  %v800 = vpop.f32.mrb[0].mxu0
  %v801 = vadd.f32 0.0, %v800
  %v802 = vpop.f32.mrb[0].mxu0
  %803 = vmatprep.mubr.bf16.mxu0 %v464
  %804 = vmatmul.mubr.bf16.gmra.mrb[0].mxu0 %v463
  %v805 = vpop.f32.mrb[0].mxu0
  %v806 = vadd.f32 0.0, %v805
  %v807 = vpop.f32.mrb[0].mxu0
  %v808 = vpop.f32.mrb[0].mxu0
  %v809 = vadd.f32 0.0, %v808
  %v810 = vpop.f32.mrb[0].mxu0
  %811 = vmatprep.mubr.bf16.mxu0 %v466
  %812 = vmatmul.mubr.bf16.gmra.mrb[0].mxu0 %v465
  %v813 = vpop.f32.mrb[0].mxu0
  %v814 = vadd.f32 0.0, %v813
  %v815 = vpop.f32.mrb[0].mxu0
  %v816 = vpop.f32.mrb[0].mxu0
  %v817 = vadd.f32 0.0, %v816
  %v818 = vpop.f32.mrb[0].mxu0
  %819 = vmatprep.mubr.bf16.mxu0 %v468
  %820 = vmatmul.mubr.bf16.gmra.mrb[0].mxu0 %v467
  %v821 = vpop.f32.mrb[0].mxu0
  %v822 = vadd.f32 0.0, %v821
  %v823 = vpop.f32.mrb[0].mxu0
  %v824 = vpop.f32.mrb[0].mxu0
  %v825 = vadd.f32 0.0, %v824
  %v826 = vpop.f32.mrb[0].mxu0
  %827 = vmatprep.mubr.bf16.mxu0 %v470
  %828 = vmatmul.mubr.bf16.gmra.mrb[0].mxu0 %v469
  %v829 = vpop.f32.mrb[0].mxu0
  %v830 = vadd.f32 0.0, %v829
  %v831 = vpop.f32.mrb[0].mxu0
  %v832 = vpop.f32.mrb[0].mxu0
  %v833 = vadd.f32 0.0, %v832
  %v834 = vpop.f32.mrb[0].mxu0
  %835 = vmatprep.mubr.bf16.mxu0 %v472
  %836 = vmatmul.mubr.bf16.gmra.mrb[0].mxu0 %v471
  %v837 = vpop.f32.mrb[0].mxu0
  %v838 = vadd.f32 0.0, %v837
  %v839 = vpop.f32.mrb[0].mxu0
  %v840 = vpop.f32.mrb[0].mxu0
  %v841 = vadd.f32 0.0, %v840
  %v842 = vpop.f32.mrb[0].mxu0
  %843 = vmatprep.mubr.bf16.mxu0 %v474
  %844 = vmatmul.mubr.bf16.gmra.mrb[0].mxu0 %v473
  %v845 = vpop.f32.mrb[0].mxu0
  %v846 = vadd.f32 0.0, %v845
  %v847 = vpop.f32.mrb[0].mxu0
  %v848 = vpop.f32.mrb[0].mxu0
  %v849 = vadd.f32 0.0, %v848
  %v850 = vpop.f32.mrb[0].mxu0
  %851 = vmatprep.mubr.bf16.mxu0 %v476
  %852 = vmatmul.mubr.bf16.gmra.mrb[0].mxu0 %v475
  %v853 = vpop.f32.mrb[0].mxu0
  %v854 = vadd.f32 0.0, %v853
  %v855 = vpop.f32.mrb[0].mxu0
  %v856 = vpop.f32.mrb[0].mxu0
  %v857 = vadd.f32 0.0, %v856
  %v858 = vpop.f32.mrb[0].mxu0
  %859 = vmatprep.mubr.bf16.mxu0 %v478
  %860 = vmatmul.mubr.bf16.gmra.mrb[0].mxu0 %v477
  %v861 = vpop.f32.mrb[0].mxu0
  %v862 = vadd.f32 0.0, %v861
  %v863 = vpop.f32.mrb[0].mxu0
  %v864 = vpop.f32.mrb[0].mxu0
  %v865 = vadd.f32 0.0, %v864
  %v866 = vpop.f32.mrb[0].mxu0
  %867 = vmatprep.mubr.bf16.mxu0 %v480
  %868 = vmatmul.mubr.bf16.gmra.mrb[0].mxu0 %v479
  %v869 = vpop.f32.mrb[0].mxu0
  %v870 = vadd.f32 0.0, %v869
  %v871 = vpop.f32.mrb[0].mxu0
  %v872 = vpop.f32.mrb[0].mxu0
  %v873 = vadd.f32 0.0, %v872
  %v874 = vpop.f32.mrb[0].mxu0
  %875 = vmatprep.mubr.bf16.mxu0 %v482
  %876 = vmatmul.mubr.bf16.gmra.mrb[0].mxu0 %v481
  %v877 = vpop.f32.mrb[0].mxu0
  %v878 = vadd.f32 0.0, %v877
  %v879 = vpop.f32.mrb[0].mxu0
  %v880 = vpop.f32.mrb[0].mxu0
  %v881 = vadd.f32 0.0, %v880
  %v882 = vpop.f32.mrb[0].mxu0
  %883 = vmatprep.mubr.bf16.mxu0 %v484
  %884 = vmatmul.mubr.bf16.gmra.mrb[0].mxu0 %v483
  %v885 = vpop.f32.mrb[0].mxu0
  %v886 = vadd.f32 0.0, %v885
  %v887 = vpop.f32.mrb[0].mxu0
  %v888 = vpop.f32.mrb[0].mxu0
  %v889 = vadd.f32 0.0, %v888
  %v890 = vpop.f32.mrb[0].mxu0
  %891 = vmatprep.mubr.bf16.mxu0 %v486
  %892 = vmatmul.mubr.bf16.gmra.mrb[0].mxu0 %v485
  %v893 = vpop.f32.mrb[0].mxu0
  %v894 = vadd.f32 0.0, %v893
  %v895 = vpop.f32.mrb[0].mxu0
  %v896 = vpop.f32.mrb[0].mxu0
  %v897 = vadd.f32 0.0, %v896
  %v898 = vpop.f32.mrb[0].mxu0
  %899 = vmatprep.mubr.bf16.mxu0 %v488
  %900 = vmatmul.mubr.bf16.gmra.mrb[0].mxu0 %v487
  %v901 = vpop.f32.mrb[0].mxu0
  %v902 = vadd.f32 0.0, %v901
  %v903 = vpop.f32.mrb[0].mxu0
  %v904 = vpop.f32.mrb[0].mxu0
  %v905 = vadd.f32 0.0, %v904
  %v906 = vpop.f32.mrb[0].mxu0
  %907 = vmatprep.mubr.bf16.mxu0 %v490
  %908 = vmatmul.mubr.bf16.gmra.mrb[0].mxu0 %v489
  %v909 = vpop.f32.mrb[0].mxu0
  %v910 = vadd.f32 0.0, %v909
  %v911 = vpop.f32.mrb[0].mxu0
  %v912 = vpop.f32.mrb[0].mxu0
  %v913 = vadd.f32 0.0, %v912
  %v914 = vpop.f32.mrb[0].mxu0
  %915 = vmatprep.mubr.bf16.mxu0 %v492
  %916 = vmatmul.mubr.bf16.gmra.mrb[0].mxu0 %v491
  %v917 = vpop.f32.mrb[0].mxu0
  %v918 = vadd.f32 0.0, %v917
  %v919 = vpop.f32.mrb[0].mxu0
  %v920 = vpop.f32.mrb[0].mxu0
  %v921 = vadd.f32 0.0, %v920
  %v922 = vpop.f32.mrb[0].mxu0
  %923 = vmatprep.mubr.bf16.mxu0 %v494
  %924 = vmatmul.mubr.bf16.gmra.mrb[0].mxu0 %v493
  %v925 = vpop.f32.mrb[0].mxu0
  %v926 = vadd.f32 0.0, %v925
  %v927 = vpop.f32.mrb[0].mxu0
  %v928 = vpop.f32.mrb[0].mxu0
  %v929 = vadd.f32 0.0, %v928
  %v930 = vpop.f32.mrb[0].mxu0
  %931 = vmatprep.mubr.bf16.mxu0 %v496
  %932 = vmatmul.mubr.bf16.gmra.mrb[0].mxu0 %v495
  %v933 = vpop.f32.mrb[0].mxu0
  %v934 = vadd.f32 0.0, %v933
  %v935 = vpop.f32.mrb[0].mxu0
  %v936 = vpop.f32.mrb[0].mxu0
  %v937 = vadd.f32 0.0, %v936
  %v938 = vpop.f32.mrb[0].mxu0
  %939 = vmatprep.mubr.bf16.mxu0 %v498
  %940 = vmatmul.mubr.bf16.gmra.mrb[0].mxu0 %v497
  %v941 = vpop.f32.mrb[0].mxu0
  %v942 = vadd.f32 0.0, %v941
  %v943 = vpop.f32.mrb[0].mxu0
  %v944 = vpop.f32.mrb[0].mxu0
  %v945 = vadd.f32 0.0, %v944
  %v946 = vpop.f32.mrb[0].mxu0
  %947 = vdwg.mxu0
  %v948 = vadd.f32 %v83, %v694
  %v949 = vadd.f32 %v84, %v697
  %v950 = vadd.f32 %v85, %v702
  %v951 = vadd.f32 %v86, %v705
  %v952 = vadd.f32 %v87, %v710
  %v953 = vadd.f32 %v88, %v713
  %v954 = vadd.f32 %v89, %v718
  %v955 = vadd.f32 %v90, %v721
  %v956 = vadd.f32 %v91, %v726
  %v957 = vadd.f32 %v92, %v729
  %v958 = vadd.f32 %v93, %v734
  %v959 = vadd.f32 %v94, %v737
  %v960 = vadd.f32 %v95, %v742
  %v961 = vadd.f32 %v96, %v745
  %v962 = vadd.f32 %v97, %v750
  %v963 = vadd.f32 %v98, %v753
  %v964 = vadd.f32 %v99, %v758
  %v965 = vadd.f32 %v100, %v761
  %v966 = vadd.f32 %v101, %v766
  %v967 = vadd.f32 %v102, %v769
  %v968 = vadd.f32 %v103, %v774
  %v969 = vadd.f32 %v104, %v777
  %v970 = vadd.f32 %v105, %v782
  %v971 = vadd.f32 %v106, %v785
  %v972 = vadd.f32 %v107, %v790
  %v973 = vadd.f32 %v108, %v793
  %v974 = vadd.f32 %v109, %v798
  %v975 = vadd.f32 %v110, %v801
  %v976 = vadd.f32 %v111, %v806
  %v977 = vadd.f32 %v112, %v809
  %v978 = vadd.f32 %v113, %v814
  %v979 = vadd.f32 %v114, %v817
  %v980 = vadd.f32 %v115, %v822
  %v981 = vadd.f32 %v116, %v825
  %v982 = vadd.f32 %v117, %v830
  %v983 = vadd.f32 %v118, %v833
  %v984 = vadd.f32 %v119, %v838
  %v985 = vadd.f32 %v120, %v841
  %v986 = vadd.f32 %v121, %v846
  %v987 = vadd.f32 %v122, %v849
  %v988 = vadd.f32 %v123, %v854
  %v989 = vadd.f32 %v124, %v857
  %v990 = vadd.f32 %v125, %v862
  %v991 = vadd.f32 %v126, %v865
  %v992 = vadd.f32 %v127, %v870
  %v993 = vadd.f32 %v128, %v873
  %v994 = vadd.f32 %v129, %v878
  %v995 = vadd.f32 %v130, %v881
  %v996 = vadd.f32 %v131, %v886
  %v997 = vadd.f32 %v132, %v889
  %v998 = vadd.f32 %v133, %v894
  %v999 = vadd.f32 %v134, %v897
  %v1000 = vadd.f32 %v135, %v902
  %v1001 = vadd.f32 %v136, %v905
  %v1002 = vadd.f32 %v137, %v910
  %v1003 = vadd.f32 %v138, %v913
  %v1004 = vadd.f32 %v139, %v918
  %v1005 = vadd.f32 %v140, %v921
  %v1006 = vadd.f32 %v141, %v926
  %v1007 = vadd.f32 %v142, %v929
  %v1008 = vadd.f32 %v143, %v934
  %v1009 = vadd.f32 %v144, %v937
  %v1010 = vadd.f32 %v145, %v942
  %v1011 = vadd.f32 %v146, %v945
  %1012 = vst [vmem:[#allocation2] sm:$0xff] %v948
  %1013 = vst [vmem:[#allocation2 + $0x8] sm:$0xff] %v949
  %1014 = vst [vmem:[#allocation2 + $0x10] sm:$0xff] %v950
  %1015 = vst [vmem:[#allocation2 + $0x18] sm:$0xff] %v951
  %1016 = vst [vmem:[#allocation2 + $0x20] sm:$0xff] %v952
  %1017 = vst [vmem:[#allocation2 + $0x28] sm:$0xff] %v953
  %1018 = vst [vmem:[#allocation2 + $0x30] sm:$0xff] %v954
  %1019 = vst [vmem:[#allocation2 + $0x38] sm:$0xff] %v955
  %1020 = vst [vmem:[#allocation2 + $0x40] sm:$0xff] %v956
  %1021 = vst [vmem:[#allocation2 + $0x48] sm:$0xff] %v957
  %1022 = vst [vmem:[#allocation2 + $0x50] sm:$0xff] %v958
  %1023 = vst [vmem:[#allocation2 + $0x58] sm:$0xff] %v959
  %1024 = vst [vmem:[#allocation2 + $0x60] sm:$0xff] %v960
  %1025 = vst [vmem:[#allocation2 + $0x68] sm:$0xff] %v961
  %1026 = vst [vmem:[#allocation2 + $0x70] sm:$0xff] %v962
  %1027 = vst [vmem:[#allocation2 + $0x78] sm:$0xff] %v963
  %1028 = vst [vmem:[#allocation2 + $0x80] sm:$0xff] %v964
  %1029 = vst [vmem:[#allocation2 + $0x88] sm:$0xff] %v965
  %1030 = vst [vmem:[#allocation2 + $0x90] sm:$0xff] %v966
  %1031 = vst [vmem:[#allocation2 + $0x98] sm:$0xff] %v967
  %1032 = vst [vmem:[#allocation2 + $0xa0] sm:$0xff] %v968
  %1033 = vst [vmem:[#allocation2 + $0xa8] sm:$0xff] %v969
  %1034 = vst [vmem:[#allocation2 + $0xb0] sm:$0xff] %v970
  %1035 = vst [vmem:[#allocation2 + $0xb8] sm:$0xff] %v971
  %1036 = vst [vmem:[#allocation2 + $0xc0] sm:$0xff] %v972
  %1037 = vst [vmem:[#allocation2 + $0xc8] sm:$0xff] %v973
  %1038 = vst [vmem:[#allocation2 + $0xd0] sm:$0xff] %v974
  %1039 = vst [vmem:[#allocation2 + $0xd8] sm:$0xff] %v975
  %1040 = vst [vmem:[#allocation2 + $0xe0] sm:$0xff] %v976
  %1041 = vst [vmem:[#allocation2 + $0xe8] sm:$0xff] %v977
  %1042 = vst [vmem:[#allocation2 + $0xf0] sm:$0xff] %v978
  %1043 = vst [vmem:[#allocation2 + $0xf8] sm:$0xff] %v979
  %1044 = vst [vmem:[#allocation2 + $0x100] sm:$0xff] %v980
  %1045 = vst [vmem:[#allocation2 + $0x108] sm:$0xff] %v981
  %1046 = vst [vmem:[#allocation2 + $0x110] sm:$0xff] %v982
  %1047 = vst [vmem:[#allocation2 + $0x118] sm:$0xff] %v983
  %1048 = vst [vmem:[#allocation2 + $0x120] sm:$0xff] %v984
  %1049 = vst [vmem:[#allocation2 + $0x128] sm:$0xff] %v985
  %1050 = vst [vmem:[#allocation2 + $0x130] sm:$0xff] %v986
  %1051 = vst [vmem:[#allocation2 + $0x138] sm:$0xff] %v987
  %1052 = vst [vmem:[#allocation2 + $0x140] sm:$0xff] %v988
  %1053 = vst [vmem:[#allocation2 + $0x148] sm:$0xff] %v989
  %1054 = vst [vmem:[#allocation2 + $0x150] sm:$0xff] %v990
  %1055 = vst [vmem:[#allocation2 + $0x158] sm:$0xff] %v991
  %1056 = vst [vmem:[#allocation2 + $0x160] sm:$0xff] %v992
  %1057 = vst [vmem:[#allocation2 + $0x168] sm:$0xff] %v993
  %1058 = vst [vmem:[#allocation2 + $0x170] sm:$0xff] %v994
  %1059 = vst [vmem:[#allocation2 + $0x178] sm:$0xff] %v995
  %1060 = vst [vmem:[#allocation2 + $0x180] sm:$0xff] %v996
  %1061 = vst [vmem:[#allocation2 + $0x188] sm:$0xff] %v997
  %1062 = vst [vmem:[#allocation2 + $0x190] sm:$0xff] %v998
  %1063 = vst [vmem:[#allocation2 + $0x198] sm:$0xff] %v999
  %1064 = vst [vmem:[#allocation2 + $0x1a0] sm:$0xff] %v1000
  %1065 = vst [vmem:[#allocation2 + $0x1a8] sm:$0xff] %v1001
  %1066 = vst [vmem:[#allocation2 + $0x1b0] sm:$0xff] %v1002
  %1067 = vst [vmem:[#allocation2 + $0x1b8] sm:$0xff] %v1003
  %1068 = vst [vmem:[#allocation2 + $0x1c0] sm:$0xff] %v1004
  %1069 = vst [vmem:[#allocation2 + $0x1c8] sm:$0xff] %v1005
  %1070 = vst [vmem:[#allocation2 + $0x1d0] sm:$0xff] %v1006
  %1071 = vst [vmem:[#allocation2 + $0x1d8] sm:$0xff] %v1007
  %1072 = vst [vmem:[#allocation2 + $0x1e0] sm:$0xff] %v1008
  %1073 = vst [vmem:[#allocation2 + $0x1e8] sm:$0xff] %v1009
  %1074 = vst [vmem:[#allocation2 + $0x1f0] sm:$0xff] %v1010
  %1075 = vst [vmem:[#allocation2 + $0x1f8] sm:$0xff] %v1011
  // Predicated region
  $region18: #{rdn_forward.23} parent=0 // pred_check
    %p1076 = pneg %p15
  $region19: #{rdn_forward.23} parent=0 // pred_check_branch
    %1078 = sbr.rel (%p1076) target = $region21
  $region20: #{rdn_forward.23} parent=0 // pred_region
    %v1079 = vld [vmem:[#allocation2] sm:$0xff]
    %v1080 = vld [vmem:[#allocation2 + $0x8] sm:$0xff]
    %v1081 = vld [vmem:[#allocation2 + $0x10] sm:$0xff]
    %v1082 = vld [vmem:[#allocation2 + $0x18] sm:$0xff]
    %v1083 = vld [vmem:[#allocation2 + $0x20] sm:$0xff]
    %v1084 = vld [vmem:[#allocation2 + $0x28] sm:$0xff]
    %v1085 = vld [vmem:[#allocation2 + $0x30] sm:$0xff]
    %v1086 = vld [vmem:[#allocation2 + $0x38] sm:$0xff]
    %v1087 = vld [vmem:[#allocation2 + $0x40] sm:$0xff]
    %v1088 = vld [vmem:[#allocation2 + $0x48] sm:$0xff]
    %v1089 = vld [vmem:[#allocation2 + $0x50] sm:$0xff]
    %v1090 = vld [vmem:[#allocation2 + $0x58] sm:$0xff]
    %v1091 = vld [vmem:[#allocation2 + $0x60] sm:$0xff]
    %v1092 = vld [vmem:[#allocation2 + $0x68] sm:$0xff]
    %v1093 = vld [vmem:[#allocation2 + $0x70] sm:$0xff]
    %v1094 = vld [vmem:[#allocation2 + $0x78] sm:$0xff]
    %v1095 = vld [vmem:[#allocation2 + $0x80] sm:$0xff]
    %v1096 = vld [vmem:[#allocation2 + $0x88] sm:$0xff]
    %v1097 = vld [vmem:[#allocation2 + $0x90] sm:$0xff]
    %v1098 = vld [vmem:[#allocation2 + $0x98] sm:$0xff]
    %v1099 = vld [vmem:[#allocation2 + $0xa0] sm:$0xff]
    %v1100 = vld [vmem:[#allocation2 + $0xa8] sm:$0xff]
    %v1101 = vld [vmem:[#allocation2 + $0xb0] sm:$0xff]
    %v1102 = vld [vmem:[#allocation2 + $0xb8] sm:$0xff]
    %v1103 = vld [vmem:[#allocation2 + $0xc0] sm:$0xff]
    %v1104 = vld [vmem:[#allocation2 + $0xc8] sm:$0xff]
    %v1105 = vld [vmem:[#allocation2 + $0xd0] sm:$0xff]
    %v1106 = vld [vmem:[#allocation2 + $0xd8] sm:$0xff]
    %v1107 = vld [vmem:[#allocation2 + $0xe0] sm:$0xff]
    %v1108 = vld [vmem:[#allocation2 + $0xe8] sm:$0xff]
    %v1109 = vld [vmem:[#allocation2 + $0xf0] sm:$0xff]
    %v1110 = vld [vmem:[#allocation2 + $0xf8] sm:$0xff]
    %v1111 = vld [vmem:[#allocation2 + $0x100] sm:$0xff]
    %v1112 = vld [vmem:[#allocation2 + $0x108] sm:$0xff]
    %v1113 = vld [vmem:[#allocation2 + $0x110] sm:$0xff]
    %v1114 = vld [vmem:[#allocation2 + $0x118] sm:$0xff]
    %v1115 = vld [vmem:[#allocation2 + $0x120] sm:$0xff]
    %v1116 = vld [vmem:[#allocation2 + $0x128] sm:$0xff]
    %v1117 = vld [vmem:[#allocation2 + $0x130] sm:$0xff]
    %v1118 = vld [vmem:[#allocation2 + $0x138] sm:$0xff]
    %v1119 = vld [vmem:[#allocation2 + $0x140] sm:$0xff]
    %v1120 = vld [vmem:[#allocation2 + $0x148] sm:$0xff]
    %v1121 = vld [vmem:[#allocation2 + $0x150] sm:$0xff]
    %v1122 = vld [vmem:[#allocation2 + $0x158] sm:$0xff]
    %v1123 = vld [vmem:[#allocation2 + $0x160] sm:$0xff]
    %v1124 = vld [vmem:[#allocation2 + $0x168] sm:$0xff]
    %v1125 = vld [vmem:[#allocation2 + $0x170] sm:$0xff]
    %v1126 = vld [vmem:[#allocation2 + $0x178] sm:$0xff]
    %v1127 = vld [vmem:[#allocation2 + $0x180] sm:$0xff]
    %v1128 = vld [vmem:[#allocation2 + $0x188] sm:$0xff]
    %v1129 = vld [vmem:[#allocation2 + $0x190] sm:$0xff]
    %v1130 = vld [vmem:[#allocation2 + $0x198] sm:$0xff]
    %v1131 = vld [vmem:[#allocation2 + $0x1a0] sm:$0xff]
    %v1132 = vld [vmem:[#allocation2 + $0x1a8] sm:$0xff]
    %v1133 = vld [vmem:[#allocation2 + $0x1b0] sm:$0xff]
    %v1134 = vld [vmem:[#allocation2 + $0x1b8] sm:$0xff]
    %v1135 = vld [vmem:[#allocation2 + $0x1c0] sm:$0xff]
    %v1136 = vld [vmem:[#allocation2 + $0x1c8] sm:$0xff]
    %v1137 = vld [vmem:[#allocation2 + $0x1d0] sm:$0xff]
    %v1138 = vld [vmem:[#allocation2 + $0x1d8] sm:$0xff]
    %v1139 = vld [vmem:[#allocation2 + $0x1e0] sm:$0xff]
    %v1140 = vld [vmem:[#allocation2 + $0x1e8] sm:$0xff]
    %v1141 = vld [vmem:[#allocation2 + $0x1f0] sm:$0xff]
    %v1142 = vld [vmem:[#allocation2 + $0x1f8] sm:$0xff]
    %v1143 = vld [vmem:[%s2] sm:$0x1]
    %v1145 = vlaneseq
    %v1146 = vshrl.u32 %v1145, 7
    %v1147 = vsub.s32 0, %v1146
    %v1148 = vrot.slane %v1143, %v1147
    %v1150 = vadd.f32 %v1079, %v1148
    %v1151 = vadd.f32 %v1080, %v1148
    %v1152 = vadd.f32 %v1081, %v1148
    %v1153 = vadd.f32 %v1082, %v1148
    %v1154 = vadd.f32 %v1083, %v1148
    %v1155 = vadd.f32 %v1084, %v1148
    %v1156 = vadd.f32 %v1085, %v1148
    %v1157 = vadd.f32 %v1086, %v1148
    %v1158 = vadd.f32 %v1087, %v1148
    %v1159 = vadd.f32 %v1088, %v1148
    %v1160 = vadd.f32 %v1089, %v1148
    %v1161 = vadd.f32 %v1090, %v1148
    %v1162 = vadd.f32 %v1091, %v1148
    %v1163 = vadd.f32 %v1092, %v1148
    %v1164 = vadd.f32 %v1093, %v1148
    %v1165 = vadd.f32 %v1094, %v1148
    %v1166 = vadd.f32 %v1095, %v1148
    %v1167 = vadd.f32 %v1096, %v1148
    %v1168 = vadd.f32 %v1097, %v1148
    %v1169 = vadd.f32 %v1098, %v1148
    %v1170 = vadd.f32 %v1099, %v1148
    %v1171 = vadd.f32 %v1100, %v1148
    %v1172 = vadd.f32 %v1101, %v1148
    %v1173 = vadd.f32 %v1102, %v1148
    %v1174 = vadd.f32 %v1103, %v1148
    %v1175 = vadd.f32 %v1104, %v1148
    %v1176 = vadd.f32 %v1105, %v1148
    %v1177 = vadd.f32 %v1106, %v1148
    %v1178 = vadd.f32 %v1107, %v1148
    %v1179 = vadd.f32 %v1108, %v1148
    %v1180 = vadd.f32 %v1109, %v1148
    %v1181 = vadd.f32 %v1110, %v1148
    %v1182 = vadd.f32 %v1111, %v1148
    %v1183 = vadd.f32 %v1112, %v1148
    %v1184 = vadd.f32 %v1113, %v1148
    %v1185 = vadd.f32 %v1114, %v1148
    %v1186 = vadd.f32 %v1115, %v1148
    %v1187 = vadd.f32 %v1116, %v1148
    %v1188 = vadd.f32 %v1117, %v1148
    %v1189 = vadd.f32 %v1118, %v1148
    %v1190 = vadd.f32 %v1119, %v1148
    %v1191 = vadd.f32 %v1120, %v1148
    %v1192 = vadd.f32 %v1121, %v1148
    %v1193 = vadd.f32 %v1122, %v1148
    %v1194 = vadd.f32 %v1123, %v1148
    %v1195 = vadd.f32 %v1124, %v1148
    %v1196 = vadd.f32 %v1125, %v1148
    %v1197 = vadd.f32 %v1126, %v1148
    %v1198 = vadd.f32 %v1127, %v1148
    %v1199 = vadd.f32 %v1128, %v1148
    %v1200 = vadd.f32 %v1129, %v1148
    %v1201 = vadd.f32 %v1130, %v1148
    %v1202 = vadd.f32 %v1131, %v1148
    %v1203 = vadd.f32 %v1132, %v1148
    %v1204 = vadd.f32 %v1133, %v1148
    %v1205 = vadd.f32 %v1134, %v1148
    %v1206 = vadd.f32 %v1135, %v1148
    %v1207 = vadd.f32 %v1136, %v1148
    %v1208 = vadd.f32 %v1137, %v1148
    %v1209 = vadd.f32 %v1138, %v1148
    %v1210 = vadd.f32 %v1139, %v1148
    %v1211 = vadd.f32 %v1140, %v1148
    %v1212 = vadd.f32 %v1141, %v1148
    %v1213 = vadd.f32 %v1142, %v1148
    %1214 = vst [vmem:[%s3] sm:$0xff] %v1150
    %1215 = vst [vmem:[%s3 + $0x8] sm:$0xff] %v1151
    %1216 = vst [vmem:[%s3 + $0x10] sm:$0xff] %v1152
    %1217 = vst [vmem:[%s3 + $0x18] sm:$0xff] %v1153
    %1218 = vst [vmem:[%s3 + $0x20] sm:$0xff] %v1154
    %1219 = vst [vmem:[%s3 + $0x28] sm:$0xff] %v1155
    %1220 = vst [vmem:[%s3 + $0x30] sm:$0xff] %v1156
    %1221 = vst [vmem:[%s3 + $0x38] sm:$0xff] %v1157
    %1222 = vst [vmem:[%s3 + $0x40] sm:$0xff] %v1158
    %1223 = vst [vmem:[%s3 + $0x48] sm:$0xff] %v1159
    %1224 = vst [vmem:[%s3 + $0x50] sm:$0xff] %v1160
    %1225 = vst [vmem:[%s3 + $0x58] sm:$0xff] %v1161
    %1226 = vst [vmem:[%s3 + $0x60] sm:$0xff] %v1162
    %1227 = vst [vmem:[%s3 + $0x68] sm:$0xff] %v1163
    %1228 = vst [vmem:[%s3 + $0x70] sm:$0xff] %v1164
    %1229 = vst [vmem:[%s3 + $0x78] sm:$0xff] %v1165
    %1230 = vst [vmem:[%s3 + $0x80] sm:$0xff] %v1166
    %1231 = vst [vmem:[%s3 + $0x88] sm:$0xff] %v1167
    %1232 = vst [vmem:[%s3 + $0x90] sm:$0xff] %v1168
    %1233 = vst [vmem:[%s3 + $0x98] sm:$0xff] %v1169
    %1234 = vst [vmem:[%s3 + $0xa0] sm:$0xff] %v1170
    %1235 = vst [vmem:[%s3 + $0xa8] sm:$0xff] %v1171
    %1236 = vst [vmem:[%s3 + $0xb0] sm:$0xff] %v1172
    %1237 = vst [vmem:[%s3 + $0xb8] sm:$0xff] %v1173
    %1238 = vst [vmem:[%s3 + $0xc0] sm:$0xff] %v1174
    %1239 = vst [vmem:[%s3 + $0xc8] sm:$0xff] %v1175
    %1240 = vst [vmem:[%s3 + $0xd0] sm:$0xff] %v1176
    %1241 = vst [vmem:[%s3 + $0xd8] sm:$0xff] %v1177
    %1242 = vst [vmem:[%s3 + $0xe0] sm:$0xff] %v1178
    %1243 = vst [vmem:[%s3 + $0xe8] sm:$0xff] %v1179
    %1244 = vst [vmem:[%s3 + $0xf0] sm:$0xff] %v1180
    %1245 = vst [vmem:[%s3 + $0xf8] sm:$0xff] %v1181
    %1246 = vst [vmem:[%s3 + $0x100] sm:$0xff] %v1182
    %1247 = vst [vmem:[%s3 + $0x108] sm:$0xff] %v1183
    %1248 = vst [vmem:[%s3 + $0x110] sm:$0xff] %v1184
    %1249 = vst [vmem:[%s3 + $0x118] sm:$0xff] %v1185
    %1250 = vst [vmem:[%s3 + $0x120] sm:$0xff] %v1186
    %1251 = vst [vmem:[%s3 + $0x128] sm:$0xff] %v1187
    %1252 = vst [vmem:[%s3 + $0x130] sm:$0xff] %v1188
    %1253 = vst [vmem:[%s3 + $0x138] sm:$0xff] %v1189
    %1254 = vst [vmem:[%s3 + $0x140] sm:$0xff] %v1190
    %1255 = vst [vmem:[%s3 + $0x148] sm:$0xff] %v1191
    %1256 = vst [vmem:[%s3 + $0x150] sm:$0xff] %v1192
    %1257 = vst [vmem:[%s3 + $0x158] sm:$0xff] %v1193
    %1258 = vst [vmem:[%s3 + $0x160] sm:$0xff] %v1194
    %1259 = vst [vmem:[%s3 + $0x168] sm:$0xff] %v1195
    %1260 = vst [vmem:[%s3 + $0x170] sm:$0xff] %v1196
    %1261 = vst [vmem:[%s3 + $0x178] sm:$0xff] %v1197
    %1262 = vst [vmem:[%s3 + $0x180] sm:$0xff] %v1198
    %1263 = vst [vmem:[%s3 + $0x188] sm:$0xff] %v1199
    %1264 = vst [vmem:[%s3 + $0x190] sm:$0xff] %v1200
    %1265 = vst [vmem:[%s3 + $0x198] sm:$0xff] %v1201
    %1266 = vst [vmem:[%s3 + $0x1a0] sm:$0xff] %v1202
    %1267 = vst [vmem:[%s3 + $0x1a8] sm:$0xff] %v1203
    %1268 = vst [vmem:[%s3 + $0x1b0] sm:$0xff] %v1204
    %1269 = vst [vmem:[%s3 + $0x1b8] sm:$0xff] %v1205
    %1270 = vst [vmem:[%s3 + $0x1c0] sm:$0xff] %v1206
    %1271 = vst [vmem:[%s3 + $0x1c8] sm:$0xff] %v1207
    %1272 = vst [vmem:[%s3 + $0x1d0] sm:$0xff] %v1208
    %1273 = vst [vmem:[%s3 + $0x1d8] sm:$0xff] %v1209
    %1274 = vst [vmem:[%s3 + $0x1e0] sm:$0xff] %v1210
    %1275 = vst [vmem:[%s3 + $0x1e8] sm:$0xff] %v1211
    %1276 = vst [vmem:[%s3 + $0x1f0] sm:$0xff] %v1212
    %1277 = vst [vmem:[%s3 + $0x1f8] sm:$0xff] %v1213
  $region21: #{rdn_forward.23} parent=0 // pred_fallthru
    _
  // Predicated region
  $region22: #{rdn_forward.23} parent=0 // pred_check
    _
  $region23: #{rdn_forward.23} parent=0 // pred_check_branch
    %1279 = sbr.rel (0) target = $region25
  $region24: #{rdn_forward.23} parent=0 // pred_region
    _
  $region25: #{rdn_forward.23} parent=0 // pred_fallthru
    _
  // Predicated region
  $region26: #{rdn_forward.23} parent=0 // pred_check
    _
  $region27: #{rdn_forward.23} parent=0 // pred_check_branch
    %1281 = sbr.rel (0) target = $region29
  $region28: #{rdn_forward.23} parent=0 // pred_region
    _
  $region29: #{rdn_forward.23} parent=0 // pred_fallthru
    _

</llo_original>
